<compile_context>
chip_gen: v6e
topology: v6e:2x2x1
jax: 0.10.0
libtpu: 0.0.40
codegen_flags: <defaults>
</compile_context>

<pallas_src>
import functools

import jax
import jax.numpy as jnp
from jax import lax
from jax.experimental import pallas as pl
from jax.experimental.pallas import tpu as pltpu


def _round_up(x, m):
    return (x + m - 1) // m * m


# ----------------------------------------------------------------------------
# Conv block: 3x3 conv (pad 1) + folded BN + ReLU + 2x2 max-pool
# ----------------------------------------------------------------------------

def _conv_bn_relu_pool_kernel(xm_ref, xh_ref, w_ref, b_ref, o_ref):
    """One grid step = R pooled output rows of one batch element.

    xm_ref: (1, 2R, Wp2, Cinp)  bf16  main pre-pool rows of the padded input
    xh_ref: (1, 2,  Wp2, Cinp)  bf16  2-row halo directly below the main rows
    w_ref : (9*Cinp, Coutp)     bf16  K-fused per-tap weights (tap = dh*3+dw),
                                      BN scale folded in
    b_ref : (1, Coutp)          f32   folded BN bias
    o_ref : (1, R, Wo, Coutp)   bf16  pooled output rows (lane-dense Coutp)
    """
    R = o_ref.shape[1]
    Wo = o_ref.shape[2]
    Cp = o_ref.shape[3]
    Cinp = xm_ref.shape[3]
    W = 2 * Wo

    # All 2R+2 padded rows this step needs, resident in VMEM.
    xb = jnp.concatenate([xm_ref[0], xh_ref[0]], axis=0)      # (2R+2, Wp2, Cinp)

    # Hoist the three column-shifted (sublane-offset) views once, then build
    # the im2col LHS so the whole step is a single K=9*Cinp MXU matmul.
    cols = [xb[:, dw:dw + W, :] for dw in range(3)]
    taps = [cols[dw][dh:dh + 2 * R] for dh in range(3) for dw in range(3)]
    lhs = jnp.concatenate(taps, axis=-1).reshape(2 * R * W, 9 * Cinp)

    y = jnp.dot(lhs, w_ref[...], preferred_element_type=jnp.float32)
    z = jnp.maximum(y + b_ref[...], 0.0)                      # (2R*W, Coutp) f32

    # 2x2 max-pool as two pairwise maxima (pool positions were merged into M).
    z = z.reshape(2 * R * Wo, 2 * Cp)
    z = jnp.maximum(z[:, :Cp], z[:, Cp:])                     # pool along internal W (freq)
    z = z.reshape(R, 2 * Wo, Cp)
    z = jnp.maximum(z[:, :Wo, :], z[:, Wo:, :])               # pool along internal H (time)
    o_ref[0] = z.astype(o_ref.dtype)


def conv_bn_relu_pool(x, w_oihw, conv_b, gamma, beta, mean, var,
                      eps=1e-5, row_block=32):
    """x: (B, H, W, Cx) internal time-major layout (H = time, W = frequency).
    Channels may arrive padded (Cx >= Cin) with exact zeros beyond Cin.
    Returns (B, Ho, Wo, Coutp) bf16 with Coutp = round_up(Cout, 128); padded
    output channels are exactly zero (sliced once after the last conv layer).
    """
    B, H, W, Cx = x.shape
    Cout, Cin = w_oihw.shape[0], w_oihw.shape[1]
    Ho, Wo = H // 2, W // 2
    Cinp = _round_up(max(Cx, Cin), 8)
    Coutp = _round_up(Cout, 128)          # lane-dense stores / full MXU columns
    R = min(row_block, Ho)                # pooled rows per grid step
    nblk = (Ho + R - 1) // R
    Hp = 2 * R * nblk                     # pre-pool rows, rounded to the blocking
    Wp2 = W + 2

    # Fold conv bias + BatchNorm (eval, running stats) into weights/bias.
    scale = gamma / jnp.sqrt(var + eps)                       # (Cout,)
    bias = beta + (conv_b - mean) * scale                     # (Cout,)
    wt = jnp.transpose(w_oihw, (3, 2, 1, 0)).reshape(9, Cin, Cout)
    wt = wt * scale[None, None, :]
    wt = jnp.pad(wt, ((0, 0), (0, Cinp - Cin), (0, Coutp - Cout)))
    wt = wt.reshape(9 * Cinp, Coutp).astype(jnp.bfloat16)     # K-fused layout
    bias_p = jnp.pad(bias, (0, Coutp - Cout)).reshape(1, Coutp).astype(jnp.float32)

    # Single zero-pad pass: conv halo + row-block round-up + channel pad.
    # Padded row r corresponds to image row r-1.
    xp = jnp.pad(x, ((0, 0), (1, Hp + 1 - H), (1, 1), (0, Cinp - Cx)))
    xp = xp.astype(jnp.bfloat16)                              # (B, Hp+2, Wp2, Cinp)

    out = pl.pallas_call(
        _conv_bn_relu_pool_kernel,
        out_shape=jax.ShapeDtypeStruct((B, R * nblk, Wo, Coutp), jnp.bfloat16),
        grid_spec=pltpu.PrefetchScalarGridSpec(
            num_scalar_prefetch=0,
            grid=(B, nblk),
            in_specs=[
                # Main rows [2R*i, 2R*i+2R) plus a 2-row halo just below; both
                # specs view the SAME padded HBM array (no halo duplication).
                pl.BlockSpec((1, 2 * R, Wp2, Cinp), lambda b, i: (b, i, 0, 0)),
                pl.BlockSpec((1, 2, Wp2, Cinp),
                             lambda b, i: (b, R * (i + 1), 0, 0)),
                pl.BlockSpec((9 * Cinp, Coutp), lambda b, i: (0, 0)),
                pl.BlockSpec((1, Coutp), lambda b, i: (0, 0)),
            ],
            out_specs=pl.BlockSpec((1, R, Wo, Coutp), lambda b, i: (b, i, 0, 0)),
        ),
        compiler_params=pltpu.CompilerParams(
            dimension_semantics=("parallel", "parallel"),
            vmem_limit_bytes=32 * 1024 * 1024),
    )(xp, xp, wt, bias_p)

    return out[:, :Ho]      # drop row-block padding; keep channel padding.


# ----------------------------------------------------------------------------
# MLP head: Linear -> ReLU -> Dropout(eval: identity) -> Linear -> ReLU
# ----------------------------------------------------------------------------

def _fc_kernel(x_ref, w1_ref, b1_ref, w2_ref, b2_ref, o_ref):
    """1-D grid over row blocks; both weights are constant-index resident
    blocks (DMA'd once) so every step is just two back-to-back MXU matmuls."""
    h = jnp.dot(x_ref[...], w1_ref[...], preferred_element_type=jnp.float32)
    h = jnp.maximum(h + b1_ref[...], 0.0).astype(jnp.bfloat16)
    # TODO(synk): Dropout(p=0.3) is identity in eval mode; training-mode RNG dropout not implemented.
    y = jnp.dot(h, w2_ref[...], preferred_element_type=jnp.float32)
    o_ref[...] = jnp.maximum(y + b2_ref[...], 0.0)


def fc_forward(x2d, w1, b1, w2, b2, row_block=256):
    R, Din = x2d.shape
    Hd, Dout = w1.shape[1], w2.shape[1]
    Dinp = _round_up(Din, 128)
    Hdp = _round_up(Hd, 128)
    Doutp = _round_up(Dout, 128)
    rb = min(row_block, _round_up(R, 8))
    Rp = _round_up(R, rb)

    xpad = jnp.pad(x2d, ((0, Rp - R), (0, Dinp - Din))).astype(jnp.bfloat16)
    w1p = jnp.pad(w1, ((0, Dinp - Din), (0, Hdp - Hd))).astype(jnp.bfloat16)
    b1p = jnp.pad(b1, (0, Hdp - Hd)).reshape(1, Hdp).astype(jnp.float32)
    w2p = jnp.pad(w2, ((0, Hdp - Hd), (0, Doutp - Dout))).astype(jnp.bfloat16)
    b2p = jnp.pad(b2, (0, Doutp - Dout)).reshape(1, Doutp).astype(jnp.float32)

    out = pl.pallas_call(
        _fc_kernel,
        out_shape=jax.ShapeDtypeStruct((Rp, Doutp), jnp.float32),
        grid_spec=pltpu.PrefetchScalarGridSpec(
            num_scalar_prefetch=0,
            grid=(Rp // rb,),
            in_specs=[
                pl.BlockSpec((rb, Dinp), lambda r: (r, 0)),
                pl.BlockSpec((Dinp, Hdp), lambda r: (0, 0)),   # resident, loaded once
                pl.BlockSpec((1, Hdp), lambda r: (0, 0)),
                pl.BlockSpec((Hdp, Doutp), lambda r: (0, 0)),  # resident, loaded once
                pl.BlockSpec((1, Doutp), lambda r: (0, 0)),
            ],
            out_specs=pl.BlockSpec((rb, Doutp), lambda r: (r, 0)),
        ),
        compiler_params=pltpu.CompilerParams(
            dimension_semantics=("parallel",),
            # <= 48 MiB so real BYOL-A shapes also fit v7x's 64 MiB VMEM.
            vmem_limit_bytes=48 * 1024 * 1024),
    )(xpad, w1p, b1p, w2p, b2p)

    return out[:R, :Dout]


# ----------------------------------------------------------------------------
# Full encoder forward (AudioNTT2022Encoder.forward, stack=True)
# ----------------------------------------------------------------------------

@functools.partial(jax.jit, static_argnames=("stack",))
def audio_ntt2022_encoder_forward(x_nchw, params, stack=True):
    # x_nchw: (B, 1, n_mels, T) PyTorch NCHW.  Internal layout is time-major
    # (B, T, F, C) so the final feature map is already in (B, T, F*C) order.
    x = jnp.transpose(x_nchw, (0, 3, 2, 1))                  # (B, T, F, 1)
    for lp in params["conv_layers"]:
        x = conv_bn_relu_pool(x, lp["w"], lp["b"],
                              lp["gamma"], lp["beta"], lp["mean"], lp["var"])
    Cout = params["conv_layers"][-1]["w"].shape[0]
    x = x[..., :Cout]                                        # drop channel pad once
    B, Td, Fd, C = x.shape
    # PyTorch: (B,C,F,T).permute(0,3,2,1).reshape(B,T,F*C) == free reshape here.
    x_feat = x.reshape(B, Td, Fd * C)                        # bf16

    fc = params["fc"]
    x_fc = fc_forward(x_feat.reshape(B * Td, Fd * C),
                      fc["w1"], fc["b1"], fc["w2"], fc["b2"]).reshape(B, Td, -1)

    if stack:
        # torch.hstack([x.T(1,2), x_fc.T(1,2)]).T(1,2) == concat on feature dim
        return jnp.concatenate([x_feat.astype(jnp.float32), x_fc], axis=-1)
    return x_fc


# ----------------------------------------------------------------------------
# Pure-JAX f32 reference (numerical verification of the Pallas path)
# ----------------------------------------------------------------------------

def ref_forward(x_nchw, params, stack=True, eps=1e-5):
    x = x_nchw
    for lp in params["conv_layers"]:
        y = lax.conv_general_dilated(
            x, lp["w"], window_strides=(1, 1), padding=[(1, 1), (1, 1)],
            dimension_numbers=("NCHW", "OIHW", "NCHW"))
        y = y + lp["b"][None, :, None, None]
        y = ((y - lp["mean"][None, :, None, None])
             / jnp.sqrt(lp["var"] + eps)[None, :, None, None]
             * lp["gamma"][None, :, None, None]
             + lp["beta"][None, :, None, None])
        y = jnp.maximum(y, 0.0)
        x = lax.reduce_window(y, -jnp.inf, lax.max,
                              (1, 1, 2, 2), (1, 1, 2, 2), "VALID")
    B, C, Fd, Td = x.shape
    xf = jnp.transpose(x, (0, 3, 2, 1)).reshape(B, Td, Fd * C)
    fc = params["fc"]
    h = jnp.maximum(xf @ fc["w1"] + fc["b1"], 0.0)
    y2 = jnp.maximum(h @ fc["w2"] + fc["b2"], 0.0)
    return jnp.concatenate([xf, y2], axis=-1) if stack else y2


# ----------------------------------------------------------------------------
# Deterministic parameter init (shapes from AudioNTT2022Encoder.__init__)
# ----------------------------------------------------------------------------

def init_params(key, n_mels, d, base_d, mlp_hidden_d, conv_layers):
    conv_d = base_d * (n_mels // (2 ** conv_layers))
    keys = jax.random.split(key, conv_layers * 6 + 4)
    ki = 0
    layers = []
    cin = 1
    for _ in range(conv_layers):
        w = 0.1 * jax.random.normal(keys[ki], (base_d, cin, 3, 3), jnp.float32); ki += 1
        b = 0.1 * jax.random.normal(keys[ki], (base_d,), jnp.float32); ki += 1
        gamma = 1.0 + 0.1 * jax.random.normal(keys[ki], (base_d,), jnp.float32); ki += 1
        beta = 0.05 * jax.random.normal(keys[ki], (base_d,), jnp.float32); ki += 1
        mean = 0.05 * jax.random.normal(keys[ki], (base_d,), jnp.float32); ki += 1
        var = 1.0 + 0.1 * jax.random.uniform(keys[ki], (base_d,), jnp.float32); ki += 1
        layers.append(dict(w=w, b=b, gamma=gamma, beta=beta, mean=mean, var=var))
        cin = base_d
    w1 = 0.1 * jax.random.normal(keys[ki], (conv_d, mlp_hidden_d), jnp.float32); ki += 1
    b1 = 0.1 * jax.random.normal(keys[ki], (mlp_hidden_d,), jnp.float32); ki += 1
    w2 = 0.1 * jax.random.normal(keys[ki], (mlp_hidden_d, d - conv_d), jnp.float32); ki += 1
    b2 = 0.1 * jax.random.normal(keys[ki], (d - conv_d,), jnp.float32); ki += 1
    return dict(conv_layers=layers,
                fc=dict(w1=w1, b1=b1, w2=w2, b2=b2))


# ----------------------------------------------------------------------------

if __name__ == "__main__":
    # Small but shape-consistent config:
    #   n_mels=16, T=16, base_d=8, conv_layers=2 -> conv_d = 8*(16//4) = 32
    #   mlp_hidden_d=32, d=96 -> fc output dim = 64, stacked output dim = 96
    B, n_mels, T = 2, 16, 16
    d, base_d, mlp_hidden_d, conv_layers = 96, 8, 32, 2

    key = jax.random.PRNGKey(0)
    k_x, k_p = jax.random.split(key)
    x = jax.random.normal(k_x, (B, 1, n_mels, T), jnp.float32)   # PyTorch NCHW
    params = init_params(k_p, n_mels, d, base_d, mlp_hidden_d, conv_layers)

    out = audio_ntt2022_encoder_forward(x, params, stack=True)
    out = jax.block_until_ready(out)

    ref = jax.block_until_ready(ref_forward(x, params, stack=True))

    assert out.shape == (B, T // (2 ** conv_layers), d), out.shape
    # bf16 matmul inputs (f32 accumulation) -> loosened tolerance vs f32 ref.
    max_err = float(jnp.max(jnp.abs(out - ref)))
    assert jnp.allclose(out, ref, atol=5e-2, rtol=5e-2), max_err

    print("KERNEL_OK")
</pallas_src>

<mosaic_0001>
module attributes {stable_mosaic.version = 11 : i64} {
  func.func @_conv_bn_relu_pool_kernel(%arg0: i32, %arg1: i32, %arg2: memref<1x16x18x8xbf16, #tpu.memory_space<vmem>>, %arg3: memref<1x2x18x8xbf16, #tpu.memory_space<vmem>>, %arg4: memref<72x128xbf16, #tpu.memory_space<vmem>>, %arg5: memref<1x128xf32, #tpu.memory_space<vmem>>, %arg6: memref<1x8x8x128xbf16, #tpu.memory_space<vmem>>) attributes {dimension_semantics = [#tpu.dimension_semantics<parallel>, #tpu.dimension_semantics<parallel>], iteration_bounds = array<i64: 2, 1>, scalar_prefetch = 0 : i64, scratch_operands = 0 : i64, tpu.core_type = #tpu.core_type<tc>, window_params = [{transform_indices = @transform_0, window_bounds = array<i64: 1, 16, 18, 8>}, {transform_indices = @transform_1, window_bounds = array<i64: 1, 2, 18, 8>}, {pipeline_mode = #tpu.pipeline_mode<synchronous>, transform_indices = @transform_2, window_bounds = array<i64: 72, 128>}, {pipeline_mode = #tpu.pipeline_mode<synchronous>, transform_indices = @transform_3, window_bounds = array<i64: 1, 128>}, {transform_indices = @transform_4, window_bounds = array<i64: 1, 8, 8, 128>}]} {
    %c0 = arith.constant 0 : index
    %c0_0 = arith.constant 0 : index
    %c0_1 = arith.constant 0 : index
    %c0_2 = arith.constant 0 : index
    %0 = vector.load %arg2[%c0, %c0_0, %c0_1, %c0_2] : memref<1x16x18x8xbf16, #tpu.memory_space<vmem>>, vector<1x16x18x8xbf16>
    %1 = vector.shape_cast %0 : vector<1x16x18x8xbf16> to vector<16x18x8xbf16>
    %c0_3 = arith.constant 0 : index
    %c0_4 = arith.constant 0 : index
    %c0_5 = arith.constant 0 : index
    %c0_6 = arith.constant 0 : index
    %2 = vector.load %arg3[%c0_3, %c0_4, %c0_5, %c0_6] : memref<1x2x18x8xbf16, #tpu.memory_space<vmem>>, vector<1x2x18x8xbf16>
    %3 = vector.shape_cast %2 : vector<1x2x18x8xbf16> to vector<2x18x8xbf16>
    %4 = tpu.concatenate %1, %3 in 0 : vector<16x18x8xbf16>, vector<2x18x8xbf16> -> vector<18x18x8xbf16>
    %5 = vector.extract_strided_slice %4 {offsets = [0, 0, 0], sizes = [18, 16, 8], strides = [1, 1, 1]} : vector<18x18x8xbf16> to vector<18x16x8xbf16>
    %6 = vector.extract_strided_slice %4 {offsets = [0, 1, 0], sizes = [18, 16, 8], strides = [1, 1, 1]} : vector<18x18x8xbf16> to vector<18x16x8xbf16>
    %7 = vector.extract_strided_slice %4 {offsets = [0, 2, 0], sizes = [18, 16, 8], strides = [1, 1, 1]} : vector<18x18x8xbf16> to vector<18x16x8xbf16>
    %8 = vector.extract_strided_slice %5 {offsets = [0, 0, 0], sizes = [16, 16, 8], strides = [1, 1, 1]} : vector<18x16x8xbf16> to vector<16x16x8xbf16>
    %9 = vector.extract_strided_slice %6 {offsets = [0, 0, 0], sizes = [16, 16, 8], strides = [1, 1, 1]} : vector<18x16x8xbf16> to vector<16x16x8xbf16>
    %10 = vector.extract_strided_slice %7 {offsets = [0, 0, 0], sizes = [16, 16, 8], strides = [1, 1, 1]} : vector<18x16x8xbf16> to vector<16x16x8xbf16>
    %11 = vector.extract_strided_slice %5 {offsets = [1, 0, 0], sizes = [16, 16, 8], strides = [1, 1, 1]} : vector<18x16x8xbf16> to vector<16x16x8xbf16>
    %12 = vector.extract_strided_slice %6 {offsets = [1, 0, 0], sizes = [16, 16, 8], strides = [1, 1, 1]} : vector<18x16x8xbf16> to vector<16x16x8xbf16>
    %13 = vector.extract_strided_slice %7 {offsets = [1, 0, 0], sizes = [16, 16, 8], strides = [1, 1, 1]} : vector<18x16x8xbf16> to vector<16x16x8xbf16>
    %14 = vector.extract_strided_slice %5 {offsets = [2, 0, 0], sizes = [16, 16, 8], strides = [1, 1, 1]} : vector<18x16x8xbf16> to vector<16x16x8xbf16>
    %15 = vector.extract_strided_slice %6 {offsets = [2, 0, 0], sizes = [16, 16, 8], strides = [1, 1, 1]} : vector<18x16x8xbf16> to vector<16x16x8xbf16>
    %16 = vector.extract_strided_slice %7 {offsets = [2, 0, 0], sizes = [16, 16, 8], strides = [1, 1, 1]} : vector<18x16x8xbf16> to vector<16x16x8xbf16>
    %17 = tpu.concatenate %8, %9, %10, %11, %12, %13, %14, %15, %16 in 2 : vector<16x16x8xbf16>, vector<16x16x8xbf16>, vector<16x16x8xbf16>, vector<16x16x8xbf16>, vector<16x16x8xbf16>, vector<16x16x8xbf16>, vector<16x16x8xbf16>, vector<16x16x8xbf16>, vector<16x16x8xbf16> -> vector<16x16x72xbf16>
    %18 = vector.shape_cast %17 : vector<16x16x72xbf16> to vector<256x72xbf16>
    %c0_7 = arith.constant 0 : index
    %c0_8 = arith.constant 0 : index
    %19 = vector.load %arg4[%c0_7, %c0_8] : memref<72x128xbf16, #tpu.memory_space<vmem>>, vector<72x128xbf16>
    %cst = arith.constant dense<0.000000e+00> : vector<256x128xf32>
    %20 = tpu.matmul %18, %19, %cst {dimension_numbers = #tpu.dot_dimension_numbers<[1], [0], [0], [1], [0, 0, 1, 1], [], []>} : vector<256x72xbf16>, vector<72x128xbf16>, vector<256x128xf32> -> vector<256x128xf32>
    %c0_9 = arith.constant 0 : index
    %c0_10 = arith.constant 0 : index
    %21 = vector.load %arg5[%c0_9, %c0_10] : memref<1x128xf32, #tpu.memory_space<vmem>>, vector<1x128xf32>
    %22 = vector.broadcast %21 : vector<1x128xf32> to vector<256x128xf32>
    %23 = arith.addf %20, %22 : vector<256x128xf32>
    %cst_11 = arith.constant 0.000000e+00 : f32
    %24 = vector.broadcast %cst_11 : f32 to vector<256x128xf32>
    %25 = arith.maximumf %23, %24 : vector<256x128xf32>
    %26 = vector.shape_cast %25 : vector<256x128xf32> to vector<128x256xf32>
    %27 = vector.extract_strided_slice %26 {offsets = [0, 0], sizes = [128, 128], strides = [1, 1]} : vector<128x256xf32> to vector<128x128xf32>
    %28 = vector.extract_strided_slice %26 {offsets = [0, 128], sizes = [128, 128], strides = [1, 1]} : vector<128x256xf32> to vector<128x128xf32>
    %29 = arith.maximumf %27, %28 : vector<128x128xf32>
    %30 = vector.shape_cast %29 : vector<128x128xf32> to vector<8x16x128xf32>
    %31 = vector.extract_strided_slice %30 {offsets = [0, 0, 0], sizes = [8, 8, 128], strides = [1, 1, 1]} : vector<8x16x128xf32> to vector<8x8x128xf32>
    %32 = vector.extract_strided_slice %30 {offsets = [0, 8, 0], sizes = [8, 8, 128], strides = [1, 1, 1]} : vector<8x16x128xf32> to vector<8x8x128xf32>
    %33 = arith.maximumf %31, %32 : vector<8x8x128xf32>
    %34 = arith.truncf %33 : vector<8x8x128xf32> to vector<8x8x128xbf16>
    %c0_12 = arith.constant 0 : index
    %c0_13 = arith.constant 0 : index
    %c0_14 = arith.constant 0 : index
    %c0_15 = arith.constant 0 : index
    %35 = vector.load %arg6[%c0_12, %c0_13, %c0_14, %c0_15] : memref<1x8x8x128xbf16, #tpu.memory_space<vmem>>, vector<1x8x8x128xbf16>
    %36 = vector.shape_cast %35 : vector<1x8x8x128xbf16> to vector<8x8x128xbf16>
    %37 = vector.shape_cast %34 : vector<8x8x128xbf16> to vector<1x8x8x128xbf16>
    tpu.vector_store %arg6[%c0_12, %c0_13, %c0_14, %c0_15], %37 {strides = array<i32>} : memref<1x8x8x128xbf16, #tpu.memory_space<vmem>>, vector<1x8x8x128xbf16>,
    return
  }
  func.func @transform_0(%arg0: i32, %arg1: i32) -> (i32, i32, i32, i32) {
    %c0_i32 = arith.constant 0 : i32
    %c0_i32_0 = arith.constant 0 : i32
    %c0_i32_1 = arith.constant 0 : i32
    return %arg0, %arg1, %c0_i32, %c0_i32_0 : i32, i32, i32, i32
  }
  func.func @transform_1(%arg0: i32, %arg1: i32) -> (i32, i32, i32, i32) {
    %c1_i32 = arith.constant 1 : i32
    %0 = arith.addi %arg1, %c1_i32 : i32
    %c8_i32 = arith.constant 8 : i32
    %1 = arith.muli %c8_i32, %0 : i32
    %c0_i32 = arith.constant 0 : i32
    %c0_i32_0 = arith.constant 0 : i32
    %c0_i32_1 = arith.constant 0 : i32
    return %arg0, %1, %c0_i32, %c0_i32_0 : i32, i32, i32, i32
  }
  func.func @transform_2(%arg0: i32, %arg1: i32) -> (i32, i32) {
    %c0_i32 = arith.constant 0 : i32
    %c0_i32_0 = arith.constant 0 : i32
    %c0_i32_1 = arith.constant 0 : i32
    return %c0_i32, %c0_i32_0 : i32, i32
  }
  func.func @transform_3(%arg0: i32, %arg1: i32) -> (i32, i32) {
    %c0_i32 = arith.constant 0 : i32
    %c0_i32_0 = arith.constant 0 : i32
    %c0_i32_1 = arith.constant 0 : i32
    return %c0_i32, %c0_i32_0 : i32, i32
  }
  func.func @transform_4(%arg0: i32, %arg1: i32) -> (i32, i32, i32, i32) {
    %c0_i32 = arith.constant 0 : i32
    %c0_i32_0 = arith.constant 0 : i32
    %c0_i32_1 = arith.constant 0 : i32
    return %arg0, %arg1, %c0_i32, %c0_i32_0 : i32, i32, i32, i32
  }
}

module attributes {stable_mosaic.version = 11 : i64} {
  func.func @_conv_bn_relu_pool_kernel(%arg0: i32, %arg1: i32, %arg2: memref<1x8x10x128xbf16, #tpu.memory_space<vmem>>, %arg3: memref<1x2x10x128xbf16, #tpu.memory_space<vmem>>, %arg4: memref<1152x128xbf16, #tpu.memory_space<vmem>>, %arg5: memref<1x128xf32, #tpu.memory_space<vmem>>, %arg6: memref<1x4x4x128xbf16, #tpu.memory_space<vmem>>) attributes {dimension_semantics = [#tpu.dimension_semantics<parallel>, #tpu.dimension_semantics<parallel>], iteration_bounds = array<i64: 2, 1>, scalar_prefetch = 0 : i64, scratch_operands = 0 : i64, tpu.core_type = #tpu.core_type<tc>, window_params = [{transform_indices = @transform_0, window_bounds = array<i64: 1, 8, 10, 128>}, {transform_indices = @transform_1, window_bounds = array<i64: 1, 2, 10, 128>}, {pipeline_mode = #tpu.pipeline_mode<synchronous>, transform_indices = @transform_2, window_bounds = array<i64: 1152, 128>}, {pipeline_mode = #tpu.pipeline_mode<synchronous>, transform_indices = @transform_3, window_bounds = array<i64: 1, 128>}, {transform_indices = @transform_4, window_bounds = array<i64: 1, 4, 4, 128>}]} {
    %c0 = arith.constant 0 : index
    %c0_0 = arith.constant 0 : index
    %c0_1 = arith.constant 0 : index
    %c0_2 = arith.constant 0 : index
    %0 = vector.load %arg2[%c0, %c0_0, %c0_1, %c0_2] : memref<1x8x10x128xbf16, #tpu.memory_space<vmem>>, vector<1x8x10x128xbf16>
    %1 = vector.shape_cast %0 : vector<1x8x10x128xbf16> to vector<8x10x128xbf16>
    %c0_3 = arith.constant 0 : index
    %c0_4 = arith.constant 0 : index
    %c0_5 = arith.constant 0 : index
    %c0_6 = arith.constant 0 : index
    %2 = vector.load %arg3[%c0_3, %c0_4, %c0_5, %c0_6] : memref<1x2x10x128xbf16, #tpu.memory_space<vmem>>, vector<1x2x10x128xbf16>
    %3 = vector.shape_cast %2 : vector<1x2x10x128xbf16> to vector<2x10x128xbf16>
    %4 = tpu.concatenate %1, %3 in 0 : vector<8x10x128xbf16>, vector<2x10x128xbf16> -> vector<10x10x128xbf16>
    %5 = vector.extract_strided_slice %4 {offsets = [0, 0, 0], sizes = [10, 8, 128], strides = [1, 1, 1]} : vector<10x10x128xbf16> to vector<10x8x128xbf16>
    %6 = vector.extract_strided_slice %4 {offsets = [0, 1, 0], sizes = [10, 8, 128], strides = [1, 1, 1]} : vector<10x10x128xbf16> to vector<10x8x128xbf16>
    %7 = vector.extract_strided_slice %4 {offsets = [0, 2, 0], sizes = [10, 8, 128], strides = [1, 1, 1]} : vector<10x10x128xbf16> to vector<10x8x128xbf16>
    %8 = vector.extract_strided_slice %5 {offsets = [0, 0, 0], sizes = [8, 8, 128], strides = [1, 1, 1]} : vector<10x8x128xbf16> to vector<8x8x128xbf16>
    %9 = vector.extract_strided_slice %6 {offsets = [0, 0, 0], sizes = [8, 8, 128], strides = [1, 1, 1]} : vector<10x8x128xbf16> to vector<8x8x128xbf16>
    %10 = vector.extract_strided_slice %7 {offsets = [0, 0, 0], sizes = [8, 8, 128], strides = [1, 1, 1]} : vector<10x8x128xbf16> to vector<8x8x128xbf16>
    %11 = vector.extract_strided_slice %5 {offsets = [1, 0, 0], sizes = [8, 8, 128], strides = [1, 1, 1]} : vector<10x8x128xbf16> to vector<8x8x128xbf16>
    %12 = vector.extract_strided_slice %6 {offsets = [1, 0, 0], sizes = [8, 8, 128], strides = [1, 1, 1]} : vector<10x8x128xbf16> to vector<8x8x128xbf16>
    %13 = vector.extract_strided_slice %7 {offsets = [1, 0, 0], sizes = [8, 8, 128], strides = [1, 1, 1]} : vector<10x8x128xbf16> to vector<8x8x128xbf16>
    %14 = vector.extract_strided_slice %5 {offsets = [2, 0, 0], sizes = [8, 8, 128], strides = [1, 1, 1]} : vector<10x8x128xbf16> to vector<8x8x128xbf16>
    %15 = vector.extract_strided_slice %6 {offsets = [2, 0, 0], sizes = [8, 8, 128], strides = [1, 1, 1]} : vector<10x8x128xbf16> to vector<8x8x128xbf16>
    %16 = vector.extract_strided_slice %7 {offsets = [2, 0, 0], sizes = [8, 8, 128], strides = [1, 1, 1]} : vector<10x8x128xbf16> to vector<8x8x128xbf16>
    %17 = tpu.concatenate %8, %9, %10, %11, %12, %13, %14, %15, %16 in 2 : vector<8x8x128xbf16>, vector<8x8x128xbf16>, vector<8x8x128xbf16>, vector<8x8x128xbf16>, vector<8x8x128xbf16>, vector<8x8x128xbf16>, vector<8x8x128xbf16>, vector<8x8x128xbf16>, vector<8x8x128xbf16> -> vector<8x8x1152xbf16>
    %18 = vector.shape_cast %17 : vector<8x8x1152xbf16> to vector<64x1152xbf16>
    %c0_7 = arith.constant 0 : index
    %c0_8 = arith.constant 0 : index
    %19 = vector.load %arg4[%c0_7, %c0_8] : memref<1152x128xbf16, #tpu.memory_space<vmem>>, vector<1152x128xbf16>
    %cst = arith.constant dense<0.000000e+00> : vector<64x128xf32>
    %20 = tpu.matmul %18, %19, %cst {dimension_numbers = #tpu.dot_dimension_numbers<[1], [0], [0], [1], [0, 0, 1, 1], [], []>} : vector<64x1152xbf16>, vector<1152x128xbf16>, vector<64x128xf32> -> vector<64x128xf32>
    %c0_9 = arith.constant 0 : index
    %c0_10 = arith.constant 0 : index
    %21 = vector.load %arg5[%c0_9, %c0_10] : memref<1x128xf32, #tpu.memory_space<vmem>>, vector<1x128xf32>
    %22 = vector.broadcast %21 : vector<1x128xf32> to vector<64x128xf32>
    %23 = arith.addf %20, %22 : vector<64x128xf32>
    %cst_11 = arith.constant 0.000000e+00 : f32
    %24 = vector.broadcast %cst_11 : f32 to vector<64x128xf32>
    %25 = arith.maximumf %23, %24 : vector<64x128xf32>
    %26 = vector.shape_cast %25 : vector<64x128xf32> to vector<32x256xf32>
    %27 = vector.extract_strided_slice %26 {offsets = [0, 0], sizes = [32, 128], strides = [1, 1]} : vector<32x256xf32> to vector<32x128xf32>
    %28 = vector.extract_strided_slice %26 {offsets = [0, 128], sizes = [32, 128], strides = [1, 1]} : vector<32x256xf32> to vector<32x128xf32>
    %29 = arith.maximumf %27, %28 : vector<32x128xf32>
    %30 = vector.shape_cast %29 : vector<32x128xf32> to vector<4x8x128xf32>
    %31 = vector.extract_strided_slice %30 {offsets = [0, 0, 0], sizes = [4, 4, 128], strides = [1, 1, 1]} : vector<4x8x128xf32> to vector<4x4x128xf32>
    %32 = vector.extract_strided_slice %30 {offsets = [0, 4, 0], sizes = [4, 4, 128], strides = [1, 1, 1]} : vector<4x8x128xf32> to vector<4x4x128xf32>
    %33 = arith.maximumf %31, %32 : vector<4x4x128xf32>
    %34 = arith.truncf %33 : vector<4x4x128xf32> to vector<4x4x128xbf16>
    %c0_12 = arith.constant 0 : index
    %c0_13 = arith.constant 0 : index
    %c0_14 = arith.constant 0 : index
    %c0_15 = arith.constant 0 : index
    %35 = vector.load %arg6[%c0_12, %c0_13, %c0_14, %c0_15] : memref<1x4x4x128xbf16, #tpu.memory_space<vmem>>, vector<1x4x4x128xbf16>
    %36 = vector.shape_cast %35 : vector<1x4x4x128xbf16> to vector<4x4x128xbf16>
    %37 = vector.shape_cast %34 : vector<4x4x128xbf16> to vector<1x4x4x128xbf16>
    tpu.vector_store %arg6[%c0_12, %c0_13, %c0_14, %c0_15], %37 {strides = array<i32>} : memref<1x4x4x128xbf16, #tpu.memory_space<vmem>>, vector<1x4x4x128xbf16>,
    return
  }
  func.func @transform_0(%arg0: i32, %arg1: i32) -> (i32, i32, i32, i32) {
    %c0_i32 = arith.constant 0 : i32
    %c0_i32_0 = arith.constant 0 : i32
    %c0_i32_1 = arith.constant 0 : i32
    return %arg0, %arg1, %c0_i32, %c0_i32_0 : i32, i32, i32, i32
  }
  func.func @transform_1(%arg0: i32, %arg1: i32) -> (i32, i32, i32, i32) {
    %c1_i32 = arith.constant 1 : i32
    %0 = arith.addi %arg1, %c1_i32 : i32
    %c4_i32 = arith.constant 4 : i32
    %1 = arith.muli %c4_i32, %0 : i32
    %c0_i32 = arith.constant 0 : i32
    %c0_i32_0 = arith.constant 0 : i32
    %c0_i32_1 = arith.constant 0 : i32
    return %arg0, %1, %c0_i32, %c0_i32_0 : i32, i32, i32, i32
  }
  func.func @transform_2(%arg0: i32, %arg1: i32) -> (i32, i32) {
    %c0_i32 = arith.constant 0 : i32
    %c0_i32_0 = arith.constant 0 : i32
    %c0_i32_1 = arith.constant 0 : i32
    return %c0_i32, %c0_i32_0 : i32, i32
  }
  func.func @transform_3(%arg0: i32, %arg1: i32) -> (i32, i32) {
    %c0_i32 = arith.constant 0 : i32
    %c0_i32_0 = arith.constant 0 : i32
    %c0_i32_1 = arith.constant 0 : i32
    return %c0_i32, %c0_i32_0 : i32, i32
  }
  func.func @transform_4(%arg0: i32, %arg1: i32) -> (i32, i32, i32, i32) {
    %c0_i32 = arith.constant 0 : i32
    %c0_i32_0 = arith.constant 0 : i32
    %c0_i32_1 = arith.constant 0 : i32
    return %arg0, %arg1, %c0_i32, %c0_i32_0 : i32, i32, i32, i32
  }
}

module attributes {stable_mosaic.version = 11 : i64} {
  func.func @_fc_kernel(%arg0: i32, %arg1: memref<8x128xbf16, #tpu.memory_space<vmem>>, %arg2: memref<128x128xbf16, #tpu.memory_space<vmem>>, %arg3: memref<1x128xf32, #tpu.memory_space<vmem>>, %arg4: memref<128x128xbf16, #tpu.memory_space<vmem>>, %arg5: memref<1x128xf32, #tpu.memory_space<vmem>>, %arg6: memref<8x128xf32, #tpu.memory_space<vmem>>) attributes {dimension_semantics = [#tpu.dimension_semantics<parallel>], iteration_bounds = array<i64: 1>, scalar_prefetch = 0 : i64, scratch_operands = 0 : i64, tpu.core_type = #tpu.core_type<tc>, window_params = [{transform_indices = @transform_0, window_bounds = array<i64: 8, 128>}, {pipeline_mode = #tpu.pipeline_mode<synchronous>, transform_indices = @transform_1, window_bounds = array<i64: 128, 128>}, {pipeline_mode = #tpu.pipeline_mode<synchronous>, transform_indices = @transform_2, window_bounds = array<i64: 1, 128>}, {pipeline_mode = #tpu.pipeline_mode<synchronous>, transform_indices = @transform_3, window_bounds = array<i64: 128, 128>}, {pipeline_mode = #tpu.pipeline_mode<synchronous>, transform_indices = @transform_4, window_bounds = array<i64: 1, 128>}, {transform_indices = @transform_5, window_bounds = array<i64: 8, 128>}]} {
    %c0 = arith.constant 0 : index
    %c0_0 = arith.constant 0 : index
    %0 = vector.load %arg1[%c0, %c0_0] : memref<8x128xbf16, #tpu.memory_space<vmem>>, vector<8x128xbf16>
    %c0_1 = arith.constant 0 : index
    %c0_2 = arith.constant 0 : index
    %1 = vector.load %arg2[%c0_1, %c0_2] : memref<128x128xbf16, #tpu.memory_space<vmem>>, vector<128x128xbf16>
    %cst = arith.constant dense<0.000000e+00> : vector<8x128xf32>
    %2 = tpu.matmul %0, %1, %cst {dimension_numbers = #tpu.dot_dimension_numbers<[1], [0], [0], [1], [0, 0, 1, 1], [], []>} : vector<8x128xbf16>, vector<128x128xbf16>, vector<8x128xf32> -> vector<8x128xf32>
    %c0_3 = arith.constant 0 : index
    %c0_4 = arith.constant 0 : index
    %3 = vector.load %arg3[%c0_3, %c0_4] : memref<1x128xf32, #tpu.memory_space<vmem>>, vector<1x128xf32>
    %4 = vector.broadcast %3 : vector<1x128xf32> to vector<8x128xf32>
    %5 = arith.addf %2, %4 : vector<8x128xf32>
    %cst_5 = arith.constant 0.000000e+00 : f32
    %6 = vector.broadcast %cst_5 : f32 to vector<8x128xf32>
    %7 = arith.maximumf %5, %6 : vector<8x128xf32>
    %8 = arith.truncf %7 : vector<8x128xf32> to vector<8x128xbf16>
    %c0_6 = arith.constant 0 : index
    %c0_7 = arith.constant 0 : index
    %9 = vector.load %arg4[%c0_6, %c0_7] : memref<128x128xbf16, #tpu.memory_space<vmem>>, vector<128x128xbf16>
    %cst_8 = arith.constant dense<0.000000e+00> : vector<8x128xf32>
    %10 = tpu.matmul %8, %9, %cst_8 {dimension_numbers = #tpu.dot_dimension_numbers<[1], [0], [0], [1], [0, 0, 1, 1], [], []>} : vector<8x128xbf16>, vector<128x128xbf16>, vector<8x128xf32> -> vector<8x128xf32>
    %c0_9 = arith.constant 0 : index
    %c0_10 = arith.constant 0 : index
    %11 = vector.load %arg5[%c0_9, %c0_10] : memref<1x128xf32, #tpu.memory_space<vmem>>, vector<1x128xf32>
    %12 = vector.broadcast %11 : vector<1x128xf32> to vector<8x128xf32>
    %13 = arith.addf %10, %12 : vector<8x128xf32>
    %cst_11 = arith.constant 0.000000e+00 : f32
    %14 = vector.broadcast %cst_11 : f32 to vector<8x128xf32>
    %15 = arith.maximumf %13, %14 : vector<8x128xf32>
    %c0_12 = arith.constant 0 : index
    %c0_13 = arith.constant 0 : index
    %16 = vector.load %arg6[%c0_12, %c0_13] : memref<8x128xf32, #tpu.memory_space<vmem>>, vector<8x128xf32>
    tpu.vector_store %arg6[%c0_12, %c0_13], %15 {strides = array<i32>} : memref<8x128xf32, #tpu.memory_space<vmem>>, vector<8x128xf32>,
    return
  }
  func.func @transform_0(%arg0: i32) -> (i32, i32) {
    %c0_i32 = arith.constant 0 : i32
    %c0_i32_0 = arith.constant 0 : i32
    return %arg0, %c0_i32 : i32, i32
  }
  func.func @transform_1(%arg0: i32) -> (i32, i32) {
    %c0_i32 = arith.constant 0 : i32
    %c0_i32_0 = arith.constant 0 : i32
    %c0_i32_1 = arith.constant 0 : i32
    return %c0_i32, %c0_i32_0 : i32, i32
  }
  func.func @transform_2(%arg0: i32) -> (i32, i32) {
    %c0_i32 = arith.constant 0 : i32
    %c0_i32_0 = arith.constant 0 : i32
    %c0_i32_1 = arith.constant 0 : i32
    return %c0_i32, %c0_i32_0 : i32, i32
  }
  func.func @transform_3(%arg0: i32) -> (i32, i32) {
    %c0_i32 = arith.constant 0 : i32
    %c0_i32_0 = arith.constant 0 : i32
    %c0_i32_1 = arith.constant 0 : i32
    return %c0_i32, %c0_i32_0 : i32, i32
  }
  func.func @transform_4(%arg0: i32) -> (i32, i32) {
    %c0_i32 = arith.constant 0 : i32
    %c0_i32_0 = arith.constant 0 : i32
    %c0_i32_1 = arith.constant 0 : i32
    return %c0_i32, %c0_i32_0 : i32, i32
  }
  func.func @transform_5(%arg0: i32) -> (i32, i32) {
    %c0_i32 = arith.constant 0 : i32
    %c0_i32_0 = arith.constant 0 : i32
    return %arg0, %c0_i32 : i32, i32
  }
}

</mosaic_0001>

<llo_original>
// kernel: audio_ntt2022_encoder_forward.5
$region0: #{audio_ntt2022_encoder_forward.5}
  #allocation0 [shape = 'u32[]', space=smem, size = 0x4, offset = 0x4, fixed_abs, tag = 'smem constant byte address 0x4 - core index']
  #allocation1 [shape = 'u32[144,128]{1,0:T(1,128)}', space=vmem, size = 0x12000, scoped, tag = 'internal scratch']
  %s0 = inlined_call_operand.vmem [shape: bf16[8,128], index: 0, kind: input, shape index: {}]
  %s1 = inlined_call_operand.vmem [shape: bf16[128,128], index: 1, kind: input, shape index: {}]
  %s2 = inlined_call_operand.vmem [shape: f32[1,128], index: 2, kind: input, shape index: {}]
  %s3 = inlined_call_operand.vmem [shape: bf16[128,128], index: 3, kind: input, shape index: {}]
  %s4 = inlined_call_operand.vmem [shape: f32[1,128], index: 4, kind: input, shape index: {}]
  %s5 = inlined_call_operand.vmem [shape: f32[8,128], index: 5, kind: output, shape index: {}]
  %s6 = sld [smem:[#allocation0]]
  $region30: #{audio_ntt2022_encoder_forward.5} parent=0
    _
  %s8 = ssub.s32 1, %s6
  %s9 = scalar_select 0, %s8, %s6
  // Predicated region
  $region2: #{audio_ntt2022_encoder_forward.5} parent=0 // pred_check
    _
  $region3: #{audio_ntt2022_encoder_forward.5} parent=0 // pred_check_branch
    %11 = sbr.rel (0) target = $region5
  $region4: #{audio_ntt2022_encoder_forward.5} parent=0 // pred_region
    _
  $region5: #{audio_ntt2022_encoder_forward.5} parent=0 // pred_fallthru
    _
  // Predicated region
  $region6: #{audio_ntt2022_encoder_forward.5} parent=0 // pred_check
    _
  $region7: #{audio_ntt2022_encoder_forward.5} parent=0 // pred_check_branch
    %13 = sbr.rel (0) target = $region9
  $region8: #{audio_ntt2022_encoder_forward.5} parent=0 // pred_region
    _
  $region9: #{audio_ntt2022_encoder_forward.5} parent=0 // pred_fallthru
    _
  // Predicated region
  $region10: #{audio_ntt2022_encoder_forward.5} parent=0 // pred_check
    _
  $region11: #{audio_ntt2022_encoder_forward.5} parent=0 // pred_check_branch
    %15 = sbr.rel (0) target = $region13
  $region12: #{audio_ntt2022_encoder_forward.5} parent=0 // pred_region
    _
  $region13: #{audio_ntt2022_encoder_forward.5} parent=0 // pred_fallthru
    _
  // Predicated region
  $region14: #{audio_ntt2022_encoder_forward.5} parent=0 // pred_check
    _
  $region15: #{audio_ntt2022_encoder_forward.5} parent=0 // pred_check_branch
    %17 = sbr.rel (0) target = $region17
  $region16: #{audio_ntt2022_encoder_forward.5} parent=0 // pred_region
    _
  $region17: #{audio_ntt2022_encoder_forward.5} parent=0 // pred_fallthru
    _
  // Predicated region
  $region18: #{audio_ntt2022_encoder_forward.5} parent=0 // pred_check
    _
  $region19: #{audio_ntt2022_encoder_forward.5} parent=0 // pred_check_branch
    %19 = sbr.rel (0) target = $region21
  $region20: #{audio_ntt2022_encoder_forward.5} parent=0 // pred_region
    _
  $region21: #{audio_ntt2022_encoder_forward.5} parent=0 // pred_fallthru
    _
  %v21 = vld [vmem:[%s0] sm:$0xf]
  %v22 = vld [vmem:[%s1] sm:$0xf]
  %v23 = vld [vmem:[%s1 + $0x4] sm:$0xf]
  %v24 = vld [vmem:[%s1 + $0x8] sm:$0xf]
  %v25 = vld [vmem:[%s1 + $0xc] sm:$0xf]
  %v26 = vld [vmem:[%s1 + $0x10] sm:$0xf]
  %v27 = vld [vmem:[%s1 + $0x14] sm:$0xf]
  %v28 = vld [vmem:[%s1 + $0x18] sm:$0xf]
  %v29 = vld [vmem:[%s1 + $0x1c] sm:$0xf]
  %v30 = vld [vmem:[%s1 + $0x20] sm:$0xf]
  %v31 = vld [vmem:[%s1 + $0x24] sm:$0xf]
  %v32 = vld [vmem:[%s1 + $0x28] sm:$0xf]
  %v33 = vld [vmem:[%s1 + $0x2c] sm:$0xf]
  %v34 = vld [vmem:[%s1 + $0x30] sm:$0xf]
  %v35 = vld [vmem:[%s1 + $0x34] sm:$0xf]
  %v36 = vld [vmem:[%s1 + $0x38] sm:$0xf]
  %v37 = vld [vmem:[%s1 + $0x3c] sm:$0xf]
  %v38 = vld [vmem:[%s2] sm:$0x1]
  %v40 = vlaneseq
  %v41 = vshrl.u32 %v40, 7
  %v42 = vsub.s32 0, %v41
  %v43 = vrot.slane %v38, %v42
  %v61 = vunpack.c.l.b16 %v22
  %v62 = vunpack.c.l.b16 %v23
  %v63 = vunpack.c.l.b16 %v24
  %v64 = vunpack.c.l.b16 %v25
  %v65 = vunpack.c.l.b16 %v26
  %v66 = vunpack.c.l.b16 %v27
  %v67 = vunpack.c.l.b16 %v28
  %v68 = vunpack.c.l.b16 %v29
  %v69 = vunpack.c.l.b16 %v30
  %v70 = vunpack.c.l.b16 %v31
  %v71 = vunpack.c.l.b16 %v32
  %v72 = vunpack.c.l.b16 %v33
  %v73 = vunpack.c.l.b16 %v34
  %v74 = vunpack.c.l.b16 %v35
  %v75 = vunpack.c.l.b16 %v36
  %v76 = vunpack.c.l.b16 %v37
  %v77 = vpack.c.b16 %v62, %v61
  %v78 = vpack.c.b16 %v64, %v63
  %v79 = vpack.c.b16 %v66, %v65
  %v80 = vpack.c.b16 %v68, %v67
  %v81 = vpack.c.b16 %v70, %v69
  %v82 = vpack.c.b16 %v72, %v71
  %v83 = vpack.c.b16 %v74, %v73
  %v84 = vpack.c.b16 %v76, %v75
  %93 = vmatprep.subr.bf16.mxu0 0
  %94 = vmatpush1.bf16.msra.mxu0 %v84
  %95 = vmatprep.subr.bf16.mxu0 0
  %96 = vmatpush1.bf16.msra.mxu0 %v83
  %97 = vmatprep.subr.bf16.mxu0 0
  %98 = vmatpush1.bf16.msra.mxu0 %v82
  %99 = vmatprep.subr.bf16.mxu0 0
  %100 = vmatpush1.bf16.msra.mxu0 %v81
  %101 = vmatprep.subr.bf16.mxu0 0
  %102 = vmatpush1.bf16.msra.mxu0 %v80
  %103 = vmatprep.subr.bf16.mxu0 0
  %104 = vmatpush1.bf16.msra.mxu0 %v79
  %105 = vmatprep.subr.bf16.mxu0 0
  %106 = vmatpush1.bf16.msra.mxu0 %v78
  %107 = vmatprep.subr.bf16.mxu0 0
  %108 = vmatpush1.bf16.msra.mxu0 %v77
  %109 = vmatprep.subr.bf16.mxu0 0
  %110 = vmatpush2.bf16.msra.mxu0 0
  %111 = vmatprep.subr.bf16.mxu0 0
  %112 = vmatpush2.bf16.msra.mxu0 0
  %113 = vmatprep.subr.bf16.mxu0 0
  %114 = vmatpush2.bf16.msra.mxu0 0
  %115 = vmatprep.subr.bf16.mxu0 0
  %116 = vmatpush2.bf16.msra.mxu0 0
  %117 = vmatprep.subr.bf16.mxu0 0
  %118 = vmatpush2.bf16.msra.mxu0 0
  %119 = vmatprep.subr.bf16.mxu0 0
  %120 = vmatpush2.bf16.msra.mxu0 0
  %121 = vmatprep.subr.bf16.mxu0 0
  %122 = vmatpush2.bf16.msra.mxu0 0
  %123 = vmatprep.subr.bf16.mxu0 0
  %124 = vmatpush2.bf16.msra.mxu0 0
  %125 = vmatprep.mubr.bf16.mxu0 0
  %126 = vmatmul.mubr.bf16.gmra.mxu0 %v21
  %v127 = vpop.f32.mrf.mxu0
  %v128 = vadd.f32 %v43, %v127
  %v129 = vpop.f32.mrf.mxu0
  %v130 = vpop.f32.mrf.mxu0
  %v131 = vpop.f32.mrf.mxu0
  %132 = vdwg.mxu0
  %v133 = vmax.f32 %v128, 0.0
  %v134 = vpack.c.bf16 %v133, %v133
  %v135 = vld [vmem:[%s3] sm:$0xf]
  %v136 = vld [vmem:[%s3 + $0x4] sm:$0xf]
  %v137 = vld [vmem:[%s3 + $0x8] sm:$0xf]
  %v138 = vld [vmem:[%s3 + $0xc] sm:$0xf]
  %v139 = vld [vmem:[%s3 + $0x10] sm:$0xf]
  %v140 = vld [vmem:[%s3 + $0x14] sm:$0xf]
  %v141 = vld [vmem:[%s3 + $0x18] sm:$0xf]
  %v142 = vld [vmem:[%s3 + $0x1c] sm:$0xf]
  %v143 = vld [vmem:[%s3 + $0x20] sm:$0xf]
  %v144 = vld [vmem:[%s3 + $0x24] sm:$0xf]
  %v145 = vld [vmem:[%s3 + $0x28] sm:$0xf]
  %v146 = vld [vmem:[%s3 + $0x2c] sm:$0xf]
  %v147 = vld [vmem:[%s3 + $0x30] sm:$0xf]
  %v148 = vld [vmem:[%s3 + $0x34] sm:$0xf]
  %v149 = vld [vmem:[%s3 + $0x38] sm:$0xf]
  %v150 = vld [vmem:[%s3 + $0x3c] sm:$0xf]
  %v151 = vld [vmem:[%s4] sm:$0x1]
  %v153 = vlaneseq
  %v154 = vshrl.u32 %v153, 7
  %v155 = vsub.s32 0, %v154
  %v156 = vrot.slane %v151, %v155
  %v174 = vunpack.c.l.b16 %v135
  %v175 = vunpack.c.l.b16 %v136
  %v176 = vunpack.c.l.b16 %v137
  %v177 = vunpack.c.l.b16 %v138
  %v178 = vunpack.c.l.b16 %v139
  %v179 = vunpack.c.l.b16 %v140
  %v180 = vunpack.c.l.b16 %v141
  %v181 = vunpack.c.l.b16 %v142
  %v182 = vunpack.c.l.b16 %v143
  %v183 = vunpack.c.l.b16 %v144
  %v184 = vunpack.c.l.b16 %v145
  %v185 = vunpack.c.l.b16 %v146
  %v186 = vunpack.c.l.b16 %v147
  %v187 = vunpack.c.l.b16 %v148
  %v188 = vunpack.c.l.b16 %v149
  %v189 = vunpack.c.l.b16 %v150
  %v190 = vpack.c.b16 %v175, %v174
  %v191 = vpack.c.b16 %v177, %v176
  %v192 = vpack.c.b16 %v179, %v178
  %v193 = vpack.c.b16 %v181, %v180
  %v194 = vpack.c.b16 %v183, %v182
  %v195 = vpack.c.b16 %v185, %v184
  %v196 = vpack.c.b16 %v187, %v186
  %v197 = vpack.c.b16 %v189, %v188
  %206 = vmatprep.subr.bf16.mxu0 0
  %207 = vmatpush1.bf16.msra.mxu0 %v197
  %208 = vmatprep.subr.bf16.mxu0 0
  %209 = vmatpush1.bf16.msra.mxu0 %v196
  %210 = vmatprep.subr.bf16.mxu0 0
  %211 = vmatpush1.bf16.msra.mxu0 %v195
  %212 = vmatprep.subr.bf16.mxu0 0
  %213 = vmatpush1.bf16.msra.mxu0 %v194
  %214 = vmatprep.subr.bf16.mxu0 0
  %215 = vmatpush1.bf16.msra.mxu0 %v193
  %216 = vmatprep.subr.bf16.mxu0 0
  %217 = vmatpush1.bf16.msra.mxu0 %v192
  %218 = vmatprep.subr.bf16.mxu0 0
  %219 = vmatpush1.bf16.msra.mxu0 %v191
  %220 = vmatprep.subr.bf16.mxu0 0
  %221 = vmatpush1.bf16.msra.mxu0 %v190
  %222 = vmatprep.subr.bf16.mxu0 0
  %223 = vmatpush2.bf16.msra.mxu0 0
  %224 = vmatprep.subr.bf16.mxu0 0
  %225 = vmatpush2.bf16.msra.mxu0 0
  %226 = vmatprep.subr.bf16.mxu0 0
  %227 = vmatpush2.bf16.msra.mxu0 0
  %228 = vmatprep.subr.bf16.mxu0 0
  %229 = vmatpush2.bf16.msra.mxu0 0
  %230 = vmatprep.subr.bf16.mxu0 0
  %231 = vmatpush2.bf16.msra.mxu0 0
  %232 = vmatprep.subr.bf16.mxu0 0
  %233 = vmatpush2.bf16.msra.mxu0 0
  %234 = vmatprep.subr.bf16.mxu0 0
  %235 = vmatpush2.bf16.msra.mxu0 0
  %236 = vmatprep.subr.bf16.mxu0 0
  %237 = vmatpush2.bf16.msra.mxu0 0
  %238 = vmatprep.mubr.bf16.mxu0 0
  %239 = vmatmul.mubr.bf16.gmra.mxu0 %v134
  %v240 = vpop.f32.mrf.mxu0
  %v241 = vadd.f32 %v156, %v240
  %v242 = vpop.f32.mrf.mxu0
  %v243 = vpop.f32.mrf.mxu0
  %v244 = vpop.f32.mrf.mxu0
  %245 = vdwg.mxu0
  %v246 = vmax.f32 %v241, 0.0
  %247 = vst [vmem:[%s5] sm:$0xff] %v246
  // Predicated region
  $region22: #{audio_ntt2022_encoder_forward.5} parent=0 // pred_check
    _
  $region23: #{audio_ntt2022_encoder_forward.5} parent=0 // pred_check_branch
    %249 = sbr.rel (0) target = $region25
  $region24: #{audio_ntt2022_encoder_forward.5} parent=0 // pred_region
    _
  $region25: #{audio_ntt2022_encoder_forward.5} parent=0 // pred_fallthru
    _
  // Predicated region
  $region26: #{audio_ntt2022_encoder_forward.5} parent=0 // pred_check
    _
  $region27: #{audio_ntt2022_encoder_forward.5} parent=0 // pred_check_branch
    %251 = sbr.rel (0) target = $region29
  $region28: #{audio_ntt2022_encoder_forward.5} parent=0 // pred_region
    _
  $region29: #{audio_ntt2022_encoder_forward.5} parent=0 // pred_fallthru
    _

// kernel: audio_ntt2022_encoder_forward.4
$region0: #{audio_ntt2022_encoder_forward.4}
  #allocation0 [shape = 'u32[]', space=smem, size = 0x4, offset = 0x4, fixed_abs, tag = 'smem constant byte address 0x4 - core index']
  #allocation1 [shape = 'u32[144,128]{1,0:T(1,128)}', space=vmem, size = 0x12000, scoped, tag = 'internal scratch']
  %s0 = inlined_call_operand.vmem [shape: bf16[2,10,10,128], index: 0, kind: input, shape index: {}, may-alias: {0,1}]
  %s1 = inlined_call_operand.vmem [shape: bf16[2,10,10,128], index: 1, kind: input, shape index: {}, may-alias: {0,1}]
  %s2 = inlined_call_operand.vmem [shape: bf16[1152,128], index: 2, kind: input, shape index: {}]
  %s3 = inlined_call_operand.vmem [shape: f32[1,128], index: 3, kind: input, shape index: {}]
  %s4 = inlined_call_operand.vmem [shape: bf16[2,4,4,128], index: 4, kind: output, shape index: {}]
  %s5 = sld [smem:[#allocation0]]
  $region49: #{audio_ntt2022_encoder_forward.4} parent=0
    _
  %s7 = ssub.s32 1, %s5
  %s8 = scalar_select 0, %s7, %s5
  loop: start=0, step=1, limit=4
  $region2: #{audio_ntt2022_encoder_forward.4} parent=0 // loop_pre_header
    _
  $region3: #{audio_ntt2022_encoder_forward.4} parent=0 // loop_header
    %s10 = sphi 0, %s14
    %p11 = scmp.ge.s32.totalorder %s10, 4
    %s17 = sphi 0, %s29
    %s18 = sphi 0, %s25
    %s19 = sphi 0, %s17
    %s20 = sphi 0, %s18
    %s21 = sphi 0, %s19
    %s22 = sphi 0, %s20
    %s34 = sphi 0, %s36
    %s37 = sphi 0, %s34
    %s38 = sphi 0, %s37
    %s54 = sphi 0, %s38
    %s66 = sphi 0, %s68
    %s69 = sphi 0, %s66
    %s70 = sphi 0, %s69
    %s86 = sphi 0, %s70
    %s90 = sphi 0, %s90
    %s92 = sphi 0, %s90
    %s93 = sphi 0, %s92
    %s107 = sphi 0, %s93
    %s111 = sphi 0, %s111
    %s113 = sphi 0, %s111
    %s114 = sphi 0, %s113
    %s128 = sphi 0, %s114
    %s136 = sphi 0, %s138
    %s139 = sphi 0, %s136
    %s140 = sphi 0, %s139
    %s156 = sphi 0, %s140
  $region4: #{audio_ntt2022_encoder_forward.4} parent=0 // loop_header_branch
    %13 = sbr.rel (%p11) target = $region8
  $region5: #{audio_ntt2022_encoder_forward.4} parent=0 // loop_body
    %s15 = ssub.s32 %s10, 1
    %s16 = ssub.s32 %s10, 2
    %s23 = sadd.s32 1, %s18
    %p24 = scmp.ge.s32.totalorder %s23, 1
    %s25 = scalar_select %p24, 0, %s23
    %s26 = sadd.s32 1, %s17
    %s27 = scalar_select %p24, %s26, %s17
    %p28 = scmp.ge.s32.totalorder %s27, 2
    %s29 = scalar_select %p28, 0, %s27
    %s30 = ssub.s32 %s17, %s29
    %s31 = ssub.s32 %s18, %s25
    %s32 = sor.u32 %s30, %s31
    %p33 = scmp.eq.s32.totalorder %s32, 0
    %s35 = sadd.s32 %s34, 1
    %s36 = scalar_select %p33, %s34, %s35
    %p39 = pneg %p33
    %p40 = scmp.eq.s32.totalorder %s10, 1
    %p41 = por %p39, %p40
    %p42 = scmp.ne.s32.totalorder %s34, %s37
    %p43 = scmp.eq.s32.totalorder %s10, 0
    %p44 = por %p42, %p43
    %p45 = scmp.ne.s32.totalorder %s34, %s37
    %p46 = scmp.eq.s32.totalorder %s15, 1
    %p47 = por %p45, %p46
    %p48 = scmp.ne.s32.totalorder %s37, %s38
    %p49 = scmp.eq.s32.totalorder %s15, 0
    %p50 = por %p48, %p49
    %p51 = scmp.ne.s32.totalorder %s37, %s38
    %p52 = scmp.eq.s32.totalorder %s16, 1
    %p53 = por %p51, %p52
    %p55 = scmp.ne.s32.totalorder %s38, %s54
    %p56 = scmp.eq.s32.totalorder %s16, 0
    %p57 = por %p55, %p56
    %s58 = sadd.s32 %s18, 1
    %s59 = smul.u32 %s58, 4
    %s60 = sadd.s32 %s25, 1
    %s61 = smul.u32 %s60, 4
    %s62 = ssub.s32 %s17, %s29
    %s63 = ssub.s32 %s59, %s61
    %s64 = sor.u32 %s62, %s63
    %p65 = scmp.eq.s32.totalorder %s64, 0
    %s67 = sadd.s32 %s66, 1
    %s68 = scalar_select %p65, %s66, %s67
    %p71 = pneg %p65
    %p72 = scmp.eq.s32.totalorder %s10, 1
    %p73 = por %p71, %p72
    %p74 = scmp.ne.s32.totalorder %s66, %s69
    %p75 = scmp.eq.s32.totalorder %s10, 0
    %p76 = por %p74, %p75
    %p77 = scmp.ne.s32.totalorder %s66, %s69
    %p78 = scmp.eq.s32.totalorder %s15, 1
    %p79 = por %p77, %p78
    %p80 = scmp.ne.s32.totalorder %s69, %s70
    %p81 = scmp.eq.s32.totalorder %s15, 0
    %p82 = por %p80, %p81
    %p83 = scmp.ne.s32.totalorder %s69, %s70
    %p84 = scmp.eq.s32.totalorder %s16, 1
    %p85 = por %p83, %p84
    %p87 = scmp.ne.s32.totalorder %s70, %s86
    %p88 = scmp.eq.s32.totalorder %s16, 0
    %p89 = por %p87, %p88
    %s91 = sadd.s32 %s90, 1
    %p94 = scmp.eq.s32.totalorder %s10, 1
    %p95 = scmp.ne.s32.totalorder %s90, %s92
    %p96 = scmp.eq.s32.totalorder %s10, 0
    %p97 = por %p95, %p96
    %p98 = scmp.ne.s32.totalorder %s90, %s92
    %p99 = scmp.eq.s32.totalorder %s15, 1
    %p100 = por %p98, %p99
    %p101 = scmp.ne.s32.totalorder %s92, %s93
    %p102 = scmp.eq.s32.totalorder %s15, 0
    %p103 = por %p101, %p102
    %p104 = scmp.ne.s32.totalorder %s92, %s93
    %p105 = scmp.eq.s32.totalorder %s16, 1
    %p106 = por %p104, %p105
    %p108 = scmp.ne.s32.totalorder %s93, %s107
    %p109 = scmp.eq.s32.totalorder %s16, 0
    %p110 = por %p108, %p109
    %s112 = sadd.s32 %s111, 1
    %p115 = scmp.eq.s32.totalorder %s10, 1
    %p116 = scmp.ne.s32.totalorder %s111, %s113
    %p117 = scmp.eq.s32.totalorder %s10, 0
    %p118 = por %p116, %p117
    %p119 = scmp.ne.s32.totalorder %s111, %s113
    %p120 = scmp.eq.s32.totalorder %s15, 1
    %p121 = por %p119, %p120
    %p122 = scmp.ne.s32.totalorder %s113, %s114
    %p123 = scmp.eq.s32.totalorder %s15, 0
    %p124 = por %p122, %p123
    %p125 = scmp.ne.s32.totalorder %s113, %s114
    %p126 = scmp.eq.s32.totalorder %s16, 1
    %p127 = por %p125, %p126
    %p129 = scmp.ne.s32.totalorder %s114, %s128
    %p130 = scmp.eq.s32.totalorder %s16, 0
    %p131 = por %p129, %p130
    %s132 = ssub.s32 %s17, %s29
    %s133 = ssub.s32 %s18, %s25
    %s134 = sor.u32 %s132, %s133
    %p135 = scmp.eq.s32.totalorder %s134, 0
    %s137 = sadd.s32 %s136, 1
    %s138 = scalar_select %p135, %s136, %s137
    %p141 = pneg %p135
    %p142 = scmp.eq.s32.totalorder %s10, 1
    %p143 = por %p141, %p142
    %p144 = scmp.ne.s32.totalorder %s136, %s139
    %p145 = scmp.eq.s32.totalorder %s10, 0
    %p146 = por %p144, %p145
    %p147 = scmp.ne.s32.totalorder %s136, %s139
    %p148 = scmp.eq.s32.totalorder %s15, 1
    %p149 = por %p147, %p148
    %p150 = scmp.ne.s32.totalorder %s139, %s140
    %p151 = scmp.eq.s32.totalorder %s15, 0
    %p152 = por %p150, %p151
    %p153 = scmp.ne.s32.totalorder %s139, %s140
    %p154 = scmp.eq.s32.totalorder %s16, 1
    %p155 = por %p153, %p154
    %p157 = scmp.ne.s32.totalorder %s140, %s156
    %p158 = scmp.eq.s32.totalorder %s16, 0
    %p159 = por %p157, %p158
    %p160 = scmp.le.s32.totalorder 1, %s10
    %p161 = scmp.lt.s32.totalorder %s10, 3
    %p162 = pnand %p160, %p161
    %p163 = pneg %p162
    // Predicated region
    $region9: #{audio_ntt2022_encoder_forward.4} parent=5 // pred_check
      _
    $region10: #{audio_ntt2022_encoder_forward.4} parent=5 // pred_check_branch
      %165 = sbr.rel (%p162) target = $region12
    $region11: #{audio_ntt2022_encoder_forward.4} parent=5 // pred_region
      %s166 = ssub.s32 %s10, 1
      // Predicated region
      $region13: #{audio_ntt2022_encoder_forward.4} parent=11 // pred_check
        %p167 = pneg %p103
      $region14: #{audio_ntt2022_encoder_forward.4} parent=11 // pred_check_branch
        %169 = sbr.rel (%p167) target = $region16
      $region15: #{audio_ntt2022_encoder_forward.4} parent=11 // pred_region
        _
      $region16: #{audio_ntt2022_encoder_forward.4} parent=11 // pred_fallthru
        _
      // Predicated region
      $region17: #{audio_ntt2022_encoder_forward.4} parent=11 // pred_check
        %p170 = pneg %p124
      $region18: #{audio_ntt2022_encoder_forward.4} parent=11 // pred_check_branch
        %172 = sbr.rel (%p170) target = $region20
      $region19: #{audio_ntt2022_encoder_forward.4} parent=11 // pred_region
        _
      $region20: #{audio_ntt2022_encoder_forward.4} parent=11 // pred_fallthru
        _
    $region12: #{audio_ntt2022_encoder_forward.4} parent=5 // pred_fallthru
      _
    %p173 = scmp.lt.s32.totalorder %s10, 2
    // Predicated region
    $region21: #{audio_ntt2022_encoder_forward.4} parent=5 // pred_check
      %p174 = pneg %p173
    $region22: #{audio_ntt2022_encoder_forward.4} parent=5 // pred_check_branch
      %176 = sbr.rel (%p174) target = $region24
    $region23: #{audio_ntt2022_encoder_forward.4} parent=5 // pred_region
      // Predicated region
      $region25: #{audio_ntt2022_encoder_forward.4} parent=23 // pred_check
        %p177 = pneg %p44
      $region26: #{audio_ntt2022_encoder_forward.4} parent=23 // pred_check_branch
        %179 = sbr.rel (%p177) target = $region28
      $region27: #{audio_ntt2022_encoder_forward.4} parent=23 // pred_region
        %s180 = smul.u32 8, %s18
        %s181 = ssub.s32 10, %s180
        %p182 = scmp.lt.s32.totalorder %s181, 8
        %s183 = scalar_select %p182, %s181, 8
        %s184 = smul.u32 64, %s183
        %s185 = smul.u32 %s184, 2
        %p186 = scmp.lt.s32.totalorder %s17, 1
        %s187 = scalar_select %p186, %s17, 1
        %p188 = scmp.lt.s32.totalorder %s180, 9
        %s189 = scalar_select %p188, %s180, 9
        %s190 = smul.addr %s189, 2
        %s191 = smul.addr %s187, 20
        %s192 = sadd.s32 %s190, %s191
        %s193 = smul.addr %s192, 4
        %s194 = scalar_lea.vmem %s0, %s193
        %s195 = smul.u32 8, %s18
        %s196 = ssub.s32 10, %s195
        %p197 = scmp.lt.s32.totalorder %s196, 8
        %s198 = scalar_select %p197, %s196, 8
        %s199 = smul.u32 64, %s198
        %s200 = smul.u32 %s199, 2
      $region28: #{audio_ntt2022_encoder_forward.4} parent=23 // pred_fallthru
        _
      // Predicated region
      $region29: #{audio_ntt2022_encoder_forward.4} parent=23 // pred_check
        %p201 = pneg %p76
      $region30: #{audio_ntt2022_encoder_forward.4} parent=23 // pred_check_branch
        %203 = sbr.rel (%p201) target = $region32
      $region31: #{audio_ntt2022_encoder_forward.4} parent=23 // pred_region
        %s204 = sadd.s32 %s18, 1
        %s205 = smul.u32 %s204, 4
        %s206 = smul.u32 2, %s205
        %p207 = scmp.lt.s32.totalorder %s17, 1
        %s208 = scalar_select %p207, %s17, 1
        %p209 = scmp.lt.s32.totalorder %s206, 9
        %s210 = scalar_select %p209, %s206, 9
        %s211 = smul.addr %s210, 2
        %s212 = smul.addr %s208, 20
        %s213 = sadd.s32 %s211, %s212
        %s214 = smul.addr %s213, 4
        %s215 = scalar_lea.vmem %s1, %s214
        %s216 = sadd.s32 %s18, 1
        %s217 = smul.u32 %s216, 4
        %s218 = smul.u32 2, %s217
      $region32: #{audio_ntt2022_encoder_forward.4} parent=23 // pred_fallthru
        _
    $region24: #{audio_ntt2022_encoder_forward.4} parent=5 // pred_fallthru
      _
    %p219 = scmp.le.s32.totalorder 1, %s10
    %p220 = scmp.lt.s32.totalorder %s10, 3
    %p221 = pnand %p219, %p220
    %p222 = pneg %p221
    // Predicated region
    $region33: #{audio_ntt2022_encoder_forward.4} parent=5 // pred_check
      _
    $region34: #{audio_ntt2022_encoder_forward.4} parent=5 // pred_check_branch
      %224 = sbr.rel (%p221) target = $region36
    $region35: #{audio_ntt2022_encoder_forward.4} parent=5 // pred_region
      %s225 = ssub.s32 %s10, 1
      %s226 = smul.u32 8, %s20
      %s227 = ssub.s32 10, %s226
      %p228 = scmp.lt.s32.totalorder %s227, 8
      %s229 = scalar_select %p228, %s227, 8
      %s230 = smul.u32 64, %s229
      %s231 = smul.u32 %s230, 2
      %p232 = scmp.lt.s32.totalorder %s19, 1
      %s233 = scalar_select %p232, %s19, 1
      %p234 = scmp.lt.s32.totalorder %s226, 9
      %s235 = scalar_select %p234, %s226, 9
      %s236 = smul.addr %s235, 2
      %s237 = smul.addr %s233, 20
      %s238 = sadd.s32 %s236, %s237
      %s239 = smul.addr %s238, 4
      %s240 = scalar_lea.vmem %s0, %s239
      %p241 = pneg %p50
      %p242 = pneg %p47
      %s243 = sadd.s32 %s20, 1
      %s244 = smul.u32 %s243, 4
      %s245 = smul.u32 2, %s244
      %p246 = scmp.lt.s32.totalorder %s19, 1
      %s247 = scalar_select %p246, %s19, 1
      %p248 = scmp.lt.s32.totalorder %s245, 9
      %s249 = scalar_select %p248, %s245, 9
      %s250 = smul.addr %s249, 2
      %s251 = smul.addr %s247, 20
      %s252 = sadd.s32 %s250, %s251
      %s253 = smul.addr %s252, 4
      %s254 = scalar_lea.vmem %s1, %s253
      %p255 = pneg %p82
      %p256 = pneg %p79
      %p257 = pneg %p103
      %p258 = pneg %p100
      %p259 = pneg %p124
      %p260 = pneg %p121
      %p261 = pneg %p152
      %p262 = pneg %p149
      %s263 = smul.u32 4, %s20
      %p264 = scmp.lt.s32.totalorder %s19, 1
      %s265 = scalar_select %p264, %s19, 1
      %p266 = scmp.lt.s32.totalorder %s263, 3
      %s267 = scalar_select %p266, %s263, 3
      %s268 = smul.addr %s265, 4
      %s269 = sadd.s32 %s267, %s268
      %s270 = smul.addr %s269, 2
      %s271 = scalar_lea.vmem %s4, %s270
      %s272 = smul.u32 8, %s20
      %s273 = ssub.s32 10, %s272
      %p274 = scmp.lt.s32.totalorder %s273, 8
      %s275 = scalar_select %p274, %s273, 8
      %s276 = smul.u32 64, %s275
      %s277 = smul.u32 %s276, 2
      %p278 = scmp.lt.s32.totalorder %s19, 1
      %s279 = scalar_select %p278, %s19, 1
      %p280 = scmp.lt.s32.totalorder %s272, 9
      %s281 = scalar_select %p280, %s272, 9
      %s282 = smul.addr %s281, 2
      %s283 = smul.addr %s279, 20
      %s284 = sadd.s32 %s282, %s283
      %s285 = smul.addr %s284, 4
      %s286 = scalar_lea.vmem %s0, %s285
      %s287 = smul.u32 8, %s20
      %s288 = ssub.s32 10, %s287
      %p289 = scmp.lt.s32.totalorder %s288, 8
      %s290 = scalar_select %p289, %s288, 8
      %s291 = smul.u32 64, %s290
      %s292 = smul.u32 %s291, 2
      %s293 = sadd.s32 %s20, 1
      %s294 = smul.u32 %s293, 4
      %s295 = smul.u32 2, %s294
      %p296 = scmp.lt.s32.totalorder %s19, 1
      %s297 = scalar_select %p296, %s19, 1
      %p298 = scmp.lt.s32.totalorder %s295, 9
      %s299 = scalar_select %p298, %s295, 9
      %s300 = smul.addr %s299, 2
      %s301 = smul.addr %s297, 20
      %s302 = sadd.s32 %s300, %s301
      %s303 = smul.addr %s302, 4
      %s304 = scalar_lea.vmem %s1, %s303
      %s305 = sadd.s32 %s20, 1
      %s306 = smul.u32 %s305, 4
      %s307 = smul.u32 2, %s306
      %s308 = smul.u32 4, %s20
      %p309 = scmp.lt.s32.totalorder %s19, 1
      %s310 = scalar_select %p309, %s19, 1
      %p311 = scmp.lt.s32.totalorder %s308, 3
      %s312 = scalar_select %p311, %s308, 3
      %s313 = smul.addr %s310, 4
      %s314 = sadd.s32 %s312, %s313
      %s315 = smul.addr %s314, 2
      %s316 = scalar_lea.vmem %s4, %s315
      %s317 = smul.u32 4, %s20
      %v319 = vld [vmem:[%s286] sm:$0xf]
      %v320 = vld [vmem:[%s286 + $0x4] sm:$0x1]
      %v321 = vld [vmem:[%s286 + $0x8] sm:$0xf]
      %v322 = vld [vmem:[%s286 + $0xc] sm:$0x1]
      %v323 = vld [vmem:[%s286 + $0x10] sm:$0xf]
      %v324 = vld [vmem:[%s286 + $0x14] sm:$0x1]
      %v325 = vld [vmem:[%s286 + $0x18] sm:$0xf]
      %v326 = vld [vmem:[%s286 + $0x1c] sm:$0x1]
      %v327 = vld [vmem:[%s286 + $0x20] sm:$0xf]
      %v328 = vld [vmem:[%s286 + $0x24] sm:$0x1]
      %v329 = vld [vmem:[%s286 + $0x28] sm:$0xf]
      %v330 = vld [vmem:[%s286 + $0x2c] sm:$0x1]
      %v331 = vld [vmem:[%s286 + $0x30] sm:$0xf]
      %v332 = vld [vmem:[%s286 + $0x34] sm:$0x1]
      %v333 = vld [vmem:[%s286 + $0x38] sm:$0xf]
      %v334 = vld [vmem:[%s286 + $0x3c] sm:$0x1]
      %v335 = vld [vmem:[%s304] sm:$0xf]
      %v336 = vld [vmem:[%s304 + $0x4] sm:$0x1]
      %v337 = vld [vmem:[%s304 + $0x8] sm:$0xf]
      %v338 = vld [vmem:[%s304 + $0xc] sm:$0x1]
      %v355 = vunpack.c.l.b16 %v319
      %v356 = vunpack.c.l.b16 %v320
      %v357 = vunpack.c.l.b16 %v321
      %v358 = vunpack.c.l.b16 %v322
      %v359 = vunpack.c.l.b16 %v323
      %v360 = vunpack.c.l.b16 %v324
      %v361 = vunpack.c.l.b16 %v325
      %v362 = vunpack.c.l.b16 %v326
      %v363 = vunpack.c.l.b16 %v327
      %v364 = vunpack.c.l.b16 %v328
      %v365 = vunpack.c.l.b16 %v329
      %v366 = vunpack.c.l.b16 %v330
      %v367 = vunpack.c.l.b16 %v331
      %v368 = vunpack.c.l.b16 %v332
      %v369 = vunpack.c.l.b16 %v333
      %v370 = vunpack.c.l.b16 %v334
      %v371 = vpack.c.b16 %v356, %v355
      %v372 = vpack.c.b16 %v358, %v357
      %v373 = vpack.c.b16 %v360, %v359
      %v374 = vpack.c.b16 %v362, %v361
      %v375 = vpack.c.b16 %v364, %v363
      %v376 = vpack.c.b16 %v366, %v365
      %v377 = vpack.c.b16 %v368, %v367
      %v378 = vpack.c.b16 %v370, %v369
      %v380 = vshrl.u32 %v371, 16
      %v382 = vshll.u32 %v371, 16
      %v384 = vrot.slane %v382, 1
      %v385 = vor.u32 %v380, %v384
      %v387 = vshrl.u32 %v372, 16
      %v389 = vshll.u32 %v372, 16
      %v391 = vrot.slane %v389, 1
      %v392 = vor.u32 %v387, %v391
      %v394 = vshrl.u32 %v373, 16
      %v396 = vshll.u32 %v373, 16
      %v398 = vrot.slane %v396, 1
      %v399 = vor.u32 %v394, %v398
      %v401 = vshrl.u32 %v374, 16
      %v403 = vshll.u32 %v374, 16
      %v405 = vrot.slane %v403, 1
      %v406 = vor.u32 %v401, %v405
      %v408 = vshrl.u32 %v375, 16
      %v410 = vshll.u32 %v375, 16
      %v412 = vrot.slane %v410, 1
      %v413 = vor.u32 %v408, %v412
      %v415 = vshrl.u32 %v376, 16
      %v417 = vshll.u32 %v376, 16
      %v419 = vrot.slane %v417, 1
      %v420 = vor.u32 %v415, %v419
      %v422 = vshrl.u32 %v377, 16
      %v424 = vshll.u32 %v377, 16
      %v426 = vrot.slane %v424, 1
      %v427 = vor.u32 %v422, %v426
      %v429 = vshrl.u32 %v378, 16
      %v431 = vshll.u32 %v378, 16
      %v433 = vrot.slane %v431, 1
      %v434 = vor.u32 %v429, %v433
      %v435 = vrot.slane %v371, 1
      %v436 = vrot.slane %v372, 1
      %v437 = vrot.slane %v373, 1
      %v438 = vrot.slane %v374, 1
      %v439 = vrot.slane %v375, 1
      %v440 = vrot.slane %v376, 1
      %v441 = vrot.slane %v377, 1
      %v442 = vrot.slane %v378, 1
      %v445 = vunpack.c.l.b16 %v335
      %v446 = vunpack.c.l.b16 %v336
      %v447 = vpack.c.b16 %v446, %v445
      %v449 = vshrl.u32 %v447, 16
      %v451 = vshll.u32 %v447, 16
      %v453 = vrot.slane %v451, 1
      %v454 = vor.u32 %v449, %v453
      %v455 = vrot.slane %v447, 1
      %v458 = vunpack.c.l.b16 %v337
      %v459 = vunpack.c.l.b16 %v338
      %v460 = vpack.c.b16 %v459, %v458
      %v462 = vshrl.u32 %v460, 16
      %v464 = vshll.u32 %v460, 16
      %v466 = vrot.slane %v464, 1
      %v467 = vor.u32 %v462, %v466
      %v468 = vrot.slane %v460, 1
      %v469 = vunpack.c.l.b16 %v385
      %v470 = vunpack.c.l.b16 %v435
      %v471 = vunpack.c.l.b16 %v392
      %v472 = vunpack.c.l.b16 %v436
      %v473 = vunpack.c.l.b16 %v399
      %v474 = vunpack.c.l.b16 %v437
      %v475 = vunpack.c.l.b16 %v406
      %v476 = vunpack.c.l.b16 %v438
      %v477 = vunpack.c.l.b16 %v413
      %v478 = vunpack.c.l.b16 %v439
      %v479 = vunpack.c.l.b16 %v420
      %v480 = vunpack.c.l.b16 %v440
      %v481 = vunpack.c.l.b16 %v427
      %v482 = vunpack.c.l.b16 %v441
      %v483 = vunpack.c.l.b16 %v434
      %v484 = vunpack.c.l.b16 %v442
      %v485 = vunpack.c.l.b16 %v454
      %v486 = vunpack.c.l.b16 %v455
      %v487 = vunpack.c.l.b16 %v467
      %v488 = vunpack.c.l.b16 %v468
      %v489 = vld [vmem:[%s2] sm:$0xf]
      %v490 = vld [vmem:[%s2 + $0x4] sm:$0xf]
      %v491 = vld [vmem:[%s2 + $0x8] sm:$0xf]
      %v492 = vld [vmem:[%s2 + $0xc] sm:$0xf]
      %v493 = vld [vmem:[%s2 + $0x10] sm:$0xf]
      %v494 = vld [vmem:[%s2 + $0x14] sm:$0xf]
      %v495 = vld [vmem:[%s2 + $0x18] sm:$0xf]
      %v496 = vld [vmem:[%s2 + $0x1c] sm:$0xf]
      %v497 = vld [vmem:[%s2 + $0x20] sm:$0xf]
      %v498 = vld [vmem:[%s2 + $0x24] sm:$0xf]
      %v499 = vld [vmem:[%s2 + $0x28] sm:$0xf]
      %v500 = vld [vmem:[%s2 + $0x2c] sm:$0xf]
      %v501 = vld [vmem:[%s2 + $0x30] sm:$0xf]
      %v502 = vld [vmem:[%s2 + $0x34] sm:$0xf]
      %v503 = vld [vmem:[%s2 + $0x38] sm:$0xf]
      %v504 = vld [vmem:[%s2 + $0x3c] sm:$0xf]
      %v505 = vld [vmem:[%s2 + $0x40] sm:$0xf]
      %v506 = vld [vmem:[%s2 + $0x44] sm:$0xf]
      %v507 = vld [vmem:[%s2 + $0x48] sm:$0xf]
      %v508 = vld [vmem:[%s2 + $0x4c] sm:$0xf]
      %v509 = vld [vmem:[%s2 + $0x50] sm:$0xf]
      %v510 = vld [vmem:[%s2 + $0x54] sm:$0xf]
      %v511 = vld [vmem:[%s2 + $0x58] sm:$0xf]
      %v512 = vld [vmem:[%s2 + $0x5c] sm:$0xf]
      %v513 = vld [vmem:[%s2 + $0x60] sm:$0xf]
      %v514 = vld [vmem:[%s2 + $0x64] sm:$0xf]
      %v515 = vld [vmem:[%s2 + $0x68] sm:$0xf]
      %v516 = vld [vmem:[%s2 + $0x6c] sm:$0xf]
      %v517 = vld [vmem:[%s2 + $0x70] sm:$0xf]
      %v518 = vld [vmem:[%s2 + $0x74] sm:$0xf]
      %v519 = vld [vmem:[%s2 + $0x78] sm:$0xf]
      %v520 = vld [vmem:[%s2 + $0x7c] sm:$0xf]
      %v521 = vld [vmem:[%s2 + $0x80] sm:$0xf]
      %v522 = vld [vmem:[%s2 + $0x84] sm:$0xf]
      %v523 = vld [vmem:[%s2 + $0x88] sm:$0xf]
      %v524 = vld [vmem:[%s2 + $0x8c] sm:$0xf]
      %v525 = vld [vmem:[%s2 + $0x90] sm:$0xf]
      %v526 = vld [vmem:[%s2 + $0x94] sm:$0xf]
      %v527 = vld [vmem:[%s2 + $0x98] sm:$0xf]
      %v528 = vld [vmem:[%s2 + $0x9c] sm:$0xf]
      %v529 = vld [vmem:[%s2 + $0xa0] sm:$0xf]
      %v530 = vld [vmem:[%s2 + $0xa4] sm:$0xf]
      %v531 = vld [vmem:[%s2 + $0xa8] sm:$0xf]
      %v532 = vld [vmem:[%s2 + $0xac] sm:$0xf]
      %v533 = vld [vmem:[%s2 + $0xb0] sm:$0xf]
      %v534 = vld [vmem:[%s2 + $0xb4] sm:$0xf]
      %v535 = vld [vmem:[%s2 + $0xb8] sm:$0xf]
      %v536 = vld [vmem:[%s2 + $0xbc] sm:$0xf]
      %v537 = vld [vmem:[%s2 + $0xc0] sm:$0xf]
      %v538 = vld [vmem:[%s2 + $0xc4] sm:$0xf]
      %v539 = vld [vmem:[%s2 + $0xc8] sm:$0xf]
      %v540 = vld [vmem:[%s2 + $0xcc] sm:$0xf]
      %v541 = vld [vmem:[%s2 + $0xd0] sm:$0xf]
      %v542 = vld [vmem:[%s2 + $0xd4] sm:$0xf]
      %v543 = vld [vmem:[%s2 + $0xd8] sm:$0xf]
      %v544 = vld [vmem:[%s2 + $0xdc] sm:$0xf]
      %v545 = vld [vmem:[%s2 + $0xe0] sm:$0xf]
      %v546 = vld [vmem:[%s2 + $0xe4] sm:$0xf]
      %v547 = vld [vmem:[%s2 + $0xe8] sm:$0xf]
      %v548 = vld [vmem:[%s2 + $0xec] sm:$0xf]
      %v549 = vld [vmem:[%s2 + $0xf0] sm:$0xf]
      %v550 = vld [vmem:[%s2 + $0xf4] sm:$0xf]
      %v551 = vld [vmem:[%s2 + $0xf8] sm:$0xf]
      %v552 = vld [vmem:[%s2 + $0xfc] sm:$0xf]
      %v553 = vld [vmem:[%s2 + $0x100] sm:$0xf]
      %v554 = vld [vmem:[%s2 + $0x104] sm:$0xf]
      %v555 = vld [vmem:[%s2 + $0x108] sm:$0xf]
      %v556 = vld [vmem:[%s2 + $0x10c] sm:$0xf]
      %v557 = vld [vmem:[%s2 + $0x110] sm:$0xf]
      %v558 = vld [vmem:[%s2 + $0x114] sm:$0xf]
      %v559 = vld [vmem:[%s2 + $0x118] sm:$0xf]
      %v560 = vld [vmem:[%s2 + $0x11c] sm:$0xf]
      %v561 = vld [vmem:[%s2 + $0x120] sm:$0xf]
      %v562 = vld [vmem:[%s2 + $0x124] sm:$0xf]
      %v563 = vld [vmem:[%s2 + $0x128] sm:$0xf]
      %v564 = vld [vmem:[%s2 + $0x12c] sm:$0xf]
      %v565 = vld [vmem:[%s2 + $0x130] sm:$0xf]
      %v566 = vld [vmem:[%s2 + $0x134] sm:$0xf]
      %v567 = vld [vmem:[%s2 + $0x138] sm:$0xf]
      %v568 = vld [vmem:[%s2 + $0x13c] sm:$0xf]
      %v569 = vld [vmem:[%s2 + $0x140] sm:$0xf]
      %v570 = vld [vmem:[%s2 + $0x144] sm:$0xf]
      %v571 = vld [vmem:[%s2 + $0x148] sm:$0xf]
      %v572 = vld [vmem:[%s2 + $0x14c] sm:$0xf]
      %v573 = vld [vmem:[%s2 + $0x150] sm:$0xf]
      %v574 = vld [vmem:[%s2 + $0x154] sm:$0xf]
      %v575 = vld [vmem:[%s2 + $0x158] sm:$0xf]
      %v576 = vld [vmem:[%s2 + $0x15c] sm:$0xf]
      %v577 = vld [vmem:[%s2 + $0x160] sm:$0xf]
      %v578 = vld [vmem:[%s2 + $0x164] sm:$0xf]
      %v579 = vld [vmem:[%s2 + $0x168] sm:$0xf]
      %v580 = vld [vmem:[%s2 + $0x16c] sm:$0xf]
      %v581 = vld [vmem:[%s2 + $0x170] sm:$0xf]
      %v582 = vld [vmem:[%s2 + $0x174] sm:$0xf]
      %v583 = vld [vmem:[%s2 + $0x178] sm:$0xf]
      %v584 = vld [vmem:[%s2 + $0x17c] sm:$0xf]
      %v585 = vld [vmem:[%s2 + $0x180] sm:$0xf]
      %v586 = vld [vmem:[%s2 + $0x184] sm:$0xf]
      %v587 = vld [vmem:[%s2 + $0x188] sm:$0xf]
      %v588 = vld [vmem:[%s2 + $0x18c] sm:$0xf]
      %v589 = vld [vmem:[%s2 + $0x190] sm:$0xf]
      %v590 = vld [vmem:[%s2 + $0x194] sm:$0xf]
      %v591 = vld [vmem:[%s2 + $0x198] sm:$0xf]
      %v592 = vld [vmem:[%s2 + $0x19c] sm:$0xf]
      %v593 = vld [vmem:[%s2 + $0x1a0] sm:$0xf]
      %v594 = vld [vmem:[%s2 + $0x1a4] sm:$0xf]
      %v595 = vld [vmem:[%s2 + $0x1a8] sm:$0xf]
      %v596 = vld [vmem:[%s2 + $0x1ac] sm:$0xf]
      %v597 = vld [vmem:[%s2 + $0x1b0] sm:$0xf]
      %v598 = vld [vmem:[%s2 + $0x1b4] sm:$0xf]
      %v599 = vld [vmem:[%s2 + $0x1b8] sm:$0xf]
      %v600 = vld [vmem:[%s2 + $0x1bc] sm:$0xf]
      %v601 = vld [vmem:[%s2 + $0x1c0] sm:$0xf]
      %v602 = vld [vmem:[%s2 + $0x1c4] sm:$0xf]
      %v603 = vld [vmem:[%s2 + $0x1c8] sm:$0xf]
      %v604 = vld [vmem:[%s2 + $0x1cc] sm:$0xf]
      %v605 = vld [vmem:[%s2 + $0x1d0] sm:$0xf]
      %v606 = vld [vmem:[%s2 + $0x1d4] sm:$0xf]
      %v607 = vld [vmem:[%s2 + $0x1d8] sm:$0xf]
      %v608 = vld [vmem:[%s2 + $0x1dc] sm:$0xf]
      %v609 = vld [vmem:[%s2 + $0x1e0] sm:$0xf]
      %v610 = vld [vmem:[%s2 + $0x1e4] sm:$0xf]
      %v611 = vld [vmem:[%s2 + $0x1e8] sm:$0xf]
      %v612 = vld [vmem:[%s2 + $0x1ec] sm:$0xf]
      %v613 = vld [vmem:[%s2 + $0x1f0] sm:$0xf]
      %v614 = vld [vmem:[%s2 + $0x1f4] sm:$0xf]
      %v615 = vld [vmem:[%s2 + $0x1f8] sm:$0xf]
      %v616 = vld [vmem:[%s2 + $0x1fc] sm:$0xf]
      %v617 = vld [vmem:[%s2 + $0x200] sm:$0xf]
      %v618 = vld [vmem:[%s2 + $0x204] sm:$0xf]
      %v619 = vld [vmem:[%s2 + $0x208] sm:$0xf]
      %v620 = vld [vmem:[%s2 + $0x20c] sm:$0xf]
      %v621 = vld [vmem:[%s2 + $0x210] sm:$0xf]
      %v622 = vld [vmem:[%s2 + $0x214] sm:$0xf]
      %v623 = vld [vmem:[%s2 + $0x218] sm:$0xf]
      %v624 = vld [vmem:[%s2 + $0x21c] sm:$0xf]
      %v625 = vld [vmem:[%s2 + $0x220] sm:$0xf]
      %v626 = vld [vmem:[%s2 + $0x224] sm:$0xf]
      %v627 = vld [vmem:[%s2 + $0x228] sm:$0xf]
      %v628 = vld [vmem:[%s2 + $0x22c] sm:$0xf]
      %v629 = vld [vmem:[%s2 + $0x230] sm:$0xf]
      %v630 = vld [vmem:[%s2 + $0x234] sm:$0xf]
      %v631 = vld [vmem:[%s2 + $0x238] sm:$0xf]
      %v632 = vld [vmem:[%s2 + $0x23c] sm:$0xf]
      %v633 = vld [vmem:[%s3] sm:$0x1]
      %v635 = vlaneseq
      %v636 = vshrl.u32 %v635, 7
      %v637 = vsub.s32 0, %v636
      %v638 = vrot.slane %v633, %v637
      %v640 = vpack.c.b16 %v357, %v355
      %v641 = vpack.c.b16 %v471, %v469
      %v642 = vpack.c.b16 %v472, %v470
      %v643 = vpack.c.b16 %v359, %v357
      %v644 = vpack.c.b16 %v473, %v471
      %v645 = vpack.c.b16 %v474, %v472
      %v646 = vpack.c.b16 %v361, %v359
      %v647 = vpack.c.b16 %v475, %v473
      %v648 = vpack.c.b16 %v476, %v474
      %v649 = vpack.c.b16 %v363, %v361
      %v650 = vpack.c.b16 %v477, %v475
      %v651 = vpack.c.b16 %v478, %v476
      %v652 = vpack.c.b16 %v365, %v363
      %v653 = vpack.c.b16 %v479, %v477
      %v654 = vpack.c.b16 %v480, %v478
      %v655 = vpack.c.b16 %v367, %v365
      %v656 = vpack.c.b16 %v481, %v479
      %v657 = vpack.c.b16 %v482, %v480
      %v658 = vpack.c.b16 %v369, %v367
      %v659 = vpack.c.b16 %v483, %v481
      %v660 = vpack.c.b16 %v484, %v482
      %v661 = vpack.c.b16 %v445, %v369
      %v662 = vpack.c.b16 %v485, %v483
      %v663 = vpack.c.b16 %v486, %v484
      %v664 = vpack.c.b16 %v458, %v445
      %v665 = vpack.c.b16 %v487, %v485
      %v666 = vpack.c.b16 %v488, %v486
      %v838 = vunpack.c.l.b16 %v489
      %v839 = vunpack.c.l.b16 %v490
      %v840 = vunpack.c.l.b16 %v491
      %v841 = vunpack.c.l.b16 %v492
      %v842 = vunpack.c.l.b16 %v493
      %v843 = vunpack.c.l.b16 %v494
      %v844 = vunpack.c.l.b16 %v495
      %v845 = vunpack.c.l.b16 %v496
      %v846 = vunpack.c.l.b16 %v497
      %v847 = vunpack.c.l.b16 %v498
      %v848 = vunpack.c.l.b16 %v499
      %v849 = vunpack.c.l.b16 %v500
      %v850 = vunpack.c.l.b16 %v501
      %v851 = vunpack.c.l.b16 %v502
      %v852 = vunpack.c.l.b16 %v503
      %v853 = vunpack.c.l.b16 %v504
      %v854 = vunpack.c.l.b16 %v505
      %v855 = vunpack.c.l.b16 %v506
      %v856 = vunpack.c.l.b16 %v507
      %v857 = vunpack.c.l.b16 %v508
      %v858 = vunpack.c.l.b16 %v509
      %v859 = vunpack.c.l.b16 %v510
      %v860 = vunpack.c.l.b16 %v511
      %v861 = vunpack.c.l.b16 %v512
      %v862 = vunpack.c.l.b16 %v513
      %v863 = vunpack.c.l.b16 %v514
      %v864 = vunpack.c.l.b16 %v515
      %v865 = vunpack.c.l.b16 %v516
      %v866 = vunpack.c.l.b16 %v517
      %v867 = vunpack.c.l.b16 %v518
      %v868 = vunpack.c.l.b16 %v519
      %v869 = vunpack.c.l.b16 %v520
      %v870 = vunpack.c.l.b16 %v521
      %v871 = vunpack.c.l.b16 %v522
      %v872 = vunpack.c.l.b16 %v523
      %v873 = vunpack.c.l.b16 %v524
      %v874 = vunpack.c.l.b16 %v525
      %v875 = vunpack.c.l.b16 %v526
      %v876 = vunpack.c.l.b16 %v527
      %v877 = vunpack.c.l.b16 %v528
      %v878 = vunpack.c.l.b16 %v529
      %v879 = vunpack.c.l.b16 %v530
      %v880 = vunpack.c.l.b16 %v531
      %v881 = vunpack.c.l.b16 %v532
      %v882 = vunpack.c.l.b16 %v533
      %v883 = vunpack.c.l.b16 %v534
      %v884 = vunpack.c.l.b16 %v535
      %v885 = vunpack.c.l.b16 %v536
      %v886 = vunpack.c.l.b16 %v537
      %v887 = vunpack.c.l.b16 %v538
      %v888 = vunpack.c.l.b16 %v539
      %v889 = vunpack.c.l.b16 %v540
      %v890 = vunpack.c.l.b16 %v541
      %v891 = vunpack.c.l.b16 %v542
      %v892 = vunpack.c.l.b16 %v543
      %v893 = vunpack.c.l.b16 %v544
      %v894 = vunpack.c.l.b16 %v545
      %v895 = vunpack.c.l.b16 %v546
      %v896 = vunpack.c.l.b16 %v547
      %v897 = vunpack.c.l.b16 %v548
      %v898 = vunpack.c.l.b16 %v549
      %v899 = vunpack.c.l.b16 %v550
      %v900 = vunpack.c.l.b16 %v551
      %v901 = vunpack.c.l.b16 %v552
      %v902 = vunpack.c.l.b16 %v553
      %v903 = vunpack.c.l.b16 %v554
      %v904 = vunpack.c.l.b16 %v555
      %v905 = vunpack.c.l.b16 %v556
      %v906 = vunpack.c.l.b16 %v557
      %v907 = vunpack.c.l.b16 %v558
      %v908 = vunpack.c.l.b16 %v559
      %v909 = vunpack.c.l.b16 %v560
      %v910 = vunpack.c.l.b16 %v561
      %v911 = vunpack.c.l.b16 %v562
      %v912 = vunpack.c.l.b16 %v563
      %v913 = vunpack.c.l.b16 %v564
      %v914 = vunpack.c.l.b16 %v565
      %v915 = vunpack.c.l.b16 %v566
      %v916 = vunpack.c.l.b16 %v567
      %v917 = vunpack.c.l.b16 %v568
      %v918 = vunpack.c.l.b16 %v569
      %v919 = vunpack.c.l.b16 %v570
      %v920 = vunpack.c.l.b16 %v571
      %v921 = vunpack.c.l.b16 %v572
      %v922 = vunpack.c.l.b16 %v573
      %v923 = vunpack.c.l.b16 %v574
      %v924 = vunpack.c.l.b16 %v575
      %v925 = vunpack.c.l.b16 %v576
      %v926 = vunpack.c.l.b16 %v577
      %v927 = vunpack.c.l.b16 %v578
      %v928 = vunpack.c.l.b16 %v579
      %v929 = vunpack.c.l.b16 %v580
      %v930 = vunpack.c.l.b16 %v581
      %v931 = vunpack.c.l.b16 %v582
      %v932 = vunpack.c.l.b16 %v583
      %v933 = vunpack.c.l.b16 %v584
      %v934 = vunpack.c.l.b16 %v585
      %v935 = vunpack.c.l.b16 %v586
      %v936 = vunpack.c.l.b16 %v587
      %v937 = vunpack.c.l.b16 %v588
      %v938 = vunpack.c.l.b16 %v589
      %v939 = vunpack.c.l.b16 %v590
      %v940 = vunpack.c.l.b16 %v591
      %v941 = vunpack.c.l.b16 %v592
      %v942 = vunpack.c.l.b16 %v593
      %v943 = vunpack.c.l.b16 %v594
      %v944 = vunpack.c.l.b16 %v595
      %v945 = vunpack.c.l.b16 %v596
      %v946 = vunpack.c.l.b16 %v597
      %v947 = vunpack.c.l.b16 %v598
      %v948 = vunpack.c.l.b16 %v599
      %v949 = vunpack.c.l.b16 %v600
      %v950 = vunpack.c.l.b16 %v601
      %v951 = vunpack.c.l.b16 %v602
      %v952 = vunpack.c.l.b16 %v603
      %v953 = vunpack.c.l.b16 %v604
      %v954 = vunpack.c.l.b16 %v605
      %v955 = vunpack.c.l.b16 %v606
      %v956 = vunpack.c.l.b16 %v607
      %v957 = vunpack.c.l.b16 %v608
      %v958 = vunpack.c.l.b16 %v609
      %v959 = vunpack.c.l.b16 %v610
      %v960 = vunpack.c.l.b16 %v611
      %v961 = vunpack.c.l.b16 %v612
      %v962 = vunpack.c.l.b16 %v613
      %v963 = vunpack.c.l.b16 %v614
      %v964 = vunpack.c.l.b16 %v615
      %v965 = vunpack.c.l.b16 %v616
      %v966 = vunpack.c.l.b16 %v617
      %v967 = vunpack.c.l.b16 %v618
      %v968 = vunpack.c.l.b16 %v619
      %v969 = vunpack.c.l.b16 %v620
      %v970 = vunpack.c.l.b16 %v621
      %v971 = vunpack.c.l.b16 %v622
      %v972 = vunpack.c.l.b16 %v623
      %v973 = vunpack.c.l.b16 %v624
      %v974 = vunpack.c.l.b16 %v625
      %v975 = vunpack.c.l.b16 %v626
      %v976 = vunpack.c.l.b16 %v627
      %v977 = vunpack.c.l.b16 %v628
      %v978 = vunpack.c.l.b16 %v629
      %v979 = vunpack.c.l.b16 %v630
      %v980 = vunpack.c.l.b16 %v631
      %v981 = vunpack.c.l.b16 %v632
      %v982 = vpack.c.b16 %v839, %v838
      %v983 = vpack.c.b16 %v841, %v840
      %v984 = vpack.c.b16 %v843, %v842
      %v985 = vpack.c.b16 %v845, %v844
      %v986 = vpack.c.b16 %v847, %v846
      %v987 = vpack.c.b16 %v849, %v848
      %v988 = vpack.c.b16 %v851, %v850
      %v989 = vpack.c.b16 %v853, %v852
      %v990 = vpack.c.b16 %v855, %v854
      %v991 = vpack.c.b16 %v857, %v856
      %v992 = vpack.c.b16 %v859, %v858
      %v993 = vpack.c.b16 %v861, %v860
      %v994 = vpack.c.b16 %v863, %v862
      %v995 = vpack.c.b16 %v865, %v864
      %v996 = vpack.c.b16 %v867, %v866
      %v997 = vpack.c.b16 %v869, %v868
      %v998 = vpack.c.b16 %v871, %v870
      %v999 = vpack.c.b16 %v873, %v872
      %v1000 = vpack.c.b16 %v875, %v874
      %v1001 = vpack.c.b16 %v877, %v876
      %v1002 = vpack.c.b16 %v879, %v878
      %v1003 = vpack.c.b16 %v881, %v880
      %v1004 = vpack.c.b16 %v883, %v882
      %v1005 = vpack.c.b16 %v885, %v884
      %v1006 = vpack.c.b16 %v887, %v886
      %v1007 = vpack.c.b16 %v889, %v888
      %v1008 = vpack.c.b16 %v891, %v890
      %v1009 = vpack.c.b16 %v893, %v892
      %v1010 = vpack.c.b16 %v895, %v894
      %v1011 = vpack.c.b16 %v897, %v896
      %v1012 = vpack.c.b16 %v899, %v898
      %v1013 = vpack.c.b16 %v901, %v900
      %v1014 = vpack.c.b16 %v903, %v902
      %v1015 = vpack.c.b16 %v905, %v904
      %v1016 = vpack.c.b16 %v907, %v906
      %v1017 = vpack.c.b16 %v909, %v908
      %v1018 = vpack.c.b16 %v911, %v910
      %v1019 = vpack.c.b16 %v913, %v912
      %v1020 = vpack.c.b16 %v915, %v914
      %v1021 = vpack.c.b16 %v917, %v916
      %v1022 = vpack.c.b16 %v919, %v918
      %v1023 = vpack.c.b16 %v921, %v920
      %v1024 = vpack.c.b16 %v923, %v922
      %v1025 = vpack.c.b16 %v925, %v924
      %v1026 = vpack.c.b16 %v927, %v926
      %v1027 = vpack.c.b16 %v929, %v928
      %v1028 = vpack.c.b16 %v931, %v930
      %v1029 = vpack.c.b16 %v933, %v932
      %v1030 = vpack.c.b16 %v935, %v934
      %v1031 = vpack.c.b16 %v937, %v936
      %v1032 = vpack.c.b16 %v939, %v938
      %v1033 = vpack.c.b16 %v941, %v940
      %v1034 = vpack.c.b16 %v943, %v942
      %v1035 = vpack.c.b16 %v945, %v944
      %v1036 = vpack.c.b16 %v947, %v946
      %v1037 = vpack.c.b16 %v949, %v948
      %v1038 = vpack.c.b16 %v951, %v950
      %v1039 = vpack.c.b16 %v953, %v952
      %v1040 = vpack.c.b16 %v955, %v954
      %v1041 = vpack.c.b16 %v957, %v956
      %v1042 = vpack.c.b16 %v959, %v958
      %v1043 = vpack.c.b16 %v961, %v960
      %v1044 = vpack.c.b16 %v963, %v962
      %v1045 = vpack.c.b16 %v965, %v964
      %v1046 = vpack.c.b16 %v967, %v966
      %v1047 = vpack.c.b16 %v969, %v968
      %v1048 = vpack.c.b16 %v971, %v970
      %v1049 = vpack.c.b16 %v973, %v972
      %v1050 = vpack.c.b16 %v975, %v974
      %v1051 = vpack.c.b16 %v977, %v976
      %v1052 = vpack.c.b16 %v979, %v978
      %v1053 = vpack.c.b16 %v981, %v980
      %1126 = vmatprep.subr.bf16.mxu0 0
      %1127 = vmatpush1.bf16.msra.mxu0 %v989
      %1128 = vmatprep.subr.bf16.mxu0 0
      %1129 = vmatpush1.bf16.msra.mxu0 %v988
      %1130 = vmatprep.subr.bf16.mxu0 0
      %1131 = vmatpush1.bf16.msra.mxu0 %v987
      %1132 = vmatprep.subr.bf16.mxu0 0
      %1133 = vmatpush1.bf16.msra.mxu0 %v986
      %1134 = vmatprep.subr.bf16.mxu0 0
      %1135 = vmatpush1.bf16.msra.mxu0 %v985
      %1136 = vmatprep.subr.bf16.mxu0 0
      %1137 = vmatpush1.bf16.msra.mxu0 %v984
      %1138 = vmatprep.subr.bf16.mxu0 0
      %1139 = vmatpush1.bf16.msra.mxu0 %v983
      %1140 = vmatprep.subr.bf16.mxu0 0
      %1141 = vmatpush1.bf16.msra.mxu0 %v982
      %1142 = vmatprep.subr.bf16.mxu0 0
      %1143 = vmatpush2.bf16.msra.mxu0 %v997
      %1144 = vmatprep.subr.bf16.mxu0 0
      %1145 = vmatpush2.bf16.msra.mxu0 %v996
      %1146 = vmatprep.subr.bf16.mxu0 0
      %1147 = vmatpush2.bf16.msra.mxu0 %v995
      %1148 = vmatprep.subr.bf16.mxu0 0
      %1149 = vmatpush2.bf16.msra.mxu0 %v994
      %1150 = vmatprep.subr.bf16.mxu0 0
      %1151 = vmatpush2.bf16.msra.mxu0 %v993
      %1152 = vmatprep.subr.bf16.mxu0 0
      %1153 = vmatpush2.bf16.msra.mxu0 %v992
      %1154 = vmatprep.subr.bf16.mxu0 0
      %1155 = vmatpush2.bf16.msra.mxu0 %v991
      %1156 = vmatprep.subr.bf16.mxu0 0
      %1157 = vmatpush2.bf16.msra.mxu0 %v990
      %1158 = vmatprep.mubr.bf16.mxu0 %v641
      %1159 = vmatmul.mubr.bf16.gmra.mxu0 %v640
      %v1160 = vpop.f32.mrf.mxu0
      %v1161 = vadd.f32 %v638, %v1160
      %v1162 = vpop.f32.mrf.mxu0
      %v1163 = vpop.f32.mrf.mxu0
      %v1164 = vadd.f32 %v638, %v1163
      %v1165 = vpop.f32.mrf.mxu0
      %1166 = vmatprep.mubr.bf16.mxu0 %v647
      %1167 = vmatmul.mubr.bf16.gmra.mxu0 %v646
      %v1168 = vpop.f32.mrf.mxu0
      %v1169 = vadd.f32 %v638, %v1168
      %v1170 = vpop.f32.mrf.mxu0
      %v1171 = vpop.f32.mrf.mxu0
      %v1172 = vadd.f32 %v638, %v1171
      %v1173 = vpop.f32.mrf.mxu0
      %1174 = vmatprep.mubr.bf16.mxu0 %v653
      %1175 = vmatmul.mubr.bf16.gmra.mxu0 %v652
      %v1176 = vpop.f32.mrf.mxu0
      %v1177 = vadd.f32 %v638, %v1176
      %v1178 = vpop.f32.mrf.mxu0
      %v1179 = vpop.f32.mrf.mxu0
      %v1180 = vadd.f32 %v638, %v1179
      %v1181 = vpop.f32.mrf.mxu0
      %1182 = vmatprep.mubr.bf16.mxu0 %v659
      %1183 = vmatmul.mubr.bf16.gmra.mxu0 %v658
      %v1184 = vpop.f32.mrf.mxu0
      %v1185 = vadd.f32 %v638, %v1184
      %v1186 = vpop.f32.mrf.mxu0
      %v1187 = vpop.f32.mrf.mxu0
      %v1188 = vadd.f32 %v638, %v1187
      %v1189 = vpop.f32.mrf.mxu0
      %1190 = vdwg.mxu0
      %1191 = vmatprep.subr.bf16.mxu0 0
      %1192 = vmatpush1.bf16.msra.mxu0 %v1005
      %1193 = vmatprep.subr.bf16.mxu0 0
      %1194 = vmatpush1.bf16.msra.mxu0 %v1004
      %1195 = vmatprep.subr.bf16.mxu0 0
      %1196 = vmatpush1.bf16.msra.mxu0 %v1003
      %1197 = vmatprep.subr.bf16.mxu0 0
      %1198 = vmatpush1.bf16.msra.mxu0 %v1002
      %1199 = vmatprep.subr.bf16.mxu0 0
      %1200 = vmatpush1.bf16.msra.mxu0 %v1001
      %1201 = vmatprep.subr.bf16.mxu0 0
      %1202 = vmatpush1.bf16.msra.mxu0 %v1000
      %1203 = vmatprep.subr.bf16.mxu0 0
      %1204 = vmatpush1.bf16.msra.mxu0 %v999
      %1205 = vmatprep.subr.bf16.mxu0 0
      %1206 = vmatpush1.bf16.msra.mxu0 %v998
      %1207 = vmatprep.subr.bf16.mxu0 0
      %1208 = vmatpush2.bf16.msra.mxu0 %v1013
      %1209 = vmatprep.subr.bf16.mxu0 0
      %1210 = vmatpush2.bf16.msra.mxu0 %v1012
      %1211 = vmatprep.subr.bf16.mxu0 0
      %1212 = vmatpush2.bf16.msra.mxu0 %v1011
      %1213 = vmatprep.subr.bf16.mxu0 0
      %1214 = vmatpush2.bf16.msra.mxu0 %v1010
      %1215 = vmatprep.subr.bf16.mxu0 0
      %1216 = vmatpush2.bf16.msra.mxu0 %v1009
      %1217 = vmatprep.subr.bf16.mxu0 0
      %1218 = vmatpush2.bf16.msra.mxu0 %v1008
      %1219 = vmatprep.subr.bf16.mxu0 0
      %1220 = vmatpush2.bf16.msra.mxu0 %v1007
      %1221 = vmatprep.subr.bf16.mxu0 0
      %1222 = vmatpush2.bf16.msra.mxu0 %v1006
      %1223 = vmatprep.mubr.bf16.mxu0 %v643
      %1224 = vmatmul.mubr.bf16.gmra.mxu0 %v642
      %v1225 = vpop.f32.mrf.mxu0
      %v1226 = vadd.f32 %v1161, %v1225
      %v1227 = vpop.f32.mrf.mxu0
      %v1228 = vpop.f32.mrf.mxu0
      %v1229 = vadd.f32 %v1164, %v1228
      %v1230 = vpop.f32.mrf.mxu0
      %1231 = vmatprep.mubr.bf16.mxu0 %v649
      %1232 = vmatmul.mubr.bf16.gmra.mxu0 %v648
      %v1233 = vpop.f32.mrf.mxu0
      %v1234 = vadd.f32 %v1169, %v1233
      %v1235 = vpop.f32.mrf.mxu0
      %v1236 = vpop.f32.mrf.mxu0
      %v1237 = vadd.f32 %v1172, %v1236
      %v1238 = vpop.f32.mrf.mxu0
      %1239 = vmatprep.mubr.bf16.mxu0 %v655
      %1240 = vmatmul.mubr.bf16.gmra.mxu0 %v654
      %v1241 = vpop.f32.mrf.mxu0
      %v1242 = vadd.f32 %v1177, %v1241
      %v1243 = vpop.f32.mrf.mxu0
      %v1244 = vpop.f32.mrf.mxu0
      %v1245 = vadd.f32 %v1180, %v1244
      %v1246 = vpop.f32.mrf.mxu0
      %1247 = vmatprep.mubr.bf16.mxu0 %v661
      %1248 = vmatmul.mubr.bf16.gmra.mxu0 %v660
      %v1249 = vpop.f32.mrf.mxu0
      %v1250 = vadd.f32 %v1185, %v1249
      %v1251 = vpop.f32.mrf.mxu0
      %v1252 = vpop.f32.mrf.mxu0
      %v1253 = vadd.f32 %v1188, %v1252
      %v1254 = vpop.f32.mrf.mxu0
      %1255 = vdwg.mxu0
      %1256 = vmatprep.subr.bf16.mxu0 0
      %1257 = vmatpush1.bf16.msra.mxu0 %v1021
      %1258 = vmatprep.subr.bf16.mxu0 0
      %1259 = vmatpush1.bf16.msra.mxu0 %v1020
      %1260 = vmatprep.subr.bf16.mxu0 0
      %1261 = vmatpush1.bf16.msra.mxu0 %v1019
      %1262 = vmatprep.subr.bf16.mxu0 0
      %1263 = vmatpush1.bf16.msra.mxu0 %v1018
      %1264 = vmatprep.subr.bf16.mxu0 0
      %1265 = vmatpush1.bf16.msra.mxu0 %v1017
      %1266 = vmatprep.subr.bf16.mxu0 0
      %1267 = vmatpush1.bf16.msra.mxu0 %v1016
      %1268 = vmatprep.subr.bf16.mxu0 0
      %1269 = vmatpush1.bf16.msra.mxu0 %v1015
      %1270 = vmatprep.subr.bf16.mxu0 0
      %1271 = vmatpush1.bf16.msra.mxu0 %v1014
      %1272 = vmatprep.subr.bf16.mxu0 0
      %1273 = vmatpush2.bf16.msra.mxu0 %v1029
      %1274 = vmatprep.subr.bf16.mxu0 0
      %1275 = vmatpush2.bf16.msra.mxu0 %v1028
      %1276 = vmatprep.subr.bf16.mxu0 0
      %1277 = vmatpush2.bf16.msra.mxu0 %v1027
      %1278 = vmatprep.subr.bf16.mxu0 0
      %1279 = vmatpush2.bf16.msra.mxu0 %v1026
      %1280 = vmatprep.subr.bf16.mxu0 0
      %1281 = vmatpush2.bf16.msra.mxu0 %v1025
      %1282 = vmatprep.subr.bf16.mxu0 0
      %1283 = vmatpush2.bf16.msra.mxu0 %v1024
      %1284 = vmatprep.subr.bf16.mxu0 0
      %1285 = vmatpush2.bf16.msra.mxu0 %v1023
      %1286 = vmatprep.subr.bf16.mxu0 0
      %1287 = vmatpush2.bf16.msra.mxu0 %v1022
      %1288 = vmatprep.mubr.bf16.mxu0 %v645
      %1289 = vmatmul.mubr.bf16.gmra.mxu0 %v644
      %v1290 = vpop.f32.mrf.mxu0
      %v1291 = vadd.f32 %v1226, %v1290
      %v1292 = vpop.f32.mrf.mxu0
      %v1293 = vpop.f32.mrf.mxu0
      %v1294 = vadd.f32 %v1229, %v1293
      %v1295 = vpop.f32.mrf.mxu0
      %1296 = vmatprep.mubr.bf16.mxu0 %v651
      %1297 = vmatmul.mubr.bf16.gmra.mxu0 %v650
      %v1298 = vpop.f32.mrf.mxu0
      %v1299 = vadd.f32 %v1234, %v1298
      %v1300 = vpop.f32.mrf.mxu0
      %v1301 = vpop.f32.mrf.mxu0
      %v1302 = vadd.f32 %v1237, %v1301
      %v1303 = vpop.f32.mrf.mxu0
      %1304 = vmatprep.mubr.bf16.mxu0 %v657
      %1305 = vmatmul.mubr.bf16.gmra.mxu0 %v656
      %v1306 = vpop.f32.mrf.mxu0
      %v1307 = vadd.f32 %v1242, %v1306
      %v1308 = vpop.f32.mrf.mxu0
      %v1309 = vpop.f32.mrf.mxu0
      %v1310 = vadd.f32 %v1245, %v1309
      %v1311 = vpop.f32.mrf.mxu0
      %1312 = vmatprep.mubr.bf16.mxu0 %v663
      %1313 = vmatmul.mubr.bf16.gmra.mxu0 %v662
      %v1314 = vpop.f32.mrf.mxu0
      %v1315 = vadd.f32 %v1250, %v1314
      %v1316 = vpop.f32.mrf.mxu0
      %v1317 = vpop.f32.mrf.mxu0
      %v1318 = vadd.f32 %v1253, %v1317
      %v1319 = vpop.f32.mrf.mxu0
      %1320 = vdwg.mxu0
      %1321 = vmatprep.subr.bf16.mxu0 0
      %1322 = vmatpush1.bf16.msra.mxu0 %v1037
      %1323 = vmatprep.subr.bf16.mxu0 0
      %1324 = vmatpush1.bf16.msra.mxu0 %v1036
      %1325 = vmatprep.subr.bf16.mxu0 0
      %1326 = vmatpush1.bf16.msra.mxu0 %v1035
      %1327 = vmatprep.subr.bf16.mxu0 0
      %1328 = vmatpush1.bf16.msra.mxu0 %v1034
      %1329 = vmatprep.subr.bf16.mxu0 0
      %1330 = vmatpush1.bf16.msra.mxu0 %v1033
      %1331 = vmatprep.subr.bf16.mxu0 0
      %1332 = vmatpush1.bf16.msra.mxu0 %v1032
      %1333 = vmatprep.subr.bf16.mxu0 0
      %1334 = vmatpush1.bf16.msra.mxu0 %v1031
      %1335 = vmatprep.subr.bf16.mxu0 0
      %1336 = vmatpush1.bf16.msra.mxu0 %v1030
      %1337 = vmatprep.subr.bf16.mxu0 0
      %1338 = vmatpush2.bf16.msra.mxu0 %v1045
      %1339 = vmatprep.subr.bf16.mxu0 0
      %1340 = vmatpush2.bf16.msra.mxu0 %v1044
      %1341 = vmatprep.subr.bf16.mxu0 0
      %1342 = vmatpush2.bf16.msra.mxu0 %v1043
      %1343 = vmatprep.subr.bf16.mxu0 0
      %1344 = vmatpush2.bf16.msra.mxu0 %v1042
      %1345 = vmatprep.subr.bf16.mxu0 0
      %1346 = vmatpush2.bf16.msra.mxu0 %v1041
      %1347 = vmatprep.subr.bf16.mxu0 0
      %1348 = vmatpush2.bf16.msra.mxu0 %v1040
      %1349 = vmatprep.subr.bf16.mxu0 0
      %1350 = vmatpush2.bf16.msra.mxu0 %v1039
      %1351 = vmatprep.subr.bf16.mxu0 0
      %1352 = vmatpush2.bf16.msra.mxu0 %v1038
      %1353 = vmatprep.mubr.bf16.mxu0 %v647
      %1354 = vmatmul.mubr.bf16.gmra.mxu0 %v646
      %v1355 = vpop.f32.mrf.mxu0
      %v1356 = vadd.f32 %v1291, %v1355
      %v1357 = vpop.f32.mrf.mxu0
      %v1358 = vpop.f32.mrf.mxu0
      %v1359 = vadd.f32 %v1294, %v1358
      %v1360 = vpop.f32.mrf.mxu0
      %1361 = vmatprep.mubr.bf16.mxu0 %v653
      %1362 = vmatmul.mubr.bf16.gmra.mxu0 %v652
      %v1363 = vpop.f32.mrf.mxu0
      %v1364 = vadd.f32 %v1299, %v1363
      %v1365 = vpop.f32.mrf.mxu0
      %v1366 = vpop.f32.mrf.mxu0
      %v1367 = vadd.f32 %v1302, %v1366
      %v1368 = vpop.f32.mrf.mxu0
      %1369 = vmatprep.mubr.bf16.mxu0 %v659
      %1370 = vmatmul.mubr.bf16.gmra.mxu0 %v658
      %v1371 = vpop.f32.mrf.mxu0
      %v1372 = vadd.f32 %v1307, %v1371
      %v1373 = vpop.f32.mrf.mxu0
      %v1374 = vpop.f32.mrf.mxu0
      %v1375 = vadd.f32 %v1310, %v1374
      %v1376 = vpop.f32.mrf.mxu0
      %1377 = vmatprep.mubr.bf16.mxu0 %v665
      %1378 = vmatmul.mubr.bf16.gmra.mxu0 %v664
      %v1379 = vpop.f32.mrf.mxu0
      %v1380 = vadd.f32 %v1315, %v1379
      %v1381 = vpop.f32.mrf.mxu0
      %v1382 = vpop.f32.mrf.mxu0
      %v1383 = vadd.f32 %v1318, %v1382
      %v1384 = vpop.f32.mrf.mxu0
      %1385 = vdwg.mxu0
      %1386 = vmatprep.subr.bf16.mxu0 0
      %1387 = vmatpush1.bf16.msra.mxu0 %v1053
      %1388 = vmatprep.subr.bf16.mxu0 0
      %1389 = vmatpush1.bf16.msra.mxu0 %v1052
      %1390 = vmatprep.subr.bf16.mxu0 0
      %1391 = vmatpush1.bf16.msra.mxu0 %v1051
      %1392 = vmatprep.subr.bf16.mxu0 0
      %1393 = vmatpush1.bf16.msra.mxu0 %v1050
      %1394 = vmatprep.subr.bf16.mxu0 0
      %1395 = vmatpush1.bf16.msra.mxu0 %v1049
      %1396 = vmatprep.subr.bf16.mxu0 0
      %1397 = vmatpush1.bf16.msra.mxu0 %v1048
      %1398 = vmatprep.subr.bf16.mxu0 0
      %1399 = vmatpush1.bf16.msra.mxu0 %v1047
      %1400 = vmatprep.subr.bf16.mxu0 0
      %1401 = vmatpush1.bf16.msra.mxu0 %v1046
      %1402 = vmatprep.subr.bf16.mxu0 0
      %1403 = vmatpush2.bf16.msra.mxu0 0
      %1404 = vmatprep.subr.bf16.mxu0 0
      %1405 = vmatpush2.bf16.msra.mxu0 0
      %1406 = vmatprep.subr.bf16.mxu0 0
      %1407 = vmatpush2.bf16.msra.mxu0 0
      %1408 = vmatprep.subr.bf16.mxu0 0
      %1409 = vmatpush2.bf16.msra.mxu0 0
      %1410 = vmatprep.subr.bf16.mxu0 0
      %1411 = vmatpush2.bf16.msra.mxu0 0
      %1412 = vmatprep.subr.bf16.mxu0 0
      %1413 = vmatpush2.bf16.msra.mxu0 0
      %1414 = vmatprep.subr.bf16.mxu0 0
      %1415 = vmatpush2.bf16.msra.mxu0 0
      %1416 = vmatprep.subr.bf16.mxu0 0
      %1417 = vmatpush2.bf16.msra.mxu0 0
      %1418 = vmatprep.mubr.bf16.mxu0 0
      %1419 = vmatmul.mubr.bf16.gmra.mxu0 %v648
      %v1420 = vpop.f32.mrf.mxu0
      %v1421 = vadd.f32 %v1356, %v1420
      %v1422 = vpop.f32.mrf.mxu0
      %v1423 = vpop.f32.mrf.mxu0
      %v1424 = vadd.f32 %v1359, %v1423
      %v1425 = vpop.f32.mrf.mxu0
      %1426 = vmatprep.mubr.bf16.mxu0 0
      %1427 = vmatmul.mubr.bf16.gmra.mxu0 %v654
      %v1428 = vpop.f32.mrf.mxu0
      %v1429 = vadd.f32 %v1364, %v1428
      %v1430 = vpop.f32.mrf.mxu0
      %v1431 = vpop.f32.mrf.mxu0
      %v1432 = vadd.f32 %v1367, %v1431
      %v1433 = vpop.f32.mrf.mxu0
      %1434 = vmatprep.mubr.bf16.mxu0 0
      %1435 = vmatmul.mubr.bf16.gmra.mxu0 %v660
      %v1436 = vpop.f32.mrf.mxu0
      %v1437 = vadd.f32 %v1372, %v1436
      %v1438 = vpop.f32.mrf.mxu0
      %v1439 = vpop.f32.mrf.mxu0
      %v1440 = vadd.f32 %v1375, %v1439
      %v1441 = vpop.f32.mrf.mxu0
      %1442 = vmatprep.mubr.bf16.mxu0 0
      %1443 = vmatmul.mubr.bf16.gmra.mxu0 %v666
      %v1444 = vpop.f32.mrf.mxu0
      %v1445 = vadd.f32 %v1380, %v1444
      %v1446 = vpop.f32.mrf.mxu0
      %v1447 = vpop.f32.mrf.mxu0
      %v1448 = vadd.f32 %v1383, %v1447
      %v1449 = vpop.f32.mrf.mxu0
      %1450 = vdwg.mxu0
      %v1451 = vmax.f32 %v1421, 0.0
      %v1452 = vmax.f32 %v1424, 0.0
      %v1453 = vmax.f32 %v1429, 0.0
      %v1454 = vmax.f32 %v1432, 0.0
      %v1455 = vmax.f32 %v1437, 0.0
      %v1456 = vmax.f32 %v1440, 0.0
      %v1457 = vmax.f32 %v1445, 0.0
      %v1458 = vmax.f32 %v1448, 0.0
      %v1460 = vunpack.c.l.s4 1966171168
      %v1461 = vunpack.c.0.s8 %v1460
      %v1462 = vlaneseq
      %v1463 = vshrl.u32 %v1462, 7
      %v1464 = vsub.s32 %v1461, %v1463
      %v1465 = vrot.slane %v1451, %v1464
      %v1467 = vunpack.c.l.s4 1966171168
      %v1468 = vunpack.c.0.s8 %v1467
      %v1469 = vlaneseq
      %v1470 = vshrl.u32 %v1469, 7
      %v1471 = vsub.s32 %v1468, %v1470
      %v1472 = vrot.slane %v1452, %v1471
      %v1474 = vunpack.c.l.s4 1966171168
      %v1475 = vunpack.c.0.s8 %v1474
      %v1476 = vlaneseq
      %v1477 = vshrl.u32 %v1476, 7
      %v1478 = vsub.s32 %v1475, %v1477
      %v1479 = vrot.slane %v1453, %v1478
      %v1481 = vunpack.c.l.s4 1966171168
      %v1482 = vunpack.c.0.s8 %v1481
      %v1483 = vlaneseq
      %v1484 = vshrl.u32 %v1483, 7
      %v1485 = vsub.s32 %v1482, %v1484
      %v1486 = vrot.slane %v1454, %v1485
      %v1488 = vunpack.c.l.s4 1966171168
      %v1489 = vunpack.c.0.s8 %v1488
      %v1490 = vlaneseq
      %v1491 = vshrl.u32 %v1490, 7
      %v1492 = vsub.s32 %v1489, %v1491
      %v1493 = vrot.slane %v1455, %v1492
      %v1495 = vunpack.c.l.s4 1966171168
      %v1496 = vunpack.c.0.s8 %v1495
      %v1497 = vlaneseq
      %v1498 = vshrl.u32 %v1497, 7
      %v1499 = vsub.s32 %v1496, %v1498
      %v1500 = vrot.slane %v1456, %v1499
      %v1502 = vunpack.c.l.s4 1966171168
      %v1503 = vunpack.c.0.s8 %v1502
      %v1504 = vlaneseq
      %v1505 = vshrl.u32 %v1504, 7
      %v1506 = vsub.s32 %v1503, %v1505
      %v1507 = vrot.slane %v1457, %v1506
      %v1509 = vunpack.c.l.s4 1966171168
      %v1510 = vunpack.c.0.s8 %v1509
      %v1511 = vlaneseq
      %v1512 = vshrl.u32 %v1511, 7
      %v1513 = vsub.s32 %v1510, %v1512
      %v1514 = vrot.slane %v1458, %v1513
      %v1523 = vrot.slane %v1465, 4
      %v1524 = vrot.slane %v1472, 4
      %v1525 = vrot.slane %v1479, 4
      %v1526 = vrot.slane %v1486, 4
      %v1527 = vrot.slane %v1493, 4
      %v1528 = vrot.slane %v1500, 4
      %v1529 = vrot.slane %v1507, 4
      %v1530 = vrot.slane %v1514, 4
      %v1539 = vmax.f32 %v1465, %v1523
      %v1540 = vmax.f32 %v1472, %v1524
      %v1541 = vmax.f32 %v1479, %v1525
      %v1542 = vmax.f32 %v1486, %v1526
      %v1543 = vmax.f32 %v1493, %v1527
      %v1544 = vmax.f32 %v1500, %v1528
      %v1545 = vmax.f32 %v1507, %v1529
      %v1546 = vmax.f32 %v1514, %v1530
      %v1547 = vmax.f32 %v1539, %v1540
      %v1548 = vmax.f32 %v1541, %v1542
      %v1549 = vmax.f32 %v1543, %v1544
      %v1550 = vmax.f32 %v1545, %v1546
      %v1551 = vpack.c.bf16 %v1547, %v1547
      %v1552 = vpack.c.bf16 %v1548, %v1548
      %v1553 = vpack.c.bf16 %v1549, %v1549
      %v1554 = vpack.c.bf16 %v1550, %v1550
      %1555 = vst [vmem:[%s316] sm:$0x3] %v1551
      %1556 = vst [vmem:[%s316 + $0x2] sm:$0x3] %v1552
      %1557 = vst [vmem:[%s316 + $0x4] sm:$0x3] %v1553
      %1558 = vst [vmem:[%s316 + $0x6] sm:$0x3] %v1554
      %s1559 = smul.u32 4, %s20
      %p1560 = scmp.lt.s32.totalorder %s19, 1
      %s1561 = scalar_select %p1560, %s19, 1
      %p1562 = scmp.lt.s32.totalorder %s1559, 3
      %s1563 = scalar_select %p1562, %s1559, 3
      %s1564 = smul.addr %s1561, 4
      %s1565 = sadd.s32 %s1563, %s1564
      %s1566 = smul.addr %s1565, 2
      %s1567 = scalar_lea.vmem %s4, %s1566
      // Predicated region
      $region37: #{audio_ntt2022_encoder_forward.4} parent=35 // pred_check
        %p1568 = pneg %p149
      $region38: #{audio_ntt2022_encoder_forward.4} parent=35 // pred_check_branch
        %1570 = sbr.rel (%p1568) target = $region40
      $region39: #{audio_ntt2022_encoder_forward.4} parent=35 // pred_region
        %s1571 = smul.u32 4, %s20
      $region40: #{audio_ntt2022_encoder_forward.4} parent=35 // pred_fallthru
        _
    $region36: #{audio_ntt2022_encoder_forward.4} parent=5 // pred_fallthru
      _
    %p1572 = scmp.le.s32.totalorder 2, %s10
    // Predicated region
    $region41: #{audio_ntt2022_encoder_forward.4} parent=5 // pred_check
      %p1573 = pneg %p1572
    $region42: #{audio_ntt2022_encoder_forward.4} parent=5 // pred_check_branch
      %1575 = sbr.rel (%p1573) target = $region44
    $region43: #{audio_ntt2022_encoder_forward.4} parent=5 // pred_region
      %s1576 = ssub.s32 %s10, 2
      // Predicated region
      $region45: #{audio_ntt2022_encoder_forward.4} parent=43 // pred_check
        %p1577 = pneg %p155
      $region46: #{audio_ntt2022_encoder_forward.4} parent=43 // pred_check_branch
        %1579 = sbr.rel (%p1577) target = $region48
      $region47: #{audio_ntt2022_encoder_forward.4} parent=43 // pred_region
        %s1580 = smul.u32 4, %s22
        %p1581 = scmp.lt.s32.totalorder %s21, 1
        %s1582 = scalar_select %p1581, %s21, 1
        %p1583 = scmp.lt.s32.totalorder %s1580, 3
        %s1584 = scalar_select %p1583, %s1580, 3
        %s1585 = smul.addr %s1582, 4
        %s1586 = sadd.s32 %s1584, %s1585
        %s1587 = smul.addr %s1586, 2
        %s1588 = scalar_lea.vmem %s4, %s1587
      $region48: #{audio_ntt2022_encoder_forward.4} parent=43 // pred_fallthru
        _
    $region44: #{audio_ntt2022_encoder_forward.4} parent=5 // pred_fallthru
      _
  $region6: #{audio_ntt2022_encoder_forward.4} parent=0 // loop_footer
    %s14 = sadd.s32 1, %s10
  $region7: #{audio_ntt2022_encoder_forward.4} parent=0 // loop_footer_branch
    %9 = sbr.rel target = $region3
  $region8: #{audio_ntt2022_encoder_forward.4} parent=0 // loop_exit
    _

// kernel: audio_ntt2022_encoder_forward.3
$region0: #{audio_ntt2022_encoder_forward.3}
  #allocation0 [shape = 'u32[]', space=smem, size = 0x4, offset = 0x4, fixed_abs, tag = 'smem constant byte address 0x4 - core index']
  #allocation1 [shape = 'u32[144,128]{1,0:T(1,128)}', space=vmem, size = 0x12000, scoped, tag = 'internal scratch']
  %s0 = inlined_call_operand.vmem [shape: bf16[2,18,18,8], index: 0, kind: input, shape index: {}, may-alias: {0,1}]
  %s1 = inlined_call_operand.vmem [shape: bf16[2,18,18,8], index: 1, kind: input, shape index: {}, may-alias: {0,1}]
  %s2 = inlined_call_operand.vmem [shape: bf16[72,128], index: 2, kind: input, shape index: {}]
  %s3 = inlined_call_operand.vmem [shape: f32[1,128], index: 3, kind: input, shape index: {}]
  %s4 = inlined_call_operand.vmem [shape: bf16[2,8,8,128], index: 4, kind: output, shape index: {}]
  %s5 = sld [smem:[#allocation0]]
  $region49: #{audio_ntt2022_encoder_forward.3} parent=0
    _
  %s7 = ssub.s32 1, %s5
  %s8 = scalar_select 0, %s7, %s5
  loop: start=0, step=1, limit=4
  $region2: #{audio_ntt2022_encoder_forward.3} parent=0 // loop_pre_header
    _
  $region3: #{audio_ntt2022_encoder_forward.3} parent=0 // loop_header
    %s10 = sphi 0, %s14
    %p11 = scmp.ge.s32.totalorder %s10, 4
    %s17 = sphi 0, %s29
    %s18 = sphi 0, %s25
    %s19 = sphi 0, %s17
    %s20 = sphi 0, %s18
    %s21 = sphi 0, %s19
    %s22 = sphi 0, %s20
    %s34 = sphi 0, %s36
    %s37 = sphi 0, %s34
    %s38 = sphi 0, %s37
    %s54 = sphi 0, %s38
    %s66 = sphi 0, %s68
    %s69 = sphi 0, %s66
    %s70 = sphi 0, %s69
    %s86 = sphi 0, %s70
    %s90 = sphi 0, %s90
    %s92 = sphi 0, %s90
    %s93 = sphi 0, %s92
    %s107 = sphi 0, %s93
    %s111 = sphi 0, %s111
    %s113 = sphi 0, %s111
    %s114 = sphi 0, %s113
    %s128 = sphi 0, %s114
    %s136 = sphi 0, %s138
    %s139 = sphi 0, %s136
    %s140 = sphi 0, %s139
    %s156 = sphi 0, %s140
  $region4: #{audio_ntt2022_encoder_forward.3} parent=0 // loop_header_branch
    %13 = sbr.rel (%p11) target = $region8
  $region5: #{audio_ntt2022_encoder_forward.3} parent=0 // loop_body
    %s15 = ssub.s32 %s10, 1
    %s16 = ssub.s32 %s10, 2
    %s23 = sadd.s32 1, %s18
    %p24 = scmp.ge.s32.totalorder %s23, 1
    %s25 = scalar_select %p24, 0, %s23
    %s26 = sadd.s32 1, %s17
    %s27 = scalar_select %p24, %s26, %s17
    %p28 = scmp.ge.s32.totalorder %s27, 2
    %s29 = scalar_select %p28, 0, %s27
    %s30 = ssub.s32 %s17, %s29
    %s31 = ssub.s32 %s18, %s25
    %s32 = sor.u32 %s30, %s31
    %p33 = scmp.eq.s32.totalorder %s32, 0
    %s35 = sadd.s32 %s34, 1
    %s36 = scalar_select %p33, %s34, %s35
    %p39 = pneg %p33
    %p40 = scmp.eq.s32.totalorder %s10, 1
    %p41 = por %p39, %p40
    %p42 = scmp.ne.s32.totalorder %s34, %s37
    %p43 = scmp.eq.s32.totalorder %s10, 0
    %p44 = por %p42, %p43
    %p45 = scmp.ne.s32.totalorder %s34, %s37
    %p46 = scmp.eq.s32.totalorder %s15, 1
    %p47 = por %p45, %p46
    %p48 = scmp.ne.s32.totalorder %s37, %s38
    %p49 = scmp.eq.s32.totalorder %s15, 0
    %p50 = por %p48, %p49
    %p51 = scmp.ne.s32.totalorder %s37, %s38
    %p52 = scmp.eq.s32.totalorder %s16, 1
    %p53 = por %p51, %p52
    %p55 = scmp.ne.s32.totalorder %s38, %s54
    %p56 = scmp.eq.s32.totalorder %s16, 0
    %p57 = por %p55, %p56
    %s58 = sadd.s32 %s18, 1
    %s59 = smul.u32 %s58, 8
    %s60 = sadd.s32 %s25, 1
    %s61 = smul.u32 %s60, 8
    %s62 = ssub.s32 %s17, %s29
    %s63 = ssub.s32 %s59, %s61
    %s64 = sor.u32 %s62, %s63
    %p65 = scmp.eq.s32.totalorder %s64, 0
    %s67 = sadd.s32 %s66, 1
    %s68 = scalar_select %p65, %s66, %s67
    %p71 = pneg %p65
    %p72 = scmp.eq.s32.totalorder %s10, 1
    %p73 = por %p71, %p72
    %p74 = scmp.ne.s32.totalorder %s66, %s69
    %p75 = scmp.eq.s32.totalorder %s10, 0
    %p76 = por %p74, %p75
    %p77 = scmp.ne.s32.totalorder %s66, %s69
    %p78 = scmp.eq.s32.totalorder %s15, 1
    %p79 = por %p77, %p78
    %p80 = scmp.ne.s32.totalorder %s69, %s70
    %p81 = scmp.eq.s32.totalorder %s15, 0
    %p82 = por %p80, %p81
    %p83 = scmp.ne.s32.totalorder %s69, %s70
    %p84 = scmp.eq.s32.totalorder %s16, 1
    %p85 = por %p83, %p84
    %p87 = scmp.ne.s32.totalorder %s70, %s86
    %p88 = scmp.eq.s32.totalorder %s16, 0
    %p89 = por %p87, %p88
    %s91 = sadd.s32 %s90, 1
    %p94 = scmp.eq.s32.totalorder %s10, 1
    %p95 = scmp.ne.s32.totalorder %s90, %s92
    %p96 = scmp.eq.s32.totalorder %s10, 0
    %p97 = por %p95, %p96
    %p98 = scmp.ne.s32.totalorder %s90, %s92
    %p99 = scmp.eq.s32.totalorder %s15, 1
    %p100 = por %p98, %p99
    %p101 = scmp.ne.s32.totalorder %s92, %s93
    %p102 = scmp.eq.s32.totalorder %s15, 0
    %p103 = por %p101, %p102
    %p104 = scmp.ne.s32.totalorder %s92, %s93
    %p105 = scmp.eq.s32.totalorder %s16, 1
    %p106 = por %p104, %p105
    %p108 = scmp.ne.s32.totalorder %s93, %s107
    %p109 = scmp.eq.s32.totalorder %s16, 0
    %p110 = por %p108, %p109
    %s112 = sadd.s32 %s111, 1
    %p115 = scmp.eq.s32.totalorder %s10, 1
    %p116 = scmp.ne.s32.totalorder %s111, %s113
    %p117 = scmp.eq.s32.totalorder %s10, 0
    %p118 = por %p116, %p117
    %p119 = scmp.ne.s32.totalorder %s111, %s113
    %p120 = scmp.eq.s32.totalorder %s15, 1
    %p121 = por %p119, %p120
    %p122 = scmp.ne.s32.totalorder %s113, %s114
    %p123 = scmp.eq.s32.totalorder %s15, 0
    %p124 = por %p122, %p123
    %p125 = scmp.ne.s32.totalorder %s113, %s114
    %p126 = scmp.eq.s32.totalorder %s16, 1
    %p127 = por %p125, %p126
    %p129 = scmp.ne.s32.totalorder %s114, %s128
    %p130 = scmp.eq.s32.totalorder %s16, 0
    %p131 = por %p129, %p130
    %s132 = ssub.s32 %s17, %s29
    %s133 = ssub.s32 %s18, %s25
    %s134 = sor.u32 %s132, %s133
    %p135 = scmp.eq.s32.totalorder %s134, 0
    %s137 = sadd.s32 %s136, 1
    %s138 = scalar_select %p135, %s136, %s137
    %p141 = pneg %p135
    %p142 = scmp.eq.s32.totalorder %s10, 1
    %p143 = por %p141, %p142
    %p144 = scmp.ne.s32.totalorder %s136, %s139
    %p145 = scmp.eq.s32.totalorder %s10, 0
    %p146 = por %p144, %p145
    %p147 = scmp.ne.s32.totalorder %s136, %s139
    %p148 = scmp.eq.s32.totalorder %s15, 1
    %p149 = por %p147, %p148
    %p150 = scmp.ne.s32.totalorder %s139, %s140
    %p151 = scmp.eq.s32.totalorder %s15, 0
    %p152 = por %p150, %p151
    %p153 = scmp.ne.s32.totalorder %s139, %s140
    %p154 = scmp.eq.s32.totalorder %s16, 1
    %p155 = por %p153, %p154
    %p157 = scmp.ne.s32.totalorder %s140, %s156
    %p158 = scmp.eq.s32.totalorder %s16, 0
    %p159 = por %p157, %p158
    %p160 = scmp.le.s32.totalorder 1, %s10
    %p161 = scmp.lt.s32.totalorder %s10, 3
    %p162 = pnand %p160, %p161
    %p163 = pneg %p162
    // Predicated region
    $region9: #{audio_ntt2022_encoder_forward.3} parent=5 // pred_check
      _
    $region10: #{audio_ntt2022_encoder_forward.3} parent=5 // pred_check_branch
      %165 = sbr.rel (%p162) target = $region12
    $region11: #{audio_ntt2022_encoder_forward.3} parent=5 // pred_region
      %s166 = ssub.s32 %s10, 1
      // Predicated region
      $region13: #{audio_ntt2022_encoder_forward.3} parent=11 // pred_check
        %p167 = pneg %p103
      $region14: #{audio_ntt2022_encoder_forward.3} parent=11 // pred_check_branch
        %169 = sbr.rel (%p167) target = $region16
      $region15: #{audio_ntt2022_encoder_forward.3} parent=11 // pred_region
        _
      $region16: #{audio_ntt2022_encoder_forward.3} parent=11 // pred_fallthru
        _
      // Predicated region
      $region17: #{audio_ntt2022_encoder_forward.3} parent=11 // pred_check
        %p170 = pneg %p124
      $region18: #{audio_ntt2022_encoder_forward.3} parent=11 // pred_check_branch
        %172 = sbr.rel (%p170) target = $region20
      $region19: #{audio_ntt2022_encoder_forward.3} parent=11 // pred_region
        _
      $region20: #{audio_ntt2022_encoder_forward.3} parent=11 // pred_fallthru
        _
    $region12: #{audio_ntt2022_encoder_forward.3} parent=5 // pred_fallthru
      _
    %p173 = scmp.lt.s32.totalorder %s10, 2
    // Predicated region
    $region21: #{audio_ntt2022_encoder_forward.3} parent=5 // pred_check
      %p174 = pneg %p173
    $region22: #{audio_ntt2022_encoder_forward.3} parent=5 // pred_check_branch
      %176 = sbr.rel (%p174) target = $region24
    $region23: #{audio_ntt2022_encoder_forward.3} parent=5 // pred_region
      // Predicated region
      $region25: #{audio_ntt2022_encoder_forward.3} parent=23 // pred_check
        %p177 = pneg %p44
      $region26: #{audio_ntt2022_encoder_forward.3} parent=23 // pred_check_branch
        %179 = sbr.rel (%p177) target = $region28
      $region27: #{audio_ntt2022_encoder_forward.3} parent=23 // pred_region
        %s180 = smul.u32 16, %s18
        %s181 = ssub.s32 18, %s180
        %p182 = scmp.lt.s32.totalorder %s181, 16
        %s183 = scalar_select %p182, %s181, 16
        %s184 = smul.u32 64, %s183
        %s185 = smul.u32 %s184, 3
        %p186 = scmp.lt.s32.totalorder %s17, 1
        %s187 = scalar_select %p186, %s17, 1
        %p188 = scmp.lt.s32.totalorder %s180, 17
        %s189 = scalar_select %p188, %s180, 17
        %s190 = smul.addr %s189, 3
        %s191 = smul.addr %s187, 54
        %s192 = sadd.s32 %s190, %s191
        %s193 = smul.addr %s192, 4
        %s194 = scalar_lea.vmem %s0, %s193
        %s195 = smul.u32 16, %s18
        %s196 = ssub.s32 18, %s195
        %p197 = scmp.lt.s32.totalorder %s196, 16
        %s198 = scalar_select %p197, %s196, 16
        %s199 = smul.u32 64, %s198
        %s200 = smul.u32 %s199, 3
      $region28: #{audio_ntt2022_encoder_forward.3} parent=23 // pred_fallthru
        _
      // Predicated region
      $region29: #{audio_ntt2022_encoder_forward.3} parent=23 // pred_check
        %p201 = pneg %p76
      $region30: #{audio_ntt2022_encoder_forward.3} parent=23 // pred_check_branch
        %203 = sbr.rel (%p201) target = $region32
      $region31: #{audio_ntt2022_encoder_forward.3} parent=23 // pred_region
        %s204 = sadd.s32 %s18, 1
        %s205 = smul.u32 %s204, 8
        %s206 = smul.u32 2, %s205
        %p207 = scmp.lt.s32.totalorder %s17, 1
        %s208 = scalar_select %p207, %s17, 1
        %p209 = scmp.lt.s32.totalorder %s206, 17
        %s210 = scalar_select %p209, %s206, 17
        %s211 = smul.addr %s210, 3
        %s212 = smul.addr %s208, 54
        %s213 = sadd.s32 %s211, %s212
        %s214 = smul.addr %s213, 4
        %s215 = scalar_lea.vmem %s1, %s214
        %s216 = sadd.s32 %s18, 1
        %s217 = smul.u32 %s216, 8
        %s218 = smul.u32 2, %s217
      $region32: #{audio_ntt2022_encoder_forward.3} parent=23 // pred_fallthru
        _
    $region24: #{audio_ntt2022_encoder_forward.3} parent=5 // pred_fallthru
      _
    %p219 = scmp.le.s32.totalorder 1, %s10
    %p220 = scmp.lt.s32.totalorder %s10, 3
    %p221 = pnand %p219, %p220
    %p222 = pneg %p221
    // Predicated region
    $region33: #{audio_ntt2022_encoder_forward.3} parent=5 // pred_check
      _
    $region34: #{audio_ntt2022_encoder_forward.3} parent=5 // pred_check_branch
      %224 = sbr.rel (%p221) target = $region36
    $region35: #{audio_ntt2022_encoder_forward.3} parent=5 // pred_region
      %s225 = ssub.s32 %s10, 1
      %s226 = smul.u32 16, %s20
      %s227 = ssub.s32 18, %s226
      %p228 = scmp.lt.s32.totalorder %s227, 16
      %s229 = scalar_select %p228, %s227, 16
      %s230 = smul.u32 64, %s229
      %s231 = smul.u32 %s230, 3
      %p232 = scmp.lt.s32.totalorder %s19, 1
      %s233 = scalar_select %p232, %s19, 1
      %p234 = scmp.lt.s32.totalorder %s226, 17
      %s235 = scalar_select %p234, %s226, 17
      %s236 = smul.addr %s235, 3
      %s237 = smul.addr %s233, 54
      %s238 = sadd.s32 %s236, %s237
      %s239 = smul.addr %s238, 4
      %s240 = scalar_lea.vmem %s0, %s239
      %p241 = pneg %p50
      %p242 = pneg %p47
      %s243 = sadd.s32 %s20, 1
      %s244 = smul.u32 %s243, 8
      %s245 = smul.u32 2, %s244
      %p246 = scmp.lt.s32.totalorder %s19, 1
      %s247 = scalar_select %p246, %s19, 1
      %p248 = scmp.lt.s32.totalorder %s245, 17
      %s249 = scalar_select %p248, %s245, 17
      %s250 = smul.addr %s249, 3
      %s251 = smul.addr %s247, 54
      %s252 = sadd.s32 %s250, %s251
      %s253 = smul.addr %s252, 4
      %s254 = scalar_lea.vmem %s1, %s253
      %p255 = pneg %p82
      %p256 = pneg %p79
      %p257 = pneg %p103
      %p258 = pneg %p100
      %p259 = pneg %p124
      %p260 = pneg %p121
      %p261 = pneg %p152
      %p262 = pneg %p149
      %s263 = smul.u32 8, %s20
      %p264 = scmp.lt.s32.totalorder %s19, 1
      %s265 = scalar_select %p264, %s19, 1
      %p266 = scmp.lt.s32.totalorder %s263, 7
      %s267 = scalar_select %p266, %s263, 7
      %s268 = smul.addr %s265, 8
      %s269 = sadd.s32 %s267, %s268
      %s270 = smul.addr %s269, 4
      %s271 = scalar_lea.vmem %s4, %s270
      %s272 = smul.u32 16, %s20
      %s273 = ssub.s32 18, %s272
      %p274 = scmp.lt.s32.totalorder %s273, 16
      %s275 = scalar_select %p274, %s273, 16
      %s276 = smul.u32 64, %s275
      %s277 = smul.u32 %s276, 3
      %p278 = scmp.lt.s32.totalorder %s19, 1
      %s279 = scalar_select %p278, %s19, 1
      %p280 = scmp.lt.s32.totalorder %s272, 17
      %s281 = scalar_select %p280, %s272, 17
      %s282 = smul.addr %s281, 3
      %s283 = smul.addr %s279, 54
      %s284 = sadd.s32 %s282, %s283
      %s285 = smul.addr %s284, 4
      %s286 = scalar_lea.vmem %s0, %s285
      %s287 = smul.u32 16, %s20
      %s288 = ssub.s32 18, %s287
      %p289 = scmp.lt.s32.totalorder %s288, 16
      %s290 = scalar_select %p289, %s288, 16
      %s291 = smul.u32 64, %s290
      %s292 = smul.u32 %s291, 3
      %s293 = sadd.s32 %s20, 1
      %s294 = smul.u32 %s293, 8
      %s295 = smul.u32 2, %s294
      %p296 = scmp.lt.s32.totalorder %s19, 1
      %s297 = scalar_select %p296, %s19, 1
      %p298 = scmp.lt.s32.totalorder %s295, 17
      %s299 = scalar_select %p298, %s295, 17
      %s300 = smul.addr %s299, 3
      %s301 = smul.addr %s297, 54
      %s302 = sadd.s32 %s300, %s301
      %s303 = smul.addr %s302, 4
      %s304 = scalar_lea.vmem %s1, %s303
      %s305 = sadd.s32 %s20, 1
      %s306 = smul.u32 %s305, 8
      %s307 = smul.u32 2, %s306
      %s308 = smul.u32 8, %s20
      %p309 = scmp.lt.s32.totalorder %s19, 1
      %s310 = scalar_select %p309, %s19, 1
      %p311 = scmp.lt.s32.totalorder %s308, 7
      %s312 = scalar_select %p311, %s308, 7
      %s313 = smul.addr %s310, 8
      %s314 = sadd.s32 %s312, %s313
      %s315 = smul.addr %s314, 4
      %s316 = scalar_lea.vmem %s4, %s315
      %s317 = smul.u32 8, %s20
      %v319 = vld [vmem:[%s286] sm:$0xf]
      %v320 = vld [vmem:[%s286 + $0x4] sm:$0xf]
      %v321 = vld [vmem:[%s286 + $0x8] sm:$0x1]
      %v322 = vld [vmem:[%s286 + $0xc] sm:$0xf]
      %v323 = vld [vmem:[%s286 + $0x10] sm:$0xf]
      %v324 = vld [vmem:[%s286 + $0x14] sm:$0x1]
      %v325 = vld [vmem:[%s286 + $0x18] sm:$0xf]
      %v326 = vld [vmem:[%s286 + $0x1c] sm:$0xf]
      %v327 = vld [vmem:[%s286 + $0x20] sm:$0x1]
      %v328 = vld [vmem:[%s286 + $0x24] sm:$0xf]
      %v329 = vld [vmem:[%s286 + $0x28] sm:$0xf]
      %v330 = vld [vmem:[%s286 + $0x2c] sm:$0x1]
      %v331 = vld [vmem:[%s286 + $0x30] sm:$0xf]
      %v332 = vld [vmem:[%s286 + $0x34] sm:$0xf]
      %v333 = vld [vmem:[%s286 + $0x38] sm:$0x1]
      %v334 = vld [vmem:[%s286 + $0x3c] sm:$0xf]
      %v335 = vld [vmem:[%s286 + $0x40] sm:$0xf]
      %v336 = vld [vmem:[%s286 + $0x44] sm:$0x1]
      %v337 = vld [vmem:[%s286 + $0x48] sm:$0xf]
      %v338 = vld [vmem:[%s286 + $0x4c] sm:$0xf]
      %v339 = vld [vmem:[%s286 + $0x50] sm:$0x1]
      %v340 = vld [vmem:[%s286 + $0x54] sm:$0xf]
      %v341 = vld [vmem:[%s286 + $0x58] sm:$0xf]
      %v342 = vld [vmem:[%s286 + $0x5c] sm:$0x1]
      %v343 = vld [vmem:[%s286 + $0x60] sm:$0xf]
      %v344 = vld [vmem:[%s286 + $0x64] sm:$0xf]
      %v345 = vld [vmem:[%s286 + $0x68] sm:$0x1]
      %v346 = vld [vmem:[%s286 + $0x6c] sm:$0xf]
      %v347 = vld [vmem:[%s286 + $0x70] sm:$0xf]
      %v348 = vld [vmem:[%s286 + $0x74] sm:$0x1]
      %v349 = vld [vmem:[%s286 + $0x78] sm:$0xf]
      %v350 = vld [vmem:[%s286 + $0x7c] sm:$0xf]
      %v351 = vld [vmem:[%s286 + $0x80] sm:$0x1]
      %v352 = vld [vmem:[%s286 + $0x84] sm:$0xf]
      %v353 = vld [vmem:[%s286 + $0x88] sm:$0xf]
      %v354 = vld [vmem:[%s286 + $0x8c] sm:$0x1]
      %v355 = vld [vmem:[%s286 + $0x90] sm:$0xf]
      %v356 = vld [vmem:[%s286 + $0x94] sm:$0xf]
      %v357 = vld [vmem:[%s286 + $0x98] sm:$0x1]
      %v358 = vld [vmem:[%s286 + $0x9c] sm:$0xf]
      %v359 = vld [vmem:[%s286 + $0xa0] sm:$0xf]
      %v360 = vld [vmem:[%s286 + $0xa4] sm:$0x1]
      %v361 = vld [vmem:[%s286 + $0xa8] sm:$0xf]
      %v362 = vld [vmem:[%s286 + $0xac] sm:$0xf]
      %v363 = vld [vmem:[%s286 + $0xb0] sm:$0x1]
      %v364 = vld [vmem:[%s286 + $0xb4] sm:$0xf]
      %v365 = vld [vmem:[%s286 + $0xb8] sm:$0xf]
      %v366 = vld [vmem:[%s286 + $0xbc] sm:$0x1]
      %v367 = vld [vmem:[%s304] sm:$0xf]
      %v368 = vld [vmem:[%s304 + $0x4] sm:$0xf]
      %v369 = vld [vmem:[%s304 + $0x8] sm:$0x1]
      %v370 = vld [vmem:[%s304 + $0xc] sm:$0xf]
      %v371 = vld [vmem:[%s304 + $0x10] sm:$0xf]
      %v372 = vld [vmem:[%s304 + $0x14] sm:$0x1]
      %v405 = vunpack.c.l.b16 %v319
      %v406 = vunpack.c.l.b16 %v320
      %v407 = vunpack.c.l.b16 %v322
      %v408 = vunpack.c.l.b16 %v323
      %v409 = vunpack.c.l.b16 %v325
      %v410 = vunpack.c.l.b16 %v326
      %v411 = vunpack.c.l.b16 %v328
      %v412 = vunpack.c.l.b16 %v329
      %v413 = vunpack.c.l.b16 %v331
      %v414 = vunpack.c.l.b16 %v332
      %v415 = vunpack.c.l.b16 %v334
      %v416 = vunpack.c.l.b16 %v335
      %v417 = vunpack.c.l.b16 %v337
      %v418 = vunpack.c.l.b16 %v338
      %v419 = vunpack.c.l.b16 %v340
      %v420 = vunpack.c.l.b16 %v341
      %v421 = vunpack.c.l.b16 %v343
      %v422 = vunpack.c.l.b16 %v344
      %v423 = vunpack.c.l.b16 %v346
      %v424 = vunpack.c.l.b16 %v347
      %v425 = vunpack.c.l.b16 %v349
      %v426 = vunpack.c.l.b16 %v350
      %v427 = vunpack.c.l.b16 %v352
      %v428 = vunpack.c.l.b16 %v353
      %v429 = vunpack.c.l.b16 %v355
      %v430 = vunpack.c.l.b16 %v356
      %v431 = vunpack.c.l.b16 %v358
      %v432 = vunpack.c.l.b16 %v359
      %v433 = vunpack.c.l.b16 %v361
      %v434 = vunpack.c.l.b16 %v362
      %v435 = vunpack.c.l.b16 %v364
      %v436 = vunpack.c.l.b16 %v365
      %v437 = vpack.c.b16 %v406, %v405
      %v438 = vpack.c.b16 %v408, %v407
      %v439 = vpack.c.b16 %v410, %v409
      %v440 = vpack.c.b16 %v412, %v411
      %v441 = vpack.c.b16 %v414, %v413
      %v442 = vpack.c.b16 %v416, %v415
      %v443 = vpack.c.b16 %v418, %v417
      %v444 = vpack.c.b16 %v420, %v419
      %v445 = vpack.c.b16 %v422, %v421
      %v446 = vpack.c.b16 %v424, %v423
      %v447 = vpack.c.b16 %v426, %v425
      %v448 = vpack.c.b16 %v428, %v427
      %v449 = vpack.c.b16 %v430, %v429
      %v450 = vpack.c.b16 %v432, %v431
      %v451 = vpack.c.b16 %v434, %v433
      %v452 = vpack.c.b16 %v436, %v435
      %v469 = vunpack.c.l.b16 %v321
      %v470 = vunpack.c.l.b16 %v324
      %v471 = vunpack.c.l.b16 %v327
      %v472 = vunpack.c.l.b16 %v330
      %v473 = vunpack.c.l.b16 %v333
      %v474 = vunpack.c.l.b16 %v336
      %v475 = vunpack.c.l.b16 %v339
      %v476 = vunpack.c.l.b16 %v342
      %v477 = vunpack.c.l.b16 %v345
      %v478 = vunpack.c.l.b16 %v348
      %v479 = vunpack.c.l.b16 %v351
      %v480 = vunpack.c.l.b16 %v354
      %v481 = vunpack.c.l.b16 %v357
      %v482 = vunpack.c.l.b16 %v360
      %v483 = vunpack.c.l.b16 %v363
      %v484 = vunpack.c.l.b16 %v366
      %v485 = vpack.c.b16 %v469, %v469
      %v486 = vpack.c.b16 %v470, %v470
      %v487 = vpack.c.b16 %v471, %v471
      %v488 = vpack.c.b16 %v472, %v472
      %v489 = vpack.c.b16 %v473, %v473
      %v490 = vpack.c.b16 %v474, %v474
      %v491 = vpack.c.b16 %v475, %v475
      %v492 = vpack.c.b16 %v476, %v476
      %v493 = vpack.c.b16 %v477, %v477
      %v494 = vpack.c.b16 %v478, %v478
      %v495 = vpack.c.b16 %v479, %v479
      %v496 = vpack.c.b16 %v480, %v480
      %v497 = vpack.c.b16 %v481, %v481
      %v498 = vpack.c.b16 %v482, %v482
      %v499 = vpack.c.b16 %v483, %v483
      %v500 = vpack.c.b16 %v484, %v484
      %vm501 = vsmask.f32 7424
      %v503 = vshrl.u32 %v437, 16
      %v505 = vshll.u32 %v437, 16
      %v507 = vrot.slane %v505, 1
      %v508 = vor.u32 %v503, %v507
      %v510 = vshll.u32 %v485, 16
      %v512 = vrot.slane %v510, 1
      %v513 = vsel %vm501, %v508, %v512
      %v515 = vshrl.u32 %v438, 16
      %v517 = vshll.u32 %v438, 16
      %v519 = vrot.slane %v517, 1
      %v520 = vor.u32 %v515, %v519
      %v522 = vshll.u32 %v486, 16
      %v524 = vrot.slane %v522, 1
      %v525 = vsel %vm501, %v520, %v524
      %v527 = vshrl.u32 %v439, 16
      %v529 = vshll.u32 %v439, 16
      %v531 = vrot.slane %v529, 1
      %v532 = vor.u32 %v527, %v531
      %v534 = vshll.u32 %v487, 16
      %v536 = vrot.slane %v534, 1
      %v537 = vsel %vm501, %v532, %v536
      %v539 = vshrl.u32 %v440, 16
      %v541 = vshll.u32 %v440, 16
      %v543 = vrot.slane %v541, 1
      %v544 = vor.u32 %v539, %v543
      %v546 = vshll.u32 %v488, 16
      %v548 = vrot.slane %v546, 1
      %v549 = vsel %vm501, %v544, %v548
      %v551 = vshrl.u32 %v441, 16
      %v553 = vshll.u32 %v441, 16
      %v555 = vrot.slane %v553, 1
      %v556 = vor.u32 %v551, %v555
      %v558 = vshll.u32 %v489, 16
      %v560 = vrot.slane %v558, 1
      %v561 = vsel %vm501, %v556, %v560
      %v563 = vshrl.u32 %v442, 16
      %v565 = vshll.u32 %v442, 16
      %v567 = vrot.slane %v565, 1
      %v568 = vor.u32 %v563, %v567
      %v570 = vshll.u32 %v490, 16
      %v572 = vrot.slane %v570, 1
      %v573 = vsel %vm501, %v568, %v572
      %v575 = vshrl.u32 %v443, 16
      %v577 = vshll.u32 %v443, 16
      %v579 = vrot.slane %v577, 1
      %v580 = vor.u32 %v575, %v579
      %v582 = vshll.u32 %v491, 16
      %v584 = vrot.slane %v582, 1
      %v585 = vsel %vm501, %v580, %v584
      %v587 = vshrl.u32 %v444, 16
      %v589 = vshll.u32 %v444, 16
      %v591 = vrot.slane %v589, 1
      %v592 = vor.u32 %v587, %v591
      %v594 = vshll.u32 %v492, 16
      %v596 = vrot.slane %v594, 1
      %v597 = vsel %vm501, %v592, %v596
      %v599 = vshrl.u32 %v445, 16
      %v601 = vshll.u32 %v445, 16
      %v603 = vrot.slane %v601, 1
      %v604 = vor.u32 %v599, %v603
      %v606 = vshll.u32 %v493, 16
      %v608 = vrot.slane %v606, 1
      %v609 = vsel %vm501, %v604, %v608
      %v611 = vshrl.u32 %v446, 16
      %v613 = vshll.u32 %v446, 16
      %v615 = vrot.slane %v613, 1
      %v616 = vor.u32 %v611, %v615
      %v618 = vshll.u32 %v494, 16
      %v620 = vrot.slane %v618, 1
      %v621 = vsel %vm501, %v616, %v620
      %v623 = vshrl.u32 %v447, 16
      %v625 = vshll.u32 %v447, 16
      %v627 = vrot.slane %v625, 1
      %v628 = vor.u32 %v623, %v627
      %v630 = vshll.u32 %v495, 16
      %v632 = vrot.slane %v630, 1
      %v633 = vsel %vm501, %v628, %v632
      %v635 = vshrl.u32 %v448, 16
      %v637 = vshll.u32 %v448, 16
      %v639 = vrot.slane %v637, 1
      %v640 = vor.u32 %v635, %v639
      %v642 = vshll.u32 %v496, 16
      %v644 = vrot.slane %v642, 1
      %v645 = vsel %vm501, %v640, %v644
      %v647 = vshrl.u32 %v449, 16
      %v649 = vshll.u32 %v449, 16
      %v651 = vrot.slane %v649, 1
      %v652 = vor.u32 %v647, %v651
      %v654 = vshll.u32 %v497, 16
      %v656 = vrot.slane %v654, 1
      %v657 = vsel %vm501, %v652, %v656
      %v659 = vshrl.u32 %v450, 16
      %v661 = vshll.u32 %v450, 16
      %v663 = vrot.slane %v661, 1
      %v664 = vor.u32 %v659, %v663
      %v666 = vshll.u32 %v498, 16
      %v668 = vrot.slane %v666, 1
      %v669 = vsel %vm501, %v664, %v668
      %v671 = vshrl.u32 %v451, 16
      %v673 = vshll.u32 %v451, 16
      %v675 = vrot.slane %v673, 1
      %v676 = vor.u32 %v671, %v675
      %v678 = vshll.u32 %v499, 16
      %v680 = vrot.slane %v678, 1
      %v681 = vsel %vm501, %v676, %v680
      %v683 = vshrl.u32 %v452, 16
      %v685 = vshll.u32 %v452, 16
      %v687 = vrot.slane %v685, 1
      %v688 = vor.u32 %v683, %v687
      %v690 = vshll.u32 %v500, 16
      %v692 = vrot.slane %v690, 1
      %v693 = vsel %vm501, %v688, %v692
      %694 = vrot.lane.b32.xlu0 %v513, 8
      %v695 = vpop.permute.xlu0 %694
      %696 = vrot.lane.b32.xlu0 %v525, 8
      %v697 = vpop.permute.xlu0 %696
      %698 = vrot.lane.b32.xlu0 %v537, 8
      %v699 = vpop.permute.xlu0 %698
      %700 = vrot.lane.b32.xlu0 %v549, 8
      %v701 = vpop.permute.xlu0 %700
      %702 = vrot.lane.b32.xlu0 %v561, 8
      %v703 = vpop.permute.xlu0 %702
      %704 = vrot.lane.b32.xlu0 %v573, 8
      %v705 = vpop.permute.xlu0 %704
      %706 = vrot.lane.b32.xlu0 %v585, 8
      %v707 = vpop.permute.xlu0 %706
      %708 = vrot.lane.b32.xlu0 %v597, 8
      %v709 = vpop.permute.xlu0 %708
      %710 = vrot.lane.b32.xlu0 %v609, 8
      %v711 = vpop.permute.xlu0 %710
      %712 = vrot.lane.b32.xlu0 %v621, 8
      %v713 = vpop.permute.xlu0 %712
      %714 = vrot.lane.b32.xlu0 %v633, 8
      %v715 = vpop.permute.xlu0 %714
      %716 = vrot.lane.b32.xlu0 %v645, 8
      %v717 = vpop.permute.xlu0 %716
      %718 = vrot.lane.b32.xlu0 %v657, 8
      %v719 = vpop.permute.xlu0 %718
      %720 = vrot.lane.b32.xlu0 %v669, 8
      %v721 = vpop.permute.xlu0 %720
      %722 = vrot.lane.b32.xlu0 %v681, 8
      %v723 = vpop.permute.xlu0 %722
      %724 = vrot.lane.b32.xlu0 %v693, 8
      %v725 = vpop.permute.xlu0 %724
      %vm726 = vcmask 1046528
      %v727 = vrot.slane %v437, 1
      %v728 = vrot.slane %v485, 1
      %v729 = vsel %vm726, %v727, %v728
      %v730 = vrot.slane %v438, 1
      %v731 = vrot.slane %v486, 1
      %v732 = vsel %vm726, %v730, %v731
      %v733 = vrot.slane %v439, 1
      %v734 = vrot.slane %v487, 1
      %v735 = vsel %vm726, %v733, %v734
      %v736 = vrot.slane %v440, 1
      %v737 = vrot.slane %v488, 1
      %v738 = vsel %vm726, %v736, %v737
      %v739 = vrot.slane %v441, 1
      %v740 = vrot.slane %v489, 1
      %v741 = vsel %vm726, %v739, %v740
      %v742 = vrot.slane %v442, 1
      %v743 = vrot.slane %v490, 1
      %v744 = vsel %vm726, %v742, %v743
      %v745 = vrot.slane %v443, 1
      %v746 = vrot.slane %v491, 1
      %v747 = vsel %vm726, %v745, %v746
      %v748 = vrot.slane %v444, 1
      %v749 = vrot.slane %v492, 1
      %v750 = vsel %vm726, %v748, %v749
      %v751 = vrot.slane %v445, 1
      %v752 = vrot.slane %v493, 1
      %v753 = vsel %vm726, %v751, %v752
      %v754 = vrot.slane %v446, 1
      %v755 = vrot.slane %v494, 1
      %v756 = vsel %vm726, %v754, %v755
      %v757 = vrot.slane %v447, 1
      %v758 = vrot.slane %v495, 1
      %v759 = vsel %vm726, %v757, %v758
      %v760 = vrot.slane %v448, 1
      %v761 = vrot.slane %v496, 1
      %v762 = vsel %vm726, %v760, %v761
      %v763 = vrot.slane %v449, 1
      %v764 = vrot.slane %v497, 1
      %v765 = vsel %vm726, %v763, %v764
      %v766 = vrot.slane %v450, 1
      %v767 = vrot.slane %v498, 1
      %v768 = vsel %vm726, %v766, %v767
      %v769 = vrot.slane %v451, 1
      %v770 = vrot.slane %v499, 1
      %v771 = vsel %vm726, %v769, %v770
      %v772 = vrot.slane %v452, 1
      %v773 = vrot.slane %v500, 1
      %v774 = vsel %vm726, %v772, %v773
      %775 = vrot.lane.b32.xlu0 %v729, 16
      %v776 = vpop.permute.xlu0 %775
      %777 = vrot.lane.b32.xlu0 %v732, 16
      %v778 = vpop.permute.xlu0 %777
      %779 = vrot.lane.b32.xlu0 %v735, 16
      %v780 = vpop.permute.xlu0 %779
      %781 = vrot.lane.b32.xlu0 %v738, 16
      %v782 = vpop.permute.xlu0 %781
      %783 = vrot.lane.b32.xlu0 %v741, 16
      %v784 = vpop.permute.xlu0 %783
      %785 = vrot.lane.b32.xlu0 %v744, 16
      %v786 = vpop.permute.xlu0 %785
      %787 = vrot.lane.b32.xlu0 %v747, 16
      %v788 = vpop.permute.xlu0 %787
      %789 = vrot.lane.b32.xlu0 %v750, 16
      %v790 = vpop.permute.xlu0 %789
      %791 = vrot.lane.b32.xlu0 %v753, 16
      %v792 = vpop.permute.xlu0 %791
      %793 = vrot.lane.b32.xlu0 %v756, 16
      %v794 = vpop.permute.xlu0 %793
      %795 = vrot.lane.b32.xlu0 %v759, 16
      %v796 = vpop.permute.xlu0 %795
      %797 = vrot.lane.b32.xlu0 %v762, 16
      %v798 = vpop.permute.xlu0 %797
      %799 = vrot.lane.b32.xlu0 %v765, 16
      %v800 = vpop.permute.xlu0 %799
      %801 = vrot.lane.b32.xlu0 %v768, 16
      %v802 = vpop.permute.xlu0 %801
      %803 = vrot.lane.b32.xlu0 %v771, 16
      %v804 = vpop.permute.xlu0 %803
      %805 = vrot.lane.b32.xlu0 %v774, 16
      %v806 = vpop.permute.xlu0 %805
      %v809 = vunpack.c.l.b16 %v367
      %v810 = vunpack.c.l.b16 %v368
      %v811 = vpack.c.b16 %v810, %v809
      %812 = vrot.lane.b32.xlu0 %v438, 24
      %v813 = vpop.permute.xlu0 %812
      %814 = vrot.lane.b32.xlu0 %v439, 24
      %v815 = vpop.permute.xlu0 %814
      %816 = vrot.lane.b32.xlu0 %v440, 24
      %v817 = vpop.permute.xlu0 %816
      %818 = vrot.lane.b32.xlu0 %v441, 24
      %v819 = vpop.permute.xlu0 %818
      %820 = vrot.lane.b32.xlu0 %v442, 24
      %v821 = vpop.permute.xlu0 %820
      %822 = vrot.lane.b32.xlu0 %v443, 24
      %v823 = vpop.permute.xlu0 %822
      %824 = vrot.lane.b32.xlu0 %v444, 24
      %v825 = vpop.permute.xlu0 %824
      %826 = vrot.lane.b32.xlu0 %v445, 24
      %v827 = vpop.permute.xlu0 %826
      %828 = vrot.lane.b32.xlu0 %v446, 24
      %v829 = vpop.permute.xlu0 %828
      %830 = vrot.lane.b32.xlu0 %v447, 24
      %v831 = vpop.permute.xlu0 %830
      %832 = vrot.lane.b32.xlu0 %v448, 24
      %v833 = vpop.permute.xlu0 %832
      %834 = vrot.lane.b32.xlu0 %v449, 24
      %v835 = vpop.permute.xlu0 %834
      %836 = vrot.lane.b32.xlu0 %v450, 24
      %v837 = vpop.permute.xlu0 %836
      %838 = vrot.lane.b32.xlu0 %v451, 24
      %v839 = vpop.permute.xlu0 %838
      %840 = vrot.lane.b32.xlu0 %v452, 24
      %v841 = vpop.permute.xlu0 %840
      %842 = vrot.lane.b32.xlu0 %v811, 24
      %v843 = vpop.permute.xlu0 %842
      %v845 = vunpack.c.l.b16 %v369
      %v846 = vpack.c.b16 %v845, %v845
      %v848 = vshrl.u32 %v811, 16
      %v850 = vshll.u32 %v811, 16
      %v852 = vrot.slane %v850, 1
      %v853 = vor.u32 %v848, %v852
      %v855 = vshll.u32 %v846, 16
      %v857 = vrot.slane %v855, 1
      %v858 = vsel %vm501, %v853, %v857
      %859 = vrot.lane.b32.xlu0 %v525, 32
      %v860 = vpop.permute.xlu0 %859
      %861 = vrot.lane.b32.xlu0 %v537, 32
      %v862 = vpop.permute.xlu0 %861
      %863 = vrot.lane.b32.xlu0 %v549, 32
      %v864 = vpop.permute.xlu0 %863
      %865 = vrot.lane.b32.xlu0 %v561, 32
      %v866 = vpop.permute.xlu0 %865
      %867 = vrot.lane.b32.xlu0 %v573, 32
      %v868 = vpop.permute.xlu0 %867
      %869 = vrot.lane.b32.xlu0 %v585, 32
      %v870 = vpop.permute.xlu0 %869
      %871 = vrot.lane.b32.xlu0 %v597, 32
      %v872 = vpop.permute.xlu0 %871
      %873 = vrot.lane.b32.xlu0 %v609, 32
      %v874 = vpop.permute.xlu0 %873
      %875 = vrot.lane.b32.xlu0 %v621, 32
      %v876 = vpop.permute.xlu0 %875
      %877 = vrot.lane.b32.xlu0 %v633, 32
      %v878 = vpop.permute.xlu0 %877
      %879 = vrot.lane.b32.xlu0 %v645, 32
      %v880 = vpop.permute.xlu0 %879
      %881 = vrot.lane.b32.xlu0 %v657, 32
      %v882 = vpop.permute.xlu0 %881
      %883 = vrot.lane.b32.xlu0 %v669, 32
      %v884 = vpop.permute.xlu0 %883
      %885 = vrot.lane.b32.xlu0 %v681, 32
      %v886 = vpop.permute.xlu0 %885
      %887 = vrot.lane.b32.xlu0 %v693, 32
      %v888 = vpop.permute.xlu0 %887
      %889 = vrot.lane.b32.xlu0 %v858, 32
      %v890 = vpop.permute.xlu0 %889
      %v891 = vrot.slane %v811, 1
      %v892 = vrot.slane %v846, 1
      %v893 = vsel %vm726, %v891, %v892
      %894 = vrot.lane.b32.xlu0 %v732, 40
      %v895 = vpop.permute.xlu0 %894
      %896 = vrot.lane.b32.xlu0 %v735, 40
      %v897 = vpop.permute.xlu0 %896
      %898 = vrot.lane.b32.xlu0 %v738, 40
      %v899 = vpop.permute.xlu0 %898
      %900 = vrot.lane.b32.xlu0 %v741, 40
      %v901 = vpop.permute.xlu0 %900
      %902 = vrot.lane.b32.xlu0 %v744, 40
      %v903 = vpop.permute.xlu0 %902
      %904 = vrot.lane.b32.xlu0 %v747, 40
      %v905 = vpop.permute.xlu0 %904
      %906 = vrot.lane.b32.xlu0 %v750, 40
      %v907 = vpop.permute.xlu0 %906
      %908 = vrot.lane.b32.xlu0 %v753, 40
      %v909 = vpop.permute.xlu0 %908
      %910 = vrot.lane.b32.xlu0 %v756, 40
      %v911 = vpop.permute.xlu0 %910
      %912 = vrot.lane.b32.xlu0 %v759, 40
      %v913 = vpop.permute.xlu0 %912
      %914 = vrot.lane.b32.xlu0 %v762, 40
      %v915 = vpop.permute.xlu0 %914
      %916 = vrot.lane.b32.xlu0 %v765, 40
      %v917 = vpop.permute.xlu0 %916
      %918 = vrot.lane.b32.xlu0 %v768, 40
      %v919 = vpop.permute.xlu0 %918
      %920 = vrot.lane.b32.xlu0 %v771, 40
      %v921 = vpop.permute.xlu0 %920
      %922 = vrot.lane.b32.xlu0 %v774, 40
      %v923 = vpop.permute.xlu0 %922
      %924 = vrot.lane.b32.xlu0 %v893, 40
      %v925 = vpop.permute.xlu0 %924
      %v928 = vunpack.c.l.b16 %v370
      %v929 = vunpack.c.l.b16 %v371
      %v930 = vpack.c.b16 %v929, %v928
      %931 = vrot.lane.b32.xlu0 %v439, 48
      %v932 = vpop.permute.xlu0 %931
      %933 = vrot.lane.b32.xlu0 %v440, 48
      %v934 = vpop.permute.xlu0 %933
      %935 = vrot.lane.b32.xlu0 %v441, 48
      %v936 = vpop.permute.xlu0 %935
      %937 = vrot.lane.b32.xlu0 %v442, 48
      %v938 = vpop.permute.xlu0 %937
      %939 = vrot.lane.b32.xlu0 %v443, 48
      %v940 = vpop.permute.xlu0 %939
      %941 = vrot.lane.b32.xlu0 %v444, 48
      %v942 = vpop.permute.xlu0 %941
      %943 = vrot.lane.b32.xlu0 %v445, 48
      %v944 = vpop.permute.xlu0 %943
      %945 = vrot.lane.b32.xlu0 %v446, 48
      %v946 = vpop.permute.xlu0 %945
      %947 = vrot.lane.b32.xlu0 %v447, 48
      %v948 = vpop.permute.xlu0 %947
      %949 = vrot.lane.b32.xlu0 %v448, 48
      %v950 = vpop.permute.xlu0 %949
      %951 = vrot.lane.b32.xlu0 %v449, 48
      %v952 = vpop.permute.xlu0 %951
      %953 = vrot.lane.b32.xlu0 %v450, 48
      %v954 = vpop.permute.xlu0 %953
      %955 = vrot.lane.b32.xlu0 %v451, 48
      %v956 = vpop.permute.xlu0 %955
      %957 = vrot.lane.b32.xlu0 %v452, 48
      %v958 = vpop.permute.xlu0 %957
      %959 = vrot.lane.b32.xlu0 %v811, 48
      %v960 = vpop.permute.xlu0 %959
      %961 = vrot.lane.b32.xlu0 %v930, 48
      %v962 = vpop.permute.xlu0 %961
      %v964 = vunpack.c.l.b16 %v372
      %v965 = vpack.c.b16 %v964, %v964
      %v967 = vshrl.u32 %v930, 16
      %v969 = vshll.u32 %v930, 16
      %v971 = vrot.slane %v969, 1
      %v972 = vor.u32 %v967, %v971
      %v974 = vshll.u32 %v965, 16
      %v976 = vrot.slane %v974, 1
      %v977 = vsel %vm501, %v972, %v976
      %978 = vrot.lane.b32.xlu0 %v537, 56
      %v979 = vpop.permute.xlu0 %978
      %980 = vrot.lane.b32.xlu0 %v549, 56
      %v981 = vpop.permute.xlu0 %980
      %982 = vrot.lane.b32.xlu0 %v561, 56
      %v983 = vpop.permute.xlu0 %982
      %984 = vrot.lane.b32.xlu0 %v573, 56
      %v985 = vpop.permute.xlu0 %984
      %986 = vrot.lane.b32.xlu0 %v585, 56
      %v987 = vpop.permute.xlu0 %986
      %988 = vrot.lane.b32.xlu0 %v597, 56
      %v989 = vpop.permute.xlu0 %988
      %990 = vrot.lane.b32.xlu0 %v609, 56
      %v991 = vpop.permute.xlu0 %990
      %992 = vrot.lane.b32.xlu0 %v621, 56
      %v993 = vpop.permute.xlu0 %992
      %994 = vrot.lane.b32.xlu0 %v633, 56
      %v995 = vpop.permute.xlu0 %994
      %996 = vrot.lane.b32.xlu0 %v645, 56
      %v997 = vpop.permute.xlu0 %996
      %998 = vrot.lane.b32.xlu0 %v657, 56
      %v999 = vpop.permute.xlu0 %998
      %1000 = vrot.lane.b32.xlu0 %v669, 56
      %v1001 = vpop.permute.xlu0 %1000
      %1002 = vrot.lane.b32.xlu0 %v681, 56
      %v1003 = vpop.permute.xlu0 %1002
      %1004 = vrot.lane.b32.xlu0 %v693, 56
      %v1005 = vpop.permute.xlu0 %1004
      %1006 = vrot.lane.b32.xlu0 %v858, 56
      %v1007 = vpop.permute.xlu0 %1006
      %1008 = vrot.lane.b32.xlu0 %v977, 56
      %v1009 = vpop.permute.xlu0 %1008
      %v1010 = vrot.slane %v930, 1
      %v1011 = vrot.slane %v965, 1
      %v1012 = vsel %vm726, %v1010, %v1011
      %1013 = vrot.lane.b32.xlu0 %v735, 64
      %v1014 = vpop.permute.xlu0 %1013
      %1015 = vrot.lane.b32.xlu0 %v738, 64
      %v1016 = vpop.permute.xlu0 %1015
      %1017 = vrot.lane.b32.xlu0 %v741, 64
      %v1018 = vpop.permute.xlu0 %1017
      %1019 = vrot.lane.b32.xlu0 %v744, 64
      %v1020 = vpop.permute.xlu0 %1019
      %1021 = vrot.lane.b32.xlu0 %v747, 64
      %v1022 = vpop.permute.xlu0 %1021
      %1023 = vrot.lane.b32.xlu0 %v750, 64
      %v1024 = vpop.permute.xlu0 %1023
      %1025 = vrot.lane.b32.xlu0 %v753, 64
      %v1026 = vpop.permute.xlu0 %1025
      %1027 = vrot.lane.b32.xlu0 %v756, 64
      %v1028 = vpop.permute.xlu0 %1027
      %1029 = vrot.lane.b32.xlu0 %v759, 64
      %v1030 = vpop.permute.xlu0 %1029
      %1031 = vrot.lane.b32.xlu0 %v762, 64
      %v1032 = vpop.permute.xlu0 %1031
      %1033 = vrot.lane.b32.xlu0 %v765, 64
      %v1034 = vpop.permute.xlu0 %1033
      %1035 = vrot.lane.b32.xlu0 %v768, 64
      %v1036 = vpop.permute.xlu0 %1035
      %1037 = vrot.lane.b32.xlu0 %v771, 64
      %v1038 = vpop.permute.xlu0 %1037
      %1039 = vrot.lane.b32.xlu0 %v774, 64
      %v1040 = vpop.permute.xlu0 %1039
      %1041 = vrot.lane.b32.xlu0 %v893, 64
      %v1042 = vpop.permute.xlu0 %1041
      %1043 = vrot.lane.b32.xlu0 %v1012, 64
      %v1044 = vpop.permute.xlu0 %1043
      %vm1045 = vcmask 64512
      %v1047 = vsel %vm1045, %v437, %v695
      %v1049 = vsel %vm1045, %v438, %v697
      %v1051 = vsel %vm1045, %v439, %v699
      %v1053 = vsel %vm1045, %v440, %v701
      %v1055 = vsel %vm1045, %v441, %v703
      %v1057 = vsel %vm1045, %v442, %v705
      %v1059 = vsel %vm1045, %v443, %v707
      %v1061 = vsel %vm1045, %v444, %v709
      %v1063 = vsel %vm1045, %v445, %v711
      %v1065 = vsel %vm1045, %v446, %v713
      %v1067 = vsel %vm1045, %v447, %v715
      %v1069 = vsel %vm1045, %v448, %v717
      %v1071 = vsel %vm1045, %v449, %v719
      %v1073 = vsel %vm1045, %v450, %v721
      %v1075 = vsel %vm1045, %v451, %v723
      %v1077 = vsel %vm1045, %v452, %v725
      %vm1078 = vcmask 130048
      %v1080 = vsel %vm1078, %v1047, %v776
      %v1082 = vsel %vm1078, %v1049, %v778
      %v1084 = vsel %vm1078, %v1051, %v780
      %v1086 = vsel %vm1078, %v1053, %v782
      %v1088 = vsel %vm1078, %v1055, %v784
      %v1090 = vsel %vm1078, %v1057, %v786
      %v1092 = vsel %vm1078, %v1059, %v788
      %v1094 = vsel %vm1078, %v1061, %v790
      %v1096 = vsel %vm1078, %v1063, %v792
      %v1098 = vsel %vm1078, %v1065, %v794
      %v1100 = vsel %vm1078, %v1067, %v796
      %v1102 = vsel %vm1078, %v1069, %v798
      %v1104 = vsel %vm1078, %v1071, %v800
      %v1106 = vsel %vm1078, %v1073, %v802
      %v1108 = vsel %vm1078, %v1075, %v804
      %v1110 = vsel %vm1078, %v1077, %v806
      %vm1111 = vcmask 195584
      %v1113 = vsel %vm1111, %v1080, %v813
      %v1115 = vsel %vm1111, %v1082, %v815
      %v1117 = vsel %vm1111, %v1084, %v817
      %v1119 = vsel %vm1111, %v1086, %v819
      %v1121 = vsel %vm1111, %v1088, %v821
      %v1123 = vsel %vm1111, %v1090, %v823
      %v1125 = vsel %vm1111, %v1092, %v825
      %v1127 = vsel %vm1111, %v1094, %v827
      %v1129 = vsel %vm1111, %v1096, %v829
      %v1131 = vsel %vm1111, %v1098, %v831
      %v1133 = vsel %vm1111, %v1100, %v833
      %v1135 = vsel %vm1111, %v1102, %v835
      %v1137 = vsel %vm1111, %v1104, %v837
      %v1139 = vsel %vm1111, %v1106, %v839
      %v1141 = vsel %vm1111, %v1108, %v841
      %v1143 = vsel %vm1111, %v1110, %v843
      %vm1144 = vcmask 261120
      %v1146 = vsel %vm1144, %v1113, %v860
      %v1148 = vsel %vm1144, %v1115, %v862
      %v1150 = vsel %vm1144, %v1117, %v864
      %v1152 = vsel %vm1144, %v1119, %v866
      %v1154 = vsel %vm1144, %v1121, %v868
      %v1156 = vsel %vm1144, %v1123, %v870
      %v1158 = vsel %vm1144, %v1125, %v872
      %v1160 = vsel %vm1144, %v1127, %v874
      %v1162 = vsel %vm1144, %v1129, %v876
      %v1164 = vsel %vm1144, %v1131, %v878
      %v1166 = vsel %vm1144, %v1133, %v880
      %v1168 = vsel %vm1144, %v1135, %v882
      %v1170 = vsel %vm1144, %v1137, %v884
      %v1172 = vsel %vm1144, %v1139, %v886
      %v1174 = vsel %vm1144, %v1141, %v888
      %v1176 = vsel %vm1144, %v1143, %v890
      %vm1177 = vcmask 326656
      %v1179 = vsel %vm1177, %v1146, %v895
      %v1181 = vsel %vm1177, %v1148, %v897
      %v1183 = vsel %vm1177, %v1150, %v899
      %v1185 = vsel %vm1177, %v1152, %v901
      %v1187 = vsel %vm1177, %v1154, %v903
      %v1189 = vsel %vm1177, %v1156, %v905
      %v1191 = vsel %vm1177, %v1158, %v907
      %v1193 = vsel %vm1177, %v1160, %v909
      %v1195 = vsel %vm1177, %v1162, %v911
      %v1197 = vsel %vm1177, %v1164, %v913
      %v1199 = vsel %vm1177, %v1166, %v915
      %v1201 = vsel %vm1177, %v1168, %v917
      %v1203 = vsel %vm1177, %v1170, %v919
      %v1205 = vsel %vm1177, %v1172, %v921
      %v1207 = vsel %vm1177, %v1174, %v923
      %v1209 = vsel %vm1177, %v1176, %v925
      %vm1210 = vcmask 392192
      %v1212 = vsel %vm1210, %v1179, %v932
      %v1214 = vsel %vm1210, %v1181, %v934
      %v1216 = vsel %vm1210, %v1183, %v936
      %v1218 = vsel %vm1210, %v1185, %v938
      %v1220 = vsel %vm1210, %v1187, %v940
      %v1222 = vsel %vm1210, %v1189, %v942
      %v1224 = vsel %vm1210, %v1191, %v944
      %v1226 = vsel %vm1210, %v1193, %v946
      %v1228 = vsel %vm1210, %v1195, %v948
      %v1230 = vsel %vm1210, %v1197, %v950
      %v1232 = vsel %vm1210, %v1199, %v952
      %v1234 = vsel %vm1210, %v1201, %v954
      %v1236 = vsel %vm1210, %v1203, %v956
      %v1238 = vsel %vm1210, %v1205, %v958
      %v1240 = vsel %vm1210, %v1207, %v960
      %v1242 = vsel %vm1210, %v1209, %v962
      %vm1243 = vcmask 457728
      %v1245 = vsel %vm1243, %v1212, %v979
      %v1247 = vsel %vm1243, %v1214, %v981
      %v1249 = vsel %vm1243, %v1216, %v983
      %v1251 = vsel %vm1243, %v1218, %v985
      %v1253 = vsel %vm1243, %v1220, %v987
      %v1255 = vsel %vm1243, %v1222, %v989
      %v1257 = vsel %vm1243, %v1224, %v991
      %v1259 = vsel %vm1243, %v1226, %v993
      %v1261 = vsel %vm1243, %v1228, %v995
      %v1263 = vsel %vm1243, %v1230, %v997
      %v1265 = vsel %vm1243, %v1232, %v999
      %v1267 = vsel %vm1243, %v1234, %v1001
      %v1269 = vsel %vm1243, %v1236, %v1003
      %v1271 = vsel %vm1243, %v1238, %v1005
      %v1273 = vsel %vm1243, %v1240, %v1007
      %v1275 = vsel %vm1243, %v1242, %v1009
      %vm1276 = vcmask 523264
      %v1278 = vsel %vm1276, %v1245, %v1014
      %v1280 = vsel %vm1276, %v1247, %v1016
      %v1282 = vsel %vm1276, %v1249, %v1018
      %v1284 = vsel %vm1276, %v1251, %v1020
      %v1286 = vsel %vm1276, %v1253, %v1022
      %v1288 = vsel %vm1276, %v1255, %v1024
      %v1290 = vsel %vm1276, %v1257, %v1026
      %v1292 = vsel %vm1276, %v1259, %v1028
      %v1294 = vsel %vm1276, %v1261, %v1030
      %v1296 = vsel %vm1276, %v1263, %v1032
      %v1298 = vsel %vm1276, %v1265, %v1034
      %v1300 = vsel %vm1276, %v1267, %v1036
      %v1302 = vsel %vm1276, %v1269, %v1038
      %v1304 = vsel %vm1276, %v1271, %v1040
      %v1306 = vsel %vm1276, %v1273, %v1042
      %v1308 = vsel %vm1276, %v1275, %v1044
      %v1309 = vld [vmem:[%s2] sm:$0xf]
      %v1310 = vld [vmem:[%s2 + $0x4] sm:$0xf]
      %v1311 = vld [vmem:[%s2 + $0x8] sm:$0xf]
      %v1312 = vld [vmem:[%s2 + $0xc] sm:$0xf]
      %v1313 = vld [vmem:[%s2 + $0x10] sm:$0xf]
      %v1314 = vld [vmem:[%s2 + $0x14] sm:$0xf]
      %v1315 = vld [vmem:[%s2 + $0x18] sm:$0xf]
      %v1316 = vld [vmem:[%s2 + $0x1c] sm:$0xf]
      %v1317 = vld [vmem:[%s2 + $0x20] sm:$0xf]
      %v1318 = vld [vmem:[%s3] sm:$0x1]
      %v1320 = vlaneseq
      %v1321 = vshrl.u32 %v1320, 7
      %v1322 = vsub.s32 0, %v1321
      %v1323 = vrot.slane %v1318, %v1322
      %v1334 = vunpack.c.l.b16 %v1309
      %v1335 = vunpack.c.l.b16 %v1310
      %v1336 = vunpack.c.l.b16 %v1311
      %v1337 = vunpack.c.l.b16 %v1312
      %v1338 = vunpack.c.l.b16 %v1313
      %v1339 = vunpack.c.l.b16 %v1314
      %v1340 = vunpack.c.l.b16 %v1315
      %v1341 = vunpack.c.l.b16 %v1316
      %v1342 = vunpack.c.l.b16 %v1317
      %v1343 = vpack.c.b16 %v1335, %v1334
      %v1344 = vpack.c.b16 %v1337, %v1336
      %v1345 = vpack.c.b16 %v1339, %v1338
      %v1346 = vpack.c.b16 %v1341, %v1340
      %v1347 = vpack.c.b16 %v1342, %v1342
      %vm1352 = vcmask 588800
      %v1353 = vsel %vm1352, %v1278, 0
      %v1355 = vsel %vm1352, %v1280, 0
      %v1357 = vsel %vm1352, %v1282, 0
      %v1359 = vsel %vm1352, %v1284, 0
      %v1361 = vsel %vm1352, %v1286, 0
      %v1363 = vsel %vm1352, %v1288, 0
      %v1365 = vsel %vm1352, %v1290, 0
      %v1367 = vsel %vm1352, %v1292, 0
      %v1369 = vsel %vm1352, %v1294, 0
      %v1371 = vsel %vm1352, %v1296, 0
      %v1373 = vsel %vm1352, %v1298, 0
      %v1375 = vsel %vm1352, %v1300, 0
      %v1377 = vsel %vm1352, %v1302, 0
      %v1379 = vsel %vm1352, %v1304, 0
      %v1381 = vsel %vm1352, %v1306, 0
      %v1383 = vsel %vm1352, %v1308, 0
      %vm1385 = vcmask 1043456
      %v1387 = vsel %vm1385, %v1347, 0
      %1389 = vmatprep.subr.bf16.mxu0 0
      %1390 = vmatpush1.bf16.msra.mxu0 0
      %1391 = vmatprep.subr.bf16.mxu0 0
      %1392 = vmatpush1.bf16.msra.mxu0 0
      %1393 = vmatprep.subr.bf16.mxu0 0
      %1394 = vmatpush1.bf16.msra.mxu0 0
      %1395 = vmatprep.subr.bf16.mxu0 0
      %1396 = vmatpush1.bf16.msra.mxu0 %v1387
      %1397 = vmatprep.subr.bf16.mxu0 0
      %1398 = vmatpush1.bf16.msra.mxu0 %v1346
      %1399 = vmatprep.subr.bf16.mxu0 0
      %1400 = vmatpush1.bf16.msra.mxu0 %v1345
      %1401 = vmatprep.subr.bf16.mxu0 0
      %1402 = vmatpush1.bf16.msra.mxu0 %v1344
      %1403 = vmatprep.subr.bf16.mxu0 0
      %1404 = vmatpush1.bf16.msra.mxu0 %v1343
      %1405 = vmatprep.subr.bf16.mxu0 0
      %1406 = vmatpush2.bf16.msra.mxu0 0
      %1407 = vmatprep.subr.bf16.mxu0 0
      %1408 = vmatpush2.bf16.msra.mxu0 0
      %1409 = vmatprep.subr.bf16.mxu0 0
      %1410 = vmatpush2.bf16.msra.mxu0 0
      %1411 = vmatprep.subr.bf16.mxu0 0
      %1412 = vmatpush2.bf16.msra.mxu0 0
      %1413 = vmatprep.subr.bf16.mxu0 0
      %1414 = vmatpush2.bf16.msra.mxu0 0
      %1415 = vmatprep.subr.bf16.mxu0 0
      %1416 = vmatpush2.bf16.msra.mxu0 0
      %1417 = vmatprep.subr.bf16.mxu0 0
      %1418 = vmatpush2.bf16.msra.mxu0 0
      %1419 = vmatprep.subr.bf16.mxu0 0
      %1420 = vmatpush2.bf16.msra.mxu0 0
      %1421 = vmatprep.mubr.bf16.mxu0 0
      %1422 = vmatmul.mubr.bf16.gmra.mxu0 %v1353
      %v1423 = vpop.f32.mrf.mxu0
      %v1424 = vadd.f32 %v1323, %v1423
      %v1425 = vpop.f32.mrf.mxu0
      %v1426 = vpop.f32.mrf.mxu0
      %v1427 = vadd.f32 %v1323, %v1426
      %v1428 = vpop.f32.mrf.mxu0
      %1429 = vmatprep.mubr.bf16.mxu0 0
      %1430 = vmatmul.mubr.bf16.gmra.mxu0 %v1355
      %v1431 = vpop.f32.mrf.mxu0
      %v1432 = vadd.f32 %v1323, %v1431
      %v1433 = vpop.f32.mrf.mxu0
      %v1434 = vpop.f32.mrf.mxu0
      %v1435 = vadd.f32 %v1323, %v1434
      %v1436 = vpop.f32.mrf.mxu0
      %1437 = vmatprep.mubr.bf16.mxu0 0
      %1438 = vmatmul.mubr.bf16.gmra.mxu0 %v1357
      %v1439 = vpop.f32.mrf.mxu0
      %v1440 = vadd.f32 %v1323, %v1439
      %v1441 = vpop.f32.mrf.mxu0
      %v1442 = vpop.f32.mrf.mxu0
      %v1443 = vadd.f32 %v1323, %v1442
      %v1444 = vpop.f32.mrf.mxu0
      %1445 = vmatprep.mubr.bf16.mxu0 0
      %1446 = vmatmul.mubr.bf16.gmra.mxu0 %v1359
      %v1447 = vpop.f32.mrf.mxu0
      %v1448 = vadd.f32 %v1323, %v1447
      %v1449 = vpop.f32.mrf.mxu0
      %v1450 = vpop.f32.mrf.mxu0
      %v1451 = vadd.f32 %v1323, %v1450
      %v1452 = vpop.f32.mrf.mxu0
      %1453 = vmatprep.mubr.bf16.mxu0 0
      %1454 = vmatmul.mubr.bf16.gmra.mxu0 %v1361
      %v1455 = vpop.f32.mrf.mxu0
      %v1456 = vadd.f32 %v1323, %v1455
      %v1457 = vpop.f32.mrf.mxu0
      %v1458 = vpop.f32.mrf.mxu0
      %v1459 = vadd.f32 %v1323, %v1458
      %v1460 = vpop.f32.mrf.mxu0
      %1461 = vmatprep.mubr.bf16.mxu0 0
      %1462 = vmatmul.mubr.bf16.gmra.mxu0 %v1363
      %v1463 = vpop.f32.mrf.mxu0
      %v1464 = vadd.f32 %v1323, %v1463
      %v1465 = vpop.f32.mrf.mxu0
      %v1466 = vpop.f32.mrf.mxu0
      %v1467 = vadd.f32 %v1323, %v1466
      %v1468 = vpop.f32.mrf.mxu0
      %1469 = vmatprep.mubr.bf16.mxu0 0
      %1470 = vmatmul.mubr.bf16.gmra.mxu0 %v1365
      %v1471 = vpop.f32.mrf.mxu0
      %v1472 = vadd.f32 %v1323, %v1471
      %v1473 = vpop.f32.mrf.mxu0
      %v1474 = vpop.f32.mrf.mxu0
      %v1475 = vadd.f32 %v1323, %v1474
      %v1476 = vpop.f32.mrf.mxu0
      %1477 = vmatprep.mubr.bf16.mxu0 0
      %1478 = vmatmul.mubr.bf16.gmra.mxu0 %v1367
      %v1479 = vpop.f32.mrf.mxu0
      %v1480 = vadd.f32 %v1323, %v1479
      %v1481 = vpop.f32.mrf.mxu0
      %v1482 = vpop.f32.mrf.mxu0
      %v1483 = vadd.f32 %v1323, %v1482
      %v1484 = vpop.f32.mrf.mxu0
      %1485 = vmatprep.mubr.bf16.mxu0 0
      %1486 = vmatmul.mubr.bf16.gmra.mxu0 %v1369
      %v1487 = vpop.f32.mrf.mxu0
      %v1488 = vadd.f32 %v1323, %v1487
      %v1489 = vpop.f32.mrf.mxu0
      %v1490 = vpop.f32.mrf.mxu0
      %v1491 = vadd.f32 %v1323, %v1490
      %v1492 = vpop.f32.mrf.mxu0
      %1493 = vmatprep.mubr.bf16.mxu0 0
      %1494 = vmatmul.mubr.bf16.gmra.mxu0 %v1371
      %v1495 = vpop.f32.mrf.mxu0
      %v1496 = vadd.f32 %v1323, %v1495
      %v1497 = vpop.f32.mrf.mxu0
      %v1498 = vpop.f32.mrf.mxu0
      %v1499 = vadd.f32 %v1323, %v1498
      %v1500 = vpop.f32.mrf.mxu0
      %1501 = vmatprep.mubr.bf16.mxu0 0
      %1502 = vmatmul.mubr.bf16.gmra.mxu0 %v1373
      %v1503 = vpop.f32.mrf.mxu0
      %v1504 = vadd.f32 %v1323, %v1503
      %v1505 = vpop.f32.mrf.mxu0
      %v1506 = vpop.f32.mrf.mxu0
      %v1507 = vadd.f32 %v1323, %v1506
      %v1508 = vpop.f32.mrf.mxu0
      %1509 = vmatprep.mubr.bf16.mxu0 0
      %1510 = vmatmul.mubr.bf16.gmra.mxu0 %v1375
      %v1511 = vpop.f32.mrf.mxu0
      %v1512 = vadd.f32 %v1323, %v1511
      %v1513 = vpop.f32.mrf.mxu0
      %v1514 = vpop.f32.mrf.mxu0
      %v1515 = vadd.f32 %v1323, %v1514
      %v1516 = vpop.f32.mrf.mxu0
      %1517 = vmatprep.mubr.bf16.mxu0 0
      %1518 = vmatmul.mubr.bf16.gmra.mxu0 %v1377
      %v1519 = vpop.f32.mrf.mxu0
      %v1520 = vadd.f32 %v1323, %v1519
      %v1521 = vpop.f32.mrf.mxu0
      %v1522 = vpop.f32.mrf.mxu0
      %v1523 = vadd.f32 %v1323, %v1522
      %v1524 = vpop.f32.mrf.mxu0
      %1525 = vmatprep.mubr.bf16.mxu0 0
      %1526 = vmatmul.mubr.bf16.gmra.mxu0 %v1379
      %v1527 = vpop.f32.mrf.mxu0
      %v1528 = vadd.f32 %v1323, %v1527
      %v1529 = vpop.f32.mrf.mxu0
      %v1530 = vpop.f32.mrf.mxu0
      %v1531 = vadd.f32 %v1323, %v1530
      %v1532 = vpop.f32.mrf.mxu0
      %1533 = vmatprep.mubr.bf16.mxu0 0
      %1534 = vmatmul.mubr.bf16.gmra.mxu0 %v1381
      %v1535 = vpop.f32.mrf.mxu0
      %v1536 = vadd.f32 %v1323, %v1535
      %v1537 = vpop.f32.mrf.mxu0
      %v1538 = vpop.f32.mrf.mxu0
      %v1539 = vadd.f32 %v1323, %v1538
      %v1540 = vpop.f32.mrf.mxu0
      %1541 = vmatprep.mubr.bf16.mxu0 0
      %1542 = vmatmul.mubr.bf16.gmra.mxu0 %v1383
      %v1543 = vpop.f32.mrf.mxu0
      %v1544 = vadd.f32 %v1323, %v1543
      %v1545 = vpop.f32.mrf.mxu0
      %v1546 = vpop.f32.mrf.mxu0
      %v1547 = vadd.f32 %v1323, %v1546
      %v1548 = vpop.f32.mrf.mxu0
      %1549 = vdwg.mxu0
      %v1550 = vmax.f32 %v1424, 0.0
      %v1551 = vmax.f32 %v1427, 0.0
      %v1552 = vmax.f32 %v1432, 0.0
      %v1553 = vmax.f32 %v1435, 0.0
      %v1554 = vmax.f32 %v1440, 0.0
      %v1555 = vmax.f32 %v1443, 0.0
      %v1556 = vmax.f32 %v1448, 0.0
      %v1557 = vmax.f32 %v1451, 0.0
      %v1558 = vmax.f32 %v1456, 0.0
      %v1559 = vmax.f32 %v1459, 0.0
      %v1560 = vmax.f32 %v1464, 0.0
      %v1561 = vmax.f32 %v1467, 0.0
      %v1562 = vmax.f32 %v1472, 0.0
      %v1563 = vmax.f32 %v1475, 0.0
      %v1564 = vmax.f32 %v1480, 0.0
      %v1565 = vmax.f32 %v1483, 0.0
      %v1566 = vmax.f32 %v1488, 0.0
      %v1567 = vmax.f32 %v1491, 0.0
      %v1568 = vmax.f32 %v1496, 0.0
      %v1569 = vmax.f32 %v1499, 0.0
      %v1570 = vmax.f32 %v1504, 0.0
      %v1571 = vmax.f32 %v1507, 0.0
      %v1572 = vmax.f32 %v1512, 0.0
      %v1573 = vmax.f32 %v1515, 0.0
      %v1574 = vmax.f32 %v1520, 0.0
      %v1575 = vmax.f32 %v1523, 0.0
      %v1576 = vmax.f32 %v1528, 0.0
      %v1577 = vmax.f32 %v1531, 0.0
      %v1578 = vmax.f32 %v1536, 0.0
      %v1579 = vmax.f32 %v1539, 0.0
      %v1580 = vmax.f32 %v1544, 0.0
      %v1581 = vmax.f32 %v1547, 0.0
      %v1583 = vunpack.c.l.s4 1966171168
      %v1584 = vunpack.c.0.s8 %v1583
      %v1585 = vlaneseq
      %v1586 = vshrl.u32 %v1585, 7
      %v1587 = vsub.s32 %v1584, %v1586
      %v1588 = vrot.slane %v1550, %v1587
      %v1590 = vunpack.c.l.s4 1966171168
      %v1591 = vunpack.c.0.s8 %v1590
      %v1592 = vlaneseq
      %v1593 = vshrl.u32 %v1592, 7
      %v1594 = vsub.s32 %v1591, %v1593
      %v1595 = vrot.slane %v1551, %v1594
      %v1597 = vunpack.c.l.s4 1966171168
      %v1598 = vunpack.c.0.s8 %v1597
      %v1599 = vlaneseq
      %v1600 = vshrl.u32 %v1599, 7
      %v1601 = vsub.s32 %v1598, %v1600
      %v1602 = vrot.slane %v1552, %v1601
      %v1604 = vunpack.c.l.s4 1966171168
      %v1605 = vunpack.c.0.s8 %v1604
      %v1606 = vlaneseq
      %v1607 = vshrl.u32 %v1606, 7
      %v1608 = vsub.s32 %v1605, %v1607
      %v1609 = vrot.slane %v1553, %v1608
      %v1611 = vunpack.c.l.s4 1966171168
      %v1612 = vunpack.c.0.s8 %v1611
      %v1613 = vlaneseq
      %v1614 = vshrl.u32 %v1613, 7
      %v1615 = vsub.s32 %v1612, %v1614
      %v1616 = vrot.slane %v1554, %v1615
      %v1618 = vunpack.c.l.s4 1966171168
      %v1619 = vunpack.c.0.s8 %v1618
      %v1620 = vlaneseq
      %v1621 = vshrl.u32 %v1620, 7
      %v1622 = vsub.s32 %v1619, %v1621
      %v1623 = vrot.slane %v1555, %v1622
      %v1625 = vunpack.c.l.s4 1966171168
      %v1626 = vunpack.c.0.s8 %v1625
      %v1627 = vlaneseq
      %v1628 = vshrl.u32 %v1627, 7
      %v1629 = vsub.s32 %v1626, %v1628
      %v1630 = vrot.slane %v1556, %v1629
      %v1632 = vunpack.c.l.s4 1966171168
      %v1633 = vunpack.c.0.s8 %v1632
      %v1634 = vlaneseq
      %v1635 = vshrl.u32 %v1634, 7
      %v1636 = vsub.s32 %v1633, %v1635
      %v1637 = vrot.slane %v1557, %v1636
      %v1639 = vunpack.c.l.s4 1966171168
      %v1640 = vunpack.c.0.s8 %v1639
      %v1641 = vlaneseq
      %v1642 = vshrl.u32 %v1641, 7
      %v1643 = vsub.s32 %v1640, %v1642
      %v1644 = vrot.slane %v1558, %v1643
      %v1646 = vunpack.c.l.s4 1966171168
      %v1647 = vunpack.c.0.s8 %v1646
      %v1648 = vlaneseq
      %v1649 = vshrl.u32 %v1648, 7
      %v1650 = vsub.s32 %v1647, %v1649
      %v1651 = vrot.slane %v1559, %v1650
      %v1653 = vunpack.c.l.s4 1966171168
      %v1654 = vunpack.c.0.s8 %v1653
      %v1655 = vlaneseq
      %v1656 = vshrl.u32 %v1655, 7
      %v1657 = vsub.s32 %v1654, %v1656
      %v1658 = vrot.slane %v1560, %v1657
      %v1660 = vunpack.c.l.s4 1966171168
      %v1661 = vunpack.c.0.s8 %v1660
      %v1662 = vlaneseq
      %v1663 = vshrl.u32 %v1662, 7
      %v1664 = vsub.s32 %v1661, %v1663
      %v1665 = vrot.slane %v1561, %v1664
      %v1667 = vunpack.c.l.s4 1966171168
      %v1668 = vunpack.c.0.s8 %v1667
      %v1669 = vlaneseq
      %v1670 = vshrl.u32 %v1669, 7
      %v1671 = vsub.s32 %v1668, %v1670
      %v1672 = vrot.slane %v1562, %v1671
      %v1674 = vunpack.c.l.s4 1966171168
      %v1675 = vunpack.c.0.s8 %v1674
      %v1676 = vlaneseq
      %v1677 = vshrl.u32 %v1676, 7
      %v1678 = vsub.s32 %v1675, %v1677
      %v1679 = vrot.slane %v1563, %v1678
      %v1681 = vunpack.c.l.s4 1966171168
      %v1682 = vunpack.c.0.s8 %v1681
      %v1683 = vlaneseq
      %v1684 = vshrl.u32 %v1683, 7
      %v1685 = vsub.s32 %v1682, %v1684
      %v1686 = vrot.slane %v1564, %v1685
      %v1688 = vunpack.c.l.s4 1966171168
      %v1689 = vunpack.c.0.s8 %v1688
      %v1690 = vlaneseq
      %v1691 = vshrl.u32 %v1690, 7
      %v1692 = vsub.s32 %v1689, %v1691
      %v1693 = vrot.slane %v1565, %v1692
      %v1695 = vunpack.c.l.s4 1966171168
      %v1696 = vunpack.c.0.s8 %v1695
      %v1697 = vlaneseq
      %v1698 = vshrl.u32 %v1697, 7
      %v1699 = vsub.s32 %v1696, %v1698
      %v1700 = vrot.slane %v1566, %v1699
      %v1702 = vunpack.c.l.s4 1966171168
      %v1703 = vunpack.c.0.s8 %v1702
      %v1704 = vlaneseq
      %v1705 = vshrl.u32 %v1704, 7
      %v1706 = vsub.s32 %v1703, %v1705
      %v1707 = vrot.slane %v1567, %v1706
      %v1709 = vunpack.c.l.s4 1966171168
      %v1710 = vunpack.c.0.s8 %v1709
      %v1711 = vlaneseq
      %v1712 = vshrl.u32 %v1711, 7
      %v1713 = vsub.s32 %v1710, %v1712
      %v1714 = vrot.slane %v1568, %v1713
      %v1716 = vunpack.c.l.s4 1966171168
      %v1717 = vunpack.c.0.s8 %v1716
      %v1718 = vlaneseq
      %v1719 = vshrl.u32 %v1718, 7
      %v1720 = vsub.s32 %v1717, %v1719
      %v1721 = vrot.slane %v1569, %v1720
      %v1723 = vunpack.c.l.s4 1966171168
      %v1724 = vunpack.c.0.s8 %v1723
      %v1725 = vlaneseq
      %v1726 = vshrl.u32 %v1725, 7
      %v1727 = vsub.s32 %v1724, %v1726
      %v1728 = vrot.slane %v1570, %v1727
      %v1730 = vunpack.c.l.s4 1966171168
      %v1731 = vunpack.c.0.s8 %v1730
      %v1732 = vlaneseq
      %v1733 = vshrl.u32 %v1732, 7
      %v1734 = vsub.s32 %v1731, %v1733
      %v1735 = vrot.slane %v1571, %v1734
      %v1737 = vunpack.c.l.s4 1966171168
      %v1738 = vunpack.c.0.s8 %v1737
      %v1739 = vlaneseq
      %v1740 = vshrl.u32 %v1739, 7
      %v1741 = vsub.s32 %v1738, %v1740
      %v1742 = vrot.slane %v1572, %v1741
      %v1744 = vunpack.c.l.s4 1966171168
      %v1745 = vunpack.c.0.s8 %v1744
      %v1746 = vlaneseq
      %v1747 = vshrl.u32 %v1746, 7
      %v1748 = vsub.s32 %v1745, %v1747
      %v1749 = vrot.slane %v1573, %v1748
      %v1751 = vunpack.c.l.s4 1966171168
      %v1752 = vunpack.c.0.s8 %v1751
      %v1753 = vlaneseq
      %v1754 = vshrl.u32 %v1753, 7
      %v1755 = vsub.s32 %v1752, %v1754
      %v1756 = vrot.slane %v1574, %v1755
      %v1758 = vunpack.c.l.s4 1966171168
      %v1759 = vunpack.c.0.s8 %v1758
      %v1760 = vlaneseq
      %v1761 = vshrl.u32 %v1760, 7
      %v1762 = vsub.s32 %v1759, %v1761
      %v1763 = vrot.slane %v1575, %v1762
      %v1765 = vunpack.c.l.s4 1966171168
      %v1766 = vunpack.c.0.s8 %v1765
      %v1767 = vlaneseq
      %v1768 = vshrl.u32 %v1767, 7
      %v1769 = vsub.s32 %v1766, %v1768
      %v1770 = vrot.slane %v1576, %v1769
      %v1772 = vunpack.c.l.s4 1966171168
      %v1773 = vunpack.c.0.s8 %v1772
      %v1774 = vlaneseq
      %v1775 = vshrl.u32 %v1774, 7
      %v1776 = vsub.s32 %v1773, %v1775
      %v1777 = vrot.slane %v1577, %v1776
      %v1779 = vunpack.c.l.s4 1966171168
      %v1780 = vunpack.c.0.s8 %v1779
      %v1781 = vlaneseq
      %v1782 = vshrl.u32 %v1781, 7
      %v1783 = vsub.s32 %v1780, %v1782
      %v1784 = vrot.slane %v1578, %v1783
      %v1786 = vunpack.c.l.s4 1966171168
      %v1787 = vunpack.c.0.s8 %v1786
      %v1788 = vlaneseq
      %v1789 = vshrl.u32 %v1788, 7
      %v1790 = vsub.s32 %v1787, %v1789
      %v1791 = vrot.slane %v1579, %v1790
      %v1793 = vunpack.c.l.s4 1966171168
      %v1794 = vunpack.c.0.s8 %v1793
      %v1795 = vlaneseq
      %v1796 = vshrl.u32 %v1795, 7
      %v1797 = vsub.s32 %v1794, %v1796
      %v1798 = vrot.slane %v1580, %v1797
      %v1800 = vunpack.c.l.s4 1966171168
      %v1801 = vunpack.c.0.s8 %v1800
      %v1802 = vlaneseq
      %v1803 = vshrl.u32 %v1802, 7
      %v1804 = vsub.s32 %v1801, %v1803
      %v1805 = vrot.slane %v1581, %v1804
      %v1838 = vrot.slane %v1588, 4
      %v1839 = vrot.slane %v1595, 4
      %v1840 = vrot.slane %v1602, 4
      %v1841 = vrot.slane %v1609, 4
      %v1842 = vrot.slane %v1616, 4
      %v1843 = vrot.slane %v1623, 4
      %v1844 = vrot.slane %v1630, 4
      %v1845 = vrot.slane %v1637, 4
      %v1846 = vrot.slane %v1644, 4
      %v1847 = vrot.slane %v1651, 4
      %v1848 = vrot.slane %v1658, 4
      %v1849 = vrot.slane %v1665, 4
      %v1850 = vrot.slane %v1672, 4
      %v1851 = vrot.slane %v1679, 4
      %v1852 = vrot.slane %v1686, 4
      %v1853 = vrot.slane %v1693, 4
      %v1854 = vrot.slane %v1700, 4
      %v1855 = vrot.slane %v1707, 4
      %v1856 = vrot.slane %v1714, 4
      %v1857 = vrot.slane %v1721, 4
      %v1858 = vrot.slane %v1728, 4
      %v1859 = vrot.slane %v1735, 4
      %v1860 = vrot.slane %v1742, 4
      %v1861 = vrot.slane %v1749, 4
      %v1862 = vrot.slane %v1756, 4
      %v1863 = vrot.slane %v1763, 4
      %v1864 = vrot.slane %v1770, 4
      %v1865 = vrot.slane %v1777, 4
      %v1866 = vrot.slane %v1784, 4
      %v1867 = vrot.slane %v1791, 4
      %v1868 = vrot.slane %v1798, 4
      %v1869 = vrot.slane %v1805, 4
      %v1902 = vmax.f32 %v1588, %v1838
      %v1903 = vmax.f32 %v1595, %v1839
      %v1904 = vmax.f32 %v1602, %v1840
      %v1905 = vmax.f32 %v1609, %v1841
      %v1906 = vmax.f32 %v1616, %v1842
      %v1907 = vmax.f32 %v1623, %v1843
      %v1908 = vmax.f32 %v1630, %v1844
      %v1909 = vmax.f32 %v1637, %v1845
      %v1910 = vmax.f32 %v1644, %v1846
      %v1911 = vmax.f32 %v1651, %v1847
      %v1912 = vmax.f32 %v1658, %v1848
      %v1913 = vmax.f32 %v1665, %v1849
      %v1914 = vmax.f32 %v1672, %v1850
      %v1915 = vmax.f32 %v1679, %v1851
      %v1916 = vmax.f32 %v1686, %v1852
      %v1917 = vmax.f32 %v1693, %v1853
      %v1918 = vmax.f32 %v1700, %v1854
      %v1919 = vmax.f32 %v1707, %v1855
      %v1920 = vmax.f32 %v1714, %v1856
      %v1921 = vmax.f32 %v1721, %v1857
      %v1922 = vmax.f32 %v1728, %v1858
      %v1923 = vmax.f32 %v1735, %v1859
      %v1924 = vmax.f32 %v1742, %v1860
      %v1925 = vmax.f32 %v1749, %v1861
      %v1926 = vmax.f32 %v1756, %v1862
      %v1927 = vmax.f32 %v1763, %v1863
      %v1928 = vmax.f32 %v1770, %v1864
      %v1929 = vmax.f32 %v1777, %v1865
      %v1930 = vmax.f32 %v1784, %v1866
      %v1931 = vmax.f32 %v1791, %v1867
      %v1932 = vmax.f32 %v1798, %v1868
      %v1933 = vmax.f32 %v1805, %v1869
      %v1934 = vmax.f32 %v1902, %v1904
      %v1935 = vmax.f32 %v1903, %v1905
      %v1936 = vmax.f32 %v1906, %v1908
      %v1937 = vmax.f32 %v1907, %v1909
      %v1938 = vmax.f32 %v1910, %v1912
      %v1939 = vmax.f32 %v1911, %v1913
      %v1940 = vmax.f32 %v1914, %v1916
      %v1941 = vmax.f32 %v1915, %v1917
      %v1942 = vmax.f32 %v1918, %v1920
      %v1943 = vmax.f32 %v1919, %v1921
      %v1944 = vmax.f32 %v1922, %v1924
      %v1945 = vmax.f32 %v1923, %v1925
      %v1946 = vmax.f32 %v1926, %v1928
      %v1947 = vmax.f32 %v1927, %v1929
      %v1948 = vmax.f32 %v1930, %v1932
      %v1949 = vmax.f32 %v1931, %v1933
      %v1966 = vcombine.low %v1934, %v1935
      %v1967 = vcombine.low %v1936, %v1937
      %v1968 = vcombine.low %v1938, %v1939
      %v1969 = vcombine.low %v1940, %v1941
      %v1970 = vcombine.low %v1942, %v1943
      %v1971 = vcombine.low %v1944, %v1945
      %v1972 = vcombine.low %v1946, %v1947
      %v1973 = vcombine.low %v1948, %v1949
      %v1982 = vpack.c.bf16 %v1966, %v1966
      %v1983 = vpack.c.bf16 %v1967, %v1967
      %v1984 = vpack.c.bf16 %v1968, %v1968
      %v1985 = vpack.c.bf16 %v1969, %v1969
      %v1986 = vpack.c.bf16 %v1970, %v1970
      %v1987 = vpack.c.bf16 %v1971, %v1971
      %v1988 = vpack.c.bf16 %v1972, %v1972
      %v1989 = vpack.c.bf16 %v1973, %v1973
      %1990 = vst [vmem:[%s316] sm:$0xf] %v1982
      %1991 = vst [vmem:[%s316 + $0x4] sm:$0xf] %v1983
      %1992 = vst [vmem:[%s316 + $0x8] sm:$0xf] %v1984
      %1993 = vst [vmem:[%s316 + $0xc] sm:$0xf] %v1985
      %1994 = vst [vmem:[%s316 + $0x10] sm:$0xf] %v1986
      %1995 = vst [vmem:[%s316 + $0x14] sm:$0xf] %v1987
      %1996 = vst [vmem:[%s316 + $0x18] sm:$0xf] %v1988
      %1997 = vst [vmem:[%s316 + $0x1c] sm:$0xf] %v1989
      %s1998 = smul.u32 8, %s20
      %p1999 = scmp.lt.s32.totalorder %s19, 1
      %s2000 = scalar_select %p1999, %s19, 1
      %p2001 = scmp.lt.s32.totalorder %s1998, 7
      %s2002 = scalar_select %p2001, %s1998, 7
      %s2003 = smul.addr %s2000, 8
      %s2004 = sadd.s32 %s2002, %s2003
      %s2005 = smul.addr %s2004, 4
      %s2006 = scalar_lea.vmem %s4, %s2005
      // Predicated region
      $region37: #{audio_ntt2022_encoder_forward.3} parent=35 // pred_check
        %p2007 = pneg %p149
      $region38: #{audio_ntt2022_encoder_forward.3} parent=35 // pred_check_branch
        %2009 = sbr.rel (%p2007) target = $region40
      $region39: #{audio_ntt2022_encoder_forward.3} parent=35 // pred_region
        %s2010 = smul.u32 8, %s20
      $region40: #{audio_ntt2022_encoder_forward.3} parent=35 // pred_fallthru
        _
    $region36: #{audio_ntt2022_encoder_forward.3} parent=5 // pred_fallthru
      _
    %p2011 = scmp.le.s32.totalorder 2, %s10
    // Predicated region
    $region41: #{audio_ntt2022_encoder_forward.3} parent=5 // pred_check
      %p2012 = pneg %p2011
    $region42: #{audio_ntt2022_encoder_forward.3} parent=5 // pred_check_branch
      %2014 = sbr.rel (%p2012) target = $region44
    $region43: #{audio_ntt2022_encoder_forward.3} parent=5 // pred_region
      %s2015 = ssub.s32 %s10, 2
      // Predicated region
      $region45: #{audio_ntt2022_encoder_forward.3} parent=43 // pred_check
        %p2016 = pneg %p155
      $region46: #{audio_ntt2022_encoder_forward.3} parent=43 // pred_check_branch
        %2018 = sbr.rel (%p2016) target = $region48
      $region47: #{audio_ntt2022_encoder_forward.3} parent=43 // pred_region
        %s2019 = smul.u32 8, %s22
        %p2020 = scmp.lt.s32.totalorder %s21, 1
        %s2021 = scalar_select %p2020, %s21, 1
        %p2022 = scmp.lt.s32.totalorder %s2019, 7
        %s2023 = scalar_select %p2022, %s2019, 7
        %s2024 = smul.addr %s2021, 8
        %s2025 = sadd.s32 %s2023, %s2024
        %s2026 = smul.addr %s2025, 4
        %s2027 = scalar_lea.vmem %s4, %s2026
      $region48: #{audio_ntt2022_encoder_forward.3} parent=43 // pred_fallthru
        _
    $region44: #{audio_ntt2022_encoder_forward.3} parent=5 // pred_fallthru
      _
  $region6: #{audio_ntt2022_encoder_forward.3} parent=0 // loop_footer
    %s14 = sadd.s32 1, %s10
  $region7: #{audio_ntt2022_encoder_forward.3} parent=0 // loop_footer_branch
    %9 = sbr.rel target = $region3
  $region8: #{audio_ntt2022_encoder_forward.3} parent=0 // loop_exit
    _

</llo_original>
